<compile_context>
chip_gen: v5e
topology: v5e:2x2
jax: 0.10.0
libtpu: 0.0.40
codegen_flags: <defaults>
</compile_context>

<pallas_src>
import numpy as np
import jax
import jax.numpy as jnp
from jax.experimental import pallas as pl
from jax.experimental.pallas import tpu as pltpu


_TM = 512                        # row tile (multiple of 8/16; 512 rows ~ HBM-roofline sweet spot)
_VMEM_LIMIT = 32 * 1024 * 1024   # uniform scoped-VMEM budget across v5e/v6e/v7x


# ---------------------------------------------------------------------------
# Pallas kernel: out_tile = ELU(x_tile @ w + b)   (bf16 MXU, f32 epilogue)
# ---------------------------------------------------------------------------
def _matmul_bias_elu_kernel(x_ref, w_ref, b_ref, o_ref):
    acc = jnp.dot(x_ref[...], w_ref[...], preferred_element_type=jnp.float32)
    acc = acc + b_ref[...]                       # (1, N) bias broadcasts over rows
    neg = jnp.exp(jnp.minimum(acc, 0.0)) - 1.0   # ELU(alpha=1), exp arg clamped
    o_ref[...] = jnp.where(acc > 0.0, acc, neg).astype(o_ref.dtype)


def matmul_bias_elu(x, w, b2, *, out_dtype, tm=_TM):
    """x: (M, K) bf16, w: (K, N) bf16, b2: (1, N) f32 -> (M, N) out_dtype.

    Tiled over M (double-buffered row tiles, weight resident, ragged tail masked).
    """
    M, K = x.shape
    K2, N = w.shape
    assert K == K2 and b2.shape == (1, N)
    tm_eff = M if M <= tm else tm
    grid_m = pl.cdiv(M, tm_eff)
    return pl.pallas_call(
        _matmul_bias_elu_kernel,
        out_shape=jax.ShapeDtypeStruct((M, N), out_dtype),
        grid=(grid_m,),
        in_specs=[
            pl.BlockSpec((tm_eff, K), lambda i: (i, 0)),
            pl.BlockSpec((K, N), lambda i: (0, 0)),
            pl.BlockSpec((1, N), lambda i: (0, 0)),
        ],
        out_specs=pl.BlockSpec((tm_eff, N), lambda i: (i, 0)),
        compiler_params=pltpu.CompilerParams(
            dimension_semantics=("parallel",),   # shard row tiles across TCs on v7x
            vmem_limit_bytes=_VMEM_LIMIT,
        ),
    )(x, w, b2)


# ---------------------------------------------------------------------------
# Glue: output dims, im2col patch extraction (bf16), parameter construction
# ---------------------------------------------------------------------------
def conv_outdim(i_dim, k, padding=0, stride=1, dilation=1):
    return int(1 + (i_dim + 2 * padding - dilation * (k - 1) - 1) / stride)


def im2col(x_nhwc, k, stride):
    """(B,H,W,C) -> (B,Ho,Wo,k*k*C) patches in (kh, kw, cin) order (cin fastest)."""
    B, H, W, C = x_nhwc.shape
    Ho = (H - k) // stride + 1
    Wo = (W - k) // stride + 1
    cols = []
    for kh in range(k):
        for kw in range(k):
            cols.append(
                x_nhwc[:, kh:kh + stride * (Ho - 1) + 1:stride,
                          kw:kw + stride * (Wo - 1) + 1:stride, :]
            )
    patches = jnp.stack(cols, axis=3)            # (B, Ho, Wo, k*k, C)
    return patches.reshape(B, Ho, Wo, k * k * C), Ho, Wo


class ScreenEncoderParams:
    """Deterministic init mirroring nn.Conv2d / nn.Linear, plus kernel-ready forms."""

    def __init__(self, screen_shape, key):
        self.c, self.h, self.w = screen_shape
        self.hidden_dim = 512
        self.conv_filters = [
            [self.c, 32, 8, 6, 1],
            [32, 64, 4, 2, 1],
            [64, 128, 3, 2, 1],
            [128, 128, 3, 1, 1],
        ]
        # ---- PyTorch-style parameters (kept f32 for the reference path) ----
        self.torch_convs = []
        h, w = self.h, self.w
        for (cin, cout, k, stride, dil) in self.conv_filters:
            key, kw_, kb_ = jax.random.split(key, 3)
            fan_in = cin * k * k
            bound = 1.0 / np.sqrt(fan_in)
            W = jax.random.uniform(kw_, (cout, cin, k, k), jnp.float32, -bound, bound)
            b = jax.random.uniform(kb_, (cout,), jnp.float32, -bound, bound)
            self.torch_convs.append((W, b, stride))
            h = conv_outdim(h, k, padding=0, stride=stride, dilation=dil)
            w = conv_outdim(w, k, padding=0, stride=stride, dilation=dil)
        self.h_out, self.w_out = h, w
        self.c_out = self.conv_filters[-1][1]
        self.out_size = h * w * self.c_out

        key, kw_, kb_ = jax.random.split(key, 3)
        bound = 1.0 / np.sqrt(self.out_size)
        self.fc_W = jax.random.uniform(
            kw_, (self.hidden_dim, self.out_size), jnp.float32, -bound, bound)
        self.fc_b = jax.random.uniform(
            kb_, (self.hidden_dim,), jnp.float32, -bound, bound)

        # ---- kernel-ready parameters ----
        # Conv weight (Cout,Cin,kh,kw) -> (kh*kw*Cin, Cout) bf16; conv1 absorbs /255.
        self.kernel_convs = []
        for li, (W, b, stride) in enumerate(self.torch_convs):
            cout, cin, k, _ = W.shape
            Wm = W / 255.0 if li == 0 else W
            wmat = jnp.transpose(Wm, (2, 3, 1, 0)).reshape(k * k * cin, cout)
            self.kernel_convs.append(
                (wmat.astype(jnp.bfloat16),
                 b.reshape(1, cout).astype(jnp.float32),
                 k, stride))
        # FC: permute input columns from PyTorch's (c,h,w) flatten order to the
        # NHWC (h,w,c) flatten order so the hot path needs no transpose.
        fc_perm = (self.fc_W
                   .reshape(self.hidden_dim, self.c_out, self.h_out, self.w_out)
                   .transpose(0, 2, 3, 1)
                   .reshape(self.hidden_dim, self.out_size))
        self.fc_wmat = fc_perm.T.astype(jnp.bfloat16)            # (out_size, 512)
        self.fc_b2 = self.fc_b.reshape(1, self.hidden_dim).astype(jnp.float32)


def screen_encoder_forward(params, screen_image_nchw):
    """screen_image_nchw: (B, C, H, W) uint8. Returns (B, 512) float32."""
    # NCHW uint8 -> NHWC bf16 once; the /255 scale lives in conv1's weights.
    x = jnp.transpose(screen_image_nchw, (0, 2, 3, 1)).astype(jnp.bfloat16)
    B = x.shape[0]
    for (wmat, b2, k, stride) in params.kernel_convs:
        patches, Ho, Wo = im2col(x, k, stride)
        K = patches.shape[-1]
        cout = wmat.shape[1]
        y = matmul_bias_elu(patches.reshape(B * Ho * Wo, K), wmat, b2,
                            out_dtype=jnp.bfloat16)
        x = y.reshape(B, Ho, Wo, cout)
    # NHWC flatten; fc weight columns were pre-permuted to consume this order.
    flat = x.reshape(B, params.out_size)
    return matmul_bias_elu(flat, params.fc_wmat, params.fc_b2, out_dtype=jnp.float32)


# ---------------------------------------------------------------------------
# Pure-JAX f32 reference (PyTorch semantics) for a numerical sanity check
# ---------------------------------------------------------------------------
def _reference_forward(params, screen_image_nchw):
    def elu(v):
        return jnp.where(v > 0, v, jnp.exp(jnp.minimum(v, 0.0)) - 1.0)

    x = screen_image_nchw.astype(jnp.float32) / 255.0
    for (W, b, stride) in params.torch_convs:
        x = jax.lax.conv_general_dilated(
            x, W, window_strides=(stride, stride), padding="VALID",
            dimension_numbers=("NCHW", "OIHW", "NCHW"))
        x = elu(x + b.reshape(1, -1, 1, 1))
    x = x.reshape(x.shape[0], -1)
    x = elu(x @ params.fc_W.T + params.fc_b)
    return x


if __name__ == "__main__":
    # Smallest spatial size giving a >1x1 final feature map (kernels 8/4/3/3,
    # strides 6/2/2/1): 122 -> 20 -> 9 -> 4 -> 2, so out_size = 2*2*128 = 512.
    # conv1 then has M = 2*20*20 = 800 rows, exercising the ragged row tiling.
    B, C, H, W = 2, 3, 122, 122
    key = jax.random.PRNGKey(0)
    key, pkey, xkey = jax.random.split(key, 3)

    params = ScreenEncoderParams((C, H, W), pkey)
    screen = jax.random.randint(
        xkey, (B, C, H, W), 0, 256, dtype=jnp.int32).astype(jnp.uint8)

    fwd = jax.jit(lambda img: screen_encoder_forward(params, img))
    out = jax.block_until_ready(fwd(screen))
    assert out.shape == (B, 512), out.shape

    ref = jax.block_until_ready(_reference_forward(params, screen))
    # bf16 MXU operands -> loosened tolerance vs the f32 reference.
    np.testing.assert_allclose(np.asarray(out), np.asarray(ref), rtol=3e-2, atol=3e-2)

    print("KERNEL_OK")
</pallas_src>

<mosaic_0001>
module attributes {stable_mosaic.version = 11 : i64} {
  func.func @_matmul_bias_elu_kernel(%arg0: i32, %arg1: memref<512x192xbf16, #tpu.memory_space<vmem>>, %arg2: memref<192x32xbf16, #tpu.memory_space<vmem>>, %arg3: memref<1x32xf32, #tpu.memory_space<vmem>>, %arg4: memref<512x32xbf16, #tpu.memory_space<vmem>>) attributes {dimension_semantics = [#tpu.dimension_semantics<parallel>], iteration_bounds = array<i64: 2>, scalar_prefetch = 0 : i64, scratch_operands = 0 : i64, tpu.core_type = #tpu.core_type<tc>, window_params = [{transform_indices = @transform_0, window_bounds = array<i64: 512, 192>}, {pipeline_mode = #tpu.pipeline_mode<synchronous>, transform_indices = @transform_1, window_bounds = array<i64: 192, 32>}, {pipeline_mode = #tpu.pipeline_mode<synchronous>, transform_indices = @transform_2, window_bounds = array<i64: 1, 32>}, {transform_indices = @transform_3, window_bounds = array<i64: 512, 32>}]} {
    %c0 = arith.constant 0 : index
    %c0_0 = arith.constant 0 : index
    %0 = vector.load %arg1[%c0, %c0_0] : memref<512x192xbf16, #tpu.memory_space<vmem>>, vector<512x192xbf16>
    %c0_1 = arith.constant 0 : index
    %c0_2 = arith.constant 0 : index
    %1 = vector.load %arg2[%c0_1, %c0_2] : memref<192x32xbf16, #tpu.memory_space<vmem>>, vector<192x32xbf16>
    %cst = arith.constant dense<0.000000e+00> : vector<512x32xf32>
    %2 = tpu.matmul %0, %1, %cst {dimension_numbers = #tpu.dot_dimension_numbers<[1], [0], [0], [1], [0, 0, 1, 1], [], []>} : vector<512x192xbf16>, vector<192x32xbf16>, vector<512x32xf32> -> vector<512x32xf32>
    %c0_3 = arith.constant 0 : index
    %c0_4 = arith.constant 0 : index
    %3 = vector.load %arg3[%c0_3, %c0_4] : memref<1x32xf32, #tpu.memory_space<vmem>>, vector<1x32xf32>
    %4 = vector.broadcast %3 : vector<1x32xf32> to vector<512x32xf32>
    %5 = arith.addf %2, %4 : vector<512x32xf32>
    %cst_5 = arith.constant 0.000000e+00 : f32
    %6 = vector.broadcast %cst_5 : f32 to vector<512x32xf32>
    %7 = arith.minimumf %5, %6 : vector<512x32xf32>
    %8 = math.exp %7 : vector<512x32xf32>
    %cst_6 = arith.constant 1.000000e+00 : f32
    %9 = vector.broadcast %cst_6 : f32 to vector<512x32xf32>
    %10 = arith.subf %8, %9 : vector<512x32xf32>
    %cst_7 = arith.constant 0.000000e+00 : f32
    %11 = vector.broadcast %cst_7 : f32 to vector<512x32xf32>
    %12 = arith.cmpf ogt, %5, %11 : vector<512x32xf32>
    %13 = arith.select %12, %5, %10 : vector<512x32xi1>, vector<512x32xf32>
    %14 = arith.truncf %13 : vector<512x32xf32> to vector<512x32xbf16>
    %c0_8 = arith.constant 0 : index
    %c0_9 = arith.constant 0 : index
    %15 = vector.load %arg4[%c0_8, %c0_9] : memref<512x32xbf16, #tpu.memory_space<vmem>>, vector<512x32xbf16>
    tpu.vector_store %arg4[%c0_8, %c0_9], %14 {strides = array<i32>} : memref<512x32xbf16, #tpu.memory_space<vmem>>, vector<512x32xbf16>,
    return
  }
  func.func @transform_0(%arg0: i32) -> (i32, i32) {
    %c0_i32 = arith.constant 0 : i32
    %c0_i32_0 = arith.constant 0 : i32
    return %arg0, %c0_i32 : i32, i32
  }
  func.func @transform_1(%arg0: i32) -> (i32, i32) {
    %c0_i32 = arith.constant 0 : i32
    %c0_i32_0 = arith.constant 0 : i32
    %c0_i32_1 = arith.constant 0 : i32
    return %c0_i32, %c0_i32_0 : i32, i32
  }
  func.func @transform_2(%arg0: i32) -> (i32, i32) {
    %c0_i32 = arith.constant 0 : i32
    %c0_i32_0 = arith.constant 0 : i32
    %c0_i32_1 = arith.constant 0 : i32
    return %c0_i32, %c0_i32_0 : i32, i32
  }
  func.func @transform_3(%arg0: i32) -> (i32, i32) {
    %c0_i32 = arith.constant 0 : i32
    %c0_i32_0 = arith.constant 0 : i32
    return %arg0, %c0_i32 : i32, i32
  }
}

module attributes {stable_mosaic.version = 11 : i64} {
  func.func @_matmul_bias_elu_kernel(%arg0: i32, %arg1: memref<162x512xbf16, #tpu.memory_space<vmem>>, %arg2: memref<512x64xbf16, #tpu.memory_space<vmem>>, %arg3: memref<1x64xf32, #tpu.memory_space<vmem>>, %arg4: memref<162x64xbf16, #tpu.memory_space<vmem>>) attributes {dimension_semantics = [#tpu.dimension_semantics<parallel>], iteration_bounds = array<i64: 1>, scalar_prefetch = 0 : i64, scratch_operands = 0 : i64, tpu.core_type = #tpu.core_type<tc>, window_params = [{transform_indices = @transform_0, window_bounds = array<i64: 162, 512>}, {pipeline_mode = #tpu.pipeline_mode<synchronous>, transform_indices = @transform_1, window_bounds = array<i64: 512, 64>}, {pipeline_mode = #tpu.pipeline_mode<synchronous>, transform_indices = @transform_2, window_bounds = array<i64: 1, 64>}, {transform_indices = @transform_3, window_bounds = array<i64: 162, 64>}]} {
    %c0 = arith.constant 0 : index
    %c0_0 = arith.constant 0 : index
    %0 = vector.load %arg1[%c0, %c0_0] : memref<162x512xbf16, #tpu.memory_space<vmem>>, vector<162x512xbf16>
    %c0_1 = arith.constant 0 : index
    %c0_2 = arith.constant 0 : index
    %1 = vector.load %arg2[%c0_1, %c0_2] : memref<512x64xbf16, #tpu.memory_space<vmem>>, vector<512x64xbf16>
    %cst = arith.constant dense<0.000000e+00> : vector<162x64xf32>
    %2 = tpu.matmul %0, %1, %cst {dimension_numbers = #tpu.dot_dimension_numbers<[1], [0], [0], [1], [0, 0, 1, 1], [], []>} : vector<162x512xbf16>, vector<512x64xbf16>, vector<162x64xf32> -> vector<162x64xf32>
    %c0_3 = arith.constant 0 : index
    %c0_4 = arith.constant 0 : index
    %3 = vector.load %arg3[%c0_3, %c0_4] : memref<1x64xf32, #tpu.memory_space<vmem>>, vector<1x64xf32>
    %4 = vector.broadcast %3 : vector<1x64xf32> to vector<162x64xf32>
    %5 = arith.addf %2, %4 : vector<162x64xf32>
    %cst_5 = arith.constant 0.000000e+00 : f32
    %6 = vector.broadcast %cst_5 : f32 to vector<162x64xf32>
    %7 = arith.minimumf %5, %6 : vector<162x64xf32>
    %8 = math.exp %7 : vector<162x64xf32>
    %cst_6 = arith.constant 1.000000e+00 : f32
    %9 = vector.broadcast %cst_6 : f32 to vector<162x64xf32>
    %10 = arith.subf %8, %9 : vector<162x64xf32>
    %cst_7 = arith.constant 0.000000e+00 : f32
    %11 = vector.broadcast %cst_7 : f32 to vector<162x64xf32>
    %12 = arith.cmpf ogt, %5, %11 : vector<162x64xf32>
    %13 = arith.select %12, %5, %10 : vector<162x64xi1>, vector<162x64xf32>
    %14 = arith.truncf %13 : vector<162x64xf32> to vector<162x64xbf16>
    %c0_8 = arith.constant 0 : index
    %c0_9 = arith.constant 0 : index
    %15 = vector.load %arg4[%c0_8, %c0_9] : memref<162x64xbf16, #tpu.memory_space<vmem>>, vector<162x64xbf16>
    tpu.vector_store %arg4[%c0_8, %c0_9], %14 {strides = array<i32>} : memref<162x64xbf16, #tpu.memory_space<vmem>>, vector<162x64xbf16>,
    return
  }
  func.func @transform_0(%arg0: i32) -> (i32, i32) {
    %c0_i32 = arith.constant 0 : i32
    %c0_i32_0 = arith.constant 0 : i32
    return %arg0, %c0_i32 : i32, i32
  }
  func.func @transform_1(%arg0: i32) -> (i32, i32) {
    %c0_i32 = arith.constant 0 : i32
    %c0_i32_0 = arith.constant 0 : i32
    %c0_i32_1 = arith.constant 0 : i32
    return %c0_i32, %c0_i32_0 : i32, i32
  }
  func.func @transform_2(%arg0: i32) -> (i32, i32) {
    %c0_i32 = arith.constant 0 : i32
    %c0_i32_0 = arith.constant 0 : i32
    %c0_i32_1 = arith.constant 0 : i32
    return %c0_i32, %c0_i32_0 : i32, i32
  }
  func.func @transform_3(%arg0: i32) -> (i32, i32) {
    %c0_i32 = arith.constant 0 : i32
    %c0_i32_0 = arith.constant 0 : i32
    return %arg0, %c0_i32 : i32, i32
  }
}

module attributes {stable_mosaic.version = 11 : i64} {
  func.func @_matmul_bias_elu_kernel(%arg0: i32, %arg1: memref<32x576xbf16, #tpu.memory_space<vmem>>, %arg2: memref<576x128xbf16, #tpu.memory_space<vmem>>, %arg3: memref<1x128xf32, #tpu.memory_space<vmem>>, %arg4: memref<32x128xbf16, #tpu.memory_space<vmem>>) attributes {dimension_semantics = [#tpu.dimension_semantics<parallel>], iteration_bounds = array<i64: 1>, scalar_prefetch = 0 : i64, scratch_operands = 0 : i64, tpu.core_type = #tpu.core_type<tc>, window_params = [{transform_indices = @transform_0, window_bounds = array<i64: 32, 576>}, {pipeline_mode = #tpu.pipeline_mode<synchronous>, transform_indices = @transform_1, window_bounds = array<i64: 576, 128>}, {pipeline_mode = #tpu.pipeline_mode<synchronous>, transform_indices = @transform_2, window_bounds = array<i64: 1, 128>}, {transform_indices = @transform_3, window_bounds = array<i64: 32, 128>}]} {
    %c0 = arith.constant 0 : index
    %c0_0 = arith.constant 0 : index
    %0 = vector.load %arg1[%c0, %c0_0] : memref<32x576xbf16, #tpu.memory_space<vmem>>, vector<32x576xbf16>
    %c0_1 = arith.constant 0 : index
    %c0_2 = arith.constant 0 : index
    %1 = vector.load %arg2[%c0_1, %c0_2] : memref<576x128xbf16, #tpu.memory_space<vmem>>, vector<576x128xbf16>
    %cst = arith.constant dense<0.000000e+00> : vector<32x128xf32>
    %2 = tpu.matmul %0, %1, %cst {dimension_numbers = #tpu.dot_dimension_numbers<[1], [0], [0], [1], [0, 0, 1, 1], [], []>} : vector<32x576xbf16>, vector<576x128xbf16>, vector<32x128xf32> -> vector<32x128xf32>
    %c0_3 = arith.constant 0 : index
    %c0_4 = arith.constant 0 : index
    %3 = vector.load %arg3[%c0_3, %c0_4] : memref<1x128xf32, #tpu.memory_space<vmem>>, vector<1x128xf32>
    %4 = vector.broadcast %3 : vector<1x128xf32> to vector<32x128xf32>
    %5 = arith.addf %2, %4 : vector<32x128xf32>
    %cst_5 = arith.constant 0.000000e+00 : f32
    %6 = vector.broadcast %cst_5 : f32 to vector<32x128xf32>
    %7 = arith.minimumf %5, %6 : vector<32x128xf32>
    %8 = math.exp %7 : vector<32x128xf32>
    %cst_6 = arith.constant 1.000000e+00 : f32
    %9 = vector.broadcast %cst_6 : f32 to vector<32x128xf32>
    %10 = arith.subf %8, %9 : vector<32x128xf32>
    %cst_7 = arith.constant 0.000000e+00 : f32
    %11 = vector.broadcast %cst_7 : f32 to vector<32x128xf32>
    %12 = arith.cmpf ogt, %5, %11 : vector<32x128xf32>
    %13 = arith.select %12, %5, %10 : vector<32x128xi1>, vector<32x128xf32>
    %14 = arith.truncf %13 : vector<32x128xf32> to vector<32x128xbf16>
    %c0_8 = arith.constant 0 : index
    %c0_9 = arith.constant 0 : index
    %15 = vector.load %arg4[%c0_8, %c0_9] : memref<32x128xbf16, #tpu.memory_space<vmem>>, vector<32x128xbf16>
    tpu.vector_store %arg4[%c0_8, %c0_9], %14 {strides = array<i32>} : memref<32x128xbf16, #tpu.memory_space<vmem>>, vector<32x128xbf16>,
    return
  }
  func.func @transform_0(%arg0: i32) -> (i32, i32) {
    %c0_i32 = arith.constant 0 : i32
    %c0_i32_0 = arith.constant 0 : i32
    return %arg0, %c0_i32 : i32, i32
  }
  func.func @transform_1(%arg0: i32) -> (i32, i32) {
    %c0_i32 = arith.constant 0 : i32
    %c0_i32_0 = arith.constant 0 : i32
    %c0_i32_1 = arith.constant 0 : i32
    return %c0_i32, %c0_i32_0 : i32, i32
  }
  func.func @transform_2(%arg0: i32) -> (i32, i32) {
    %c0_i32 = arith.constant 0 : i32
    %c0_i32_0 = arith.constant 0 : i32
    %c0_i32_1 = arith.constant 0 : i32
    return %c0_i32, %c0_i32_0 : i32, i32
  }
  func.func @transform_3(%arg0: i32) -> (i32, i32) {
    %c0_i32 = arith.constant 0 : i32
    %c0_i32_0 = arith.constant 0 : i32
    return %arg0, %c0_i32 : i32, i32
  }
}

module attributes {stable_mosaic.version = 11 : i64} {
  func.func @_matmul_bias_elu_kernel(%arg0: i32, %arg1: memref<8x1152xbf16, #tpu.memory_space<vmem>>, %arg2: memref<1152x128xbf16, #tpu.memory_space<vmem>>, %arg3: memref<1x128xf32, #tpu.memory_space<vmem>>, %arg4: memref<8x128xbf16, #tpu.memory_space<vmem>>) attributes {dimension_semantics = [#tpu.dimension_semantics<parallel>], iteration_bounds = array<i64: 1>, scalar_prefetch = 0 : i64, scratch_operands = 0 : i64, tpu.core_type = #tpu.core_type<tc>, window_params = [{transform_indices = @transform_0, window_bounds = array<i64: 8, 1152>}, {pipeline_mode = #tpu.pipeline_mode<synchronous>, transform_indices = @transform_1, window_bounds = array<i64: 1152, 128>}, {pipeline_mode = #tpu.pipeline_mode<synchronous>, transform_indices = @transform_2, window_bounds = array<i64: 1, 128>}, {transform_indices = @transform_3, window_bounds = array<i64: 8, 128>}]} {
    %c0 = arith.constant 0 : index
    %c0_0 = arith.constant 0 : index
    %0 = vector.load %arg1[%c0, %c0_0] : memref<8x1152xbf16, #tpu.memory_space<vmem>>, vector<8x1152xbf16>
    %c0_1 = arith.constant 0 : index
    %c0_2 = arith.constant 0 : index
    %1 = vector.load %arg2[%c0_1, %c0_2] : memref<1152x128xbf16, #tpu.memory_space<vmem>>, vector<1152x128xbf16>
    %cst = arith.constant dense<0.000000e+00> : vector<8x128xf32>
    %2 = tpu.matmul %0, %1, %cst {dimension_numbers = #tpu.dot_dimension_numbers<[1], [0], [0], [1], [0, 0, 1, 1], [], []>} : vector<8x1152xbf16>, vector<1152x128xbf16>, vector<8x128xf32> -> vector<8x128xf32>
    %c0_3 = arith.constant 0 : index
    %c0_4 = arith.constant 0 : index
    %3 = vector.load %arg3[%c0_3, %c0_4] : memref<1x128xf32, #tpu.memory_space<vmem>>, vector<1x128xf32>
    %4 = vector.broadcast %3 : vector<1x128xf32> to vector<8x128xf32>
    %5 = arith.addf %2, %4 : vector<8x128xf32>
    %cst_5 = arith.constant 0.000000e+00 : f32
    %6 = vector.broadcast %cst_5 : f32 to vector<8x128xf32>
    %7 = arith.minimumf %5, %6 : vector<8x128xf32>
    %8 = math.exp %7 : vector<8x128xf32>
    %cst_6 = arith.constant 1.000000e+00 : f32
    %9 = vector.broadcast %cst_6 : f32 to vector<8x128xf32>
    %10 = arith.subf %8, %9 : vector<8x128xf32>
    %cst_7 = arith.constant 0.000000e+00 : f32
    %11 = vector.broadcast %cst_7 : f32 to vector<8x128xf32>
    %12 = arith.cmpf ogt, %5, %11 : vector<8x128xf32>
    %13 = arith.select %12, %5, %10 : vector<8x128xi1>, vector<8x128xf32>
    %14 = arith.truncf %13 : vector<8x128xf32> to vector<8x128xbf16>
    %c0_8 = arith.constant 0 : index
    %c0_9 = arith.constant 0 : index
    %15 = vector.load %arg4[%c0_8, %c0_9] : memref<8x128xbf16, #tpu.memory_space<vmem>>, vector<8x128xbf16>
    tpu.vector_store %arg4[%c0_8, %c0_9], %14 {strides = array<i32>} : memref<8x128xbf16, #tpu.memory_space<vmem>>, vector<8x128xbf16>,
    return
  }
  func.func @transform_0(%arg0: i32) -> (i32, i32) {
    %c0_i32 = arith.constant 0 : i32
    %c0_i32_0 = arith.constant 0 : i32
    return %arg0, %c0_i32 : i32, i32
  }
  func.func @transform_1(%arg0: i32) -> (i32, i32) {
    %c0_i32 = arith.constant 0 : i32
    %c0_i32_0 = arith.constant 0 : i32
    %c0_i32_1 = arith.constant 0 : i32
    return %c0_i32, %c0_i32_0 : i32, i32
  }
  func.func @transform_2(%arg0: i32) -> (i32, i32) {
    %c0_i32 = arith.constant 0 : i32
    %c0_i32_0 = arith.constant 0 : i32
    %c0_i32_1 = arith.constant 0 : i32
    return %c0_i32, %c0_i32_0 : i32, i32
  }
  func.func @transform_3(%arg0: i32) -> (i32, i32) {
    %c0_i32 = arith.constant 0 : i32
    %c0_i32_0 = arith.constant 0 : i32
    return %arg0, %c0_i32 : i32, i32
  }
}

module attributes {stable_mosaic.version = 11 : i64} {
  func.func @_matmul_bias_elu_kernel(%arg0: i32, %arg1: memref<2x512xbf16, #tpu.memory_space<vmem>>, %arg2: memref<512x512xbf16, #tpu.memory_space<vmem>>, %arg3: memref<1x512xf32, #tpu.memory_space<vmem>>, %arg4: memref<2x512xf32, #tpu.memory_space<vmem>>) attributes {dimension_semantics = [#tpu.dimension_semantics<parallel>], iteration_bounds = array<i64: 1>, scalar_prefetch = 0 : i64, scratch_operands = 0 : i64, tpu.core_type = #tpu.core_type<tc>, window_params = [{transform_indices = @transform_0, window_bounds = array<i64: 2, 512>}, {pipeline_mode = #tpu.pipeline_mode<synchronous>, transform_indices = @transform_1, window_bounds = array<i64: 512, 512>}, {pipeline_mode = #tpu.pipeline_mode<synchronous>, transform_indices = @transform_2, window_bounds = array<i64: 1, 512>}, {transform_indices = @transform_3, window_bounds = array<i64: 2, 512>}]} {
    %c0 = arith.constant 0 : index
    %c0_0 = arith.constant 0 : index
    %0 = vector.load %arg1[%c0, %c0_0] : memref<2x512xbf16, #tpu.memory_space<vmem>>, vector<2x512xbf16>
    %c0_1 = arith.constant 0 : index
    %c0_2 = arith.constant 0 : index
    %1 = vector.load %arg2[%c0_1, %c0_2] : memref<512x512xbf16, #tpu.memory_space<vmem>>, vector<512x512xbf16>
    %cst = arith.constant dense<0.000000e+00> : vector<2x512xf32>
    %2 = tpu.matmul %0, %1, %cst {dimension_numbers = #tpu.dot_dimension_numbers<[1], [0], [0], [1], [0, 0, 1, 1], [], []>} : vector<2x512xbf16>, vector<512x512xbf16>, vector<2x512xf32> -> vector<2x512xf32>
    %c0_3 = arith.constant 0 : index
    %c0_4 = arith.constant 0 : index
    %3 = vector.load %arg3[%c0_3, %c0_4] : memref<1x512xf32, #tpu.memory_space<vmem>>, vector<1x512xf32>
    %4 = vector.broadcast %3 : vector<1x512xf32> to vector<2x512xf32>
    %5 = arith.addf %2, %4 : vector<2x512xf32>
    %cst_5 = arith.constant 0.000000e+00 : f32
    %6 = vector.broadcast %cst_5 : f32 to vector<2x512xf32>
    %7 = arith.minimumf %5, %6 : vector<2x512xf32>
    %8 = math.exp %7 : vector<2x512xf32>
    %cst_6 = arith.constant 1.000000e+00 : f32
    %9 = vector.broadcast %cst_6 : f32 to vector<2x512xf32>
    %10 = arith.subf %8, %9 : vector<2x512xf32>
    %cst_7 = arith.constant 0.000000e+00 : f32
    %11 = vector.broadcast %cst_7 : f32 to vector<2x512xf32>
    %12 = arith.cmpf ogt, %5, %11 : vector<2x512xf32>
    %13 = arith.select %12, %5, %10 : vector<2x512xi1>, vector<2x512xf32>
    %c0_8 = arith.constant 0 : index
    %c0_9 = arith.constant 0 : index
    %14 = vector.load %arg4[%c0_8, %c0_9] : memref<2x512xf32, #tpu.memory_space<vmem>>, vector<2x512xf32>
    tpu.vector_store %arg4[%c0_8, %c0_9], %13 {strides = array<i32>} : memref<2x512xf32, #tpu.memory_space<vmem>>, vector<2x512xf32>,
    return
  }
  func.func @transform_0(%arg0: i32) -> (i32, i32) {
    %c0_i32 = arith.constant 0 : i32
    %c0_i32_0 = arith.constant 0 : i32
    return %arg0, %c0_i32 : i32, i32
  }
  func.func @transform_1(%arg0: i32) -> (i32, i32) {
    %c0_i32 = arith.constant 0 : i32
    %c0_i32_0 = arith.constant 0 : i32
    %c0_i32_1 = arith.constant 0 : i32
    return %c0_i32, %c0_i32_0 : i32, i32
  }
  func.func @transform_2(%arg0: i32) -> (i32, i32) {
    %c0_i32 = arith.constant 0 : i32
    %c0_i32_0 = arith.constant 0 : i32
    %c0_i32_1 = arith.constant 0 : i32
    return %c0_i32, %c0_i32_0 : i32, i32
  }
  func.func @transform_3(%arg0: i32) -> (i32, i32) {
    %c0_i32 = arith.constant 0 : i32
    %c0_i32_0 = arith.constant 0 : i32
    return %arg0, %c0_i32 : i32, i32
  }
}

</mosaic_0001>

<llo_original>
// kernel: _lambda_.5
$region0: #{_lambda_.5}
  #allocation0 [shape = 'u32[]', space=smem, size = 0x4, offset = 0x4, fixed_abs, tag = 'smem constant byte address 0x4 - core index']
  #allocation1 [shape = 'u32[72,128]{1,0:T(1,128)}', space=vmem, size = 0x9000, scoped, tag = 'internal scratch']
  %s0 = inlined_call_operand.vmem [shape: bf16[800,192], index: 0, kind: input, shape index: {}]
  %s1 = inlined_call_operand.vmem [shape: bf16[192,32], index: 1, kind: input, shape index: {}]
  %s2 = inlined_call_operand.vmem [shape: f32[1,32], index: 2, kind: input, shape index: {}]
  %s3 = inlined_call_operand.vmem [shape: bf16[800,32], index: 3, kind: output, shape index: {}]
  %s4 = sld [smem:[#allocation0]]
  $region89: #{_lambda_.5} parent=0
    _
  %s6 = ssub.s32 1, %s4
  %s7 = scalar_select 0, %s6, %s4
  $region1: #{_lambda_.5} parent=0
    #allocation2 [shape = 'u8[262144]{0}', space=vmem, size = 0x40000, scoped, tag = 'output window, operand 0']
    loop: start=0, step=1, limit=4
    $region2: #{_lambda_.5} parent=1 // loop_pre_header
      _
    $region3: #{_lambda_.5} parent=1 // loop_header
      %s9 = sphi 0, %s13
      %p10 = scmp.ge.s32.totalorder %s9, 4
      %s19 = sphi 0, %s21
      %s22 = sphi 0, %s19
      %s23 = sphi 0, %s22
      %s39 = sphi 0, %s23
      %s43 = sphi 0, %s43
      %s45 = sphi 0, %s43
      %s46 = sphi 0, %s45
      %s60 = sphi 0, %s46
      %s64 = sphi 0, %s64
      %s66 = sphi 0, %s64
      %s67 = sphi 0, %s66
      %s81 = sphi 0, %s67
      %s87 = sphi 0, %s89
      %s90 = sphi 0, %s87
      %s91 = sphi 0, %s90
      %s107 = sphi 0, %s91
    $region4: #{_lambda_.5} parent=1 // loop_header_branch
      %12 = sbr.rel (%p10) target = $region8
    $region5: #{_lambda_.5} parent=1 // loop_body
      %s14 = ssub.s32 %s9, 1
      %s15 = ssub.s32 %s9, 2
      %s16 = sadd.s32 %s9, 1
      %s17 = ssub.s32 %s9, %s16
      %p18 = scmp.eq.s32.totalorder %s17, 0
      %s20 = sadd.s32 %s19, 1
      %s21 = scalar_select %p18, %s19, %s20
      %p24 = pneg %p18
      %p25 = scmp.eq.s32.totalorder %s9, 1
      %p26 = por %p24, %p25
      %p27 = scmp.ne.s32.totalorder %s19, %s22
      %p28 = scmp.eq.s32.totalorder %s9, 0
      %p29 = por %p27, %p28
      %p30 = scmp.ne.s32.totalorder %s19, %s22
      %p31 = scmp.eq.s32.totalorder %s14, 1
      %p32 = por %p30, %p31
      %p33 = scmp.ne.s32.totalorder %s22, %s23
      %p34 = scmp.eq.s32.totalorder %s14, 0
      %p35 = por %p33, %p34
      %p36 = scmp.ne.s32.totalorder %s22, %s23
      %p37 = scmp.eq.s32.totalorder %s15, 1
      %p38 = por %p36, %p37
      %p40 = scmp.ne.s32.totalorder %s23, %s39
      %p41 = scmp.eq.s32.totalorder %s15, 0
      %p42 = por %p40, %p41
      %s44 = sadd.s32 %s43, 1
      %p47 = scmp.eq.s32.totalorder %s9, 1
      %p48 = scmp.ne.s32.totalorder %s43, %s45
      %p49 = scmp.eq.s32.totalorder %s9, 0
      %p50 = por %p48, %p49
      %p51 = scmp.ne.s32.totalorder %s43, %s45
      %p52 = scmp.eq.s32.totalorder %s14, 1
      %p53 = por %p51, %p52
      %p54 = scmp.ne.s32.totalorder %s45, %s46
      %p55 = scmp.eq.s32.totalorder %s14, 0
      %p56 = por %p54, %p55
      %p57 = scmp.ne.s32.totalorder %s45, %s46
      %p58 = scmp.eq.s32.totalorder %s15, 1
      %p59 = por %p57, %p58
      %p61 = scmp.ne.s32.totalorder %s46, %s60
      %p62 = scmp.eq.s32.totalorder %s15, 0
      %p63 = por %p61, %p62
      %s65 = sadd.s32 %s64, 1
      %p68 = scmp.eq.s32.totalorder %s9, 1
      %p69 = scmp.ne.s32.totalorder %s64, %s66
      %p70 = scmp.eq.s32.totalorder %s9, 0
      %p71 = por %p69, %p70
      %p72 = scmp.ne.s32.totalorder %s64, %s66
      %p73 = scmp.eq.s32.totalorder %s14, 1
      %p74 = por %p72, %p73
      %p75 = scmp.ne.s32.totalorder %s66, %s67
      %p76 = scmp.eq.s32.totalorder %s14, 0
      %p77 = por %p75, %p76
      %p78 = scmp.ne.s32.totalorder %s66, %s67
      %p79 = scmp.eq.s32.totalorder %s15, 1
      %p80 = por %p78, %p79
      %p82 = scmp.ne.s32.totalorder %s67, %s81
      %p83 = scmp.eq.s32.totalorder %s15, 0
      %p84 = por %p82, %p83
      %s85 = ssub.s32 %s9, %s16
      %p86 = scmp.eq.s32.totalorder %s85, 0
      %s88 = sadd.s32 %s87, 1
      %s89 = scalar_select %p86, %s87, %s88
      %p92 = pneg %p86
      %p93 = scmp.eq.s32.totalorder %s9, 1
      %p94 = por %p92, %p93
      %p95 = scmp.ne.s32.totalorder %s87, %s90
      %p96 = scmp.eq.s32.totalorder %s9, 0
      %p97 = por %p95, %p96
      %p98 = scmp.ne.s32.totalorder %s87, %s90
      %p99 = scmp.eq.s32.totalorder %s14, 1
      %p100 = por %p98, %p99
      %p101 = scmp.ne.s32.totalorder %s90, %s91
      %p102 = scmp.eq.s32.totalorder %s14, 0
      %p103 = por %p101, %p102
      %p104 = scmp.ne.s32.totalorder %s90, %s91
      %p105 = scmp.eq.s32.totalorder %s15, 1
      %p106 = por %p104, %p105
      %p108 = scmp.ne.s32.totalorder %s91, %s107
      %p109 = scmp.eq.s32.totalorder %s15, 0
      %p110 = por %p108, %p109
      %p111 = scmp.le.s32.totalorder 1, %s9
      %p112 = scmp.lt.s32.totalorder %s9, 3
      %p113 = pnand %p111, %p112
      %p114 = pneg %p113
      // Predicated region
      $region9: #{_lambda_.5} parent=5 // pred_check
        _
      $region10: #{_lambda_.5} parent=5 // pred_check_branch
        %116 = sbr.rel (%p113) target = $region12
      $region11: #{_lambda_.5} parent=5 // pred_region
        %s117 = ssub.s32 %s9, 1
        // Predicated region
        $region13: #{_lambda_.5} parent=11 // pred_check
          %p118 = pneg %p56
        $region14: #{_lambda_.5} parent=11 // pred_check_branch
          %120 = sbr.rel (%p118) target = $region16
        $region15: #{_lambda_.5} parent=11 // pred_region
          _
        $region16: #{_lambda_.5} parent=11 // pred_fallthru
          _
        // Predicated region
        $region17: #{_lambda_.5} parent=11 // pred_check
          %p121 = pneg %p77
        $region18: #{_lambda_.5} parent=11 // pred_check_branch
          %123 = sbr.rel (%p121) target = $region20
        $region19: #{_lambda_.5} parent=11 // pred_region
          _
        $region20: #{_lambda_.5} parent=11 // pred_fallthru
          _
      $region12: #{_lambda_.5} parent=5 // pred_fallthru
        _
      %p124 = scmp.lt.s32.totalorder %s9, 2
      // Predicated region
      $region21: #{_lambda_.5} parent=5 // pred_check
        %p125 = pneg %p124
      $region22: #{_lambda_.5} parent=5 // pred_check_branch
        %127 = sbr.rel (%p125) target = $region24
      $region23: #{_lambda_.5} parent=5 // pred_region
        // Predicated region
        $region25: #{_lambda_.5} parent=23 // pred_check
          %p128 = pneg %p29
        $region26: #{_lambda_.5} parent=23 // pred_check_branch
          %130 = sbr.rel (%p128) target = $region28
        $region27: #{_lambda_.5} parent=23 // pred_region
          %s131 = smul.u32 64, %s9
          %s132 = ssub.s32 100, %s131
          %p133 = scmp.lt.s32.totalorder %s132, 64
          %s134 = scalar_select %p133, %s132, 64
          %s135 = smul.u32 4, %s134
          %s136 = smul.u32 %s135, 2
          %p137 = scmp.lt.s32.totalorder %s131, 99
          %s138 = scalar_select %p137, %s131, 99
          %s139 = smul.addr %s138, 2
          %s140 = smul.addr %s139, 4
          %s141 = scalar_lea.vmem %s0, %s140
          %s142 = smul.u32 64, %s9
          %s143 = ssub.s32 100, %s142
          %p144 = scmp.lt.s32.totalorder %s143, 64
          %s145 = scalar_select %p144, %s143, 64
          %s146 = smul.u32 4, %s145
          %s147 = smul.u32 %s146, 2
        $region28: #{_lambda_.5} parent=23 // pred_fallthru
          _
      $region24: #{_lambda_.5} parent=5 // pred_fallthru
        _
      %p148 = scmp.le.s32.totalorder 1, %s9
      %p149 = scmp.lt.s32.totalorder %s9, 3
      %p150 = pnand %p148, %p149
      %p151 = pneg %p150
      // Predicated region
      $region29: #{_lambda_.5} parent=5 // pred_check
        _
      $region30: #{_lambda_.5} parent=5 // pred_check_branch
        %153 = sbr.rel (%p150) target = $region32
      $region31: #{_lambda_.5} parent=5 // pred_region
        %s154 = ssub.s32 %s9, 1
        %s155 = smul.u32 64, %s14
        %s156 = ssub.s32 100, %s155
        %p157 = scmp.lt.s32.totalorder %s156, 64
        %s158 = scalar_select %p157, %s156, 64
        %s159 = smul.u32 4, %s158
        %s160 = smul.u32 %s159, 2
        %p161 = scmp.lt.s32.totalorder %s155, 99
        %s162 = scalar_select %p161, %s155, 99
        %s163 = smul.addr %s162, 2
        %s164 = smul.addr %s163, 4
        %s165 = scalar_lea.vmem %s0, %s164
        %p166 = pneg %p35
        %p167 = pneg %p32
        %p168 = pneg %p56
        %p169 = pneg %p53
        %p170 = pneg %p77
        %p171 = pneg %p74
        %p172 = pneg %p103
        %p173 = pneg %p100
        %s174 = sand.u32 %s90, 1
        %s175 = sand.u32 %s90, 1
        %s176 = smul.addr %s175, 256
        %s177 = scalar_lea.vmem [#allocation2], %s176
        %s178 = smul.u32 64, %s14
        %s179 = ssub.s32 100, %s178
        %p180 = scmp.lt.s32.totalorder %s179, 64
        %s181 = scalar_select %p180, %s179, 64
        %s182 = smul.u32 4, %s181
        %s183 = smul.u32 %s182, 2
        %p184 = scmp.lt.s32.totalorder %s178, 99
        %s185 = scalar_select %p184, %s178, 99
        %s186 = smul.addr %s185, 2
        %s187 = smul.addr %s186, 4
        %s188 = scalar_lea.vmem %s0, %s187
        %s189 = smul.u32 64, %s14
        %s190 = ssub.s32 100, %s189
        %p191 = scmp.lt.s32.totalorder %s190, 64
        %s192 = scalar_select %p191, %s190, 64
        %s193 = smul.u32 4, %s192
        %s194 = smul.u32 %s193, 2
        %s195 = smul.u32 64, %s14
        %s196 = ssub.s32 100, %s195
        %p197 = scmp.lt.s32.totalorder %s196, 64
        %s198 = scalar_select %p197, %s196, 64
        %s199 = smul.u32 4, %s198
        %v201 = vld [vmem:[%s188] sm:$0xff]
        %v202 = vld [vmem:[%s188 + $0x8] sm:$0xff]
        %v203 = vld [vmem:[%s188 + $0x10] sm:$0xff]
        %v204 = vld [vmem:[%s188 + $0x18] sm:$0xff]
        %v205 = vld [vmem:[%s188 + $0x20] sm:$0xff]
        %v206 = vld [vmem:[%s188 + $0x28] sm:$0xff]
        %v207 = vld [vmem:[%s188 + $0x30] sm:$0xff]
        %v208 = vld [vmem:[%s188 + $0x38] sm:$0xff]
        %v209 = vld [vmem:[%s188 + $0x40] sm:$0xff]
        %v210 = vld [vmem:[%s188 + $0x48] sm:$0xff]
        %v211 = vld [vmem:[%s188 + $0x50] sm:$0xff]
        %v212 = vld [vmem:[%s188 + $0x58] sm:$0xff]
        %v213 = vld [vmem:[%s188 + $0x60] sm:$0xff]
        %v214 = vld [vmem:[%s188 + $0x68] sm:$0xff]
        %v215 = vld [vmem:[%s188 + $0x70] sm:$0xff]
        %v216 = vld [vmem:[%s188 + $0x78] sm:$0xff]
        %v217 = vld [vmem:[%s188 + $0x80] sm:$0xff]
        %v218 = vld [vmem:[%s188 + $0x88] sm:$0xff]
        %v219 = vld [vmem:[%s188 + $0x90] sm:$0xff]
        %v220 = vld [vmem:[%s188 + $0x98] sm:$0xff]
        %v221 = vld [vmem:[%s188 + $0xa0] sm:$0xff]
        %v222 = vld [vmem:[%s188 + $0xa8] sm:$0xff]
        %v223 = vld [vmem:[%s188 + $0xb0] sm:$0xff]
        %v224 = vld [vmem:[%s188 + $0xb8] sm:$0xff]
        %v225 = vld [vmem:[%s188 + $0xc0] sm:$0xff]
        %v226 = vld [vmem:[%s188 + $0xc8] sm:$0xff]
        %v227 = vld [vmem:[%s188 + $0xd0] sm:$0xff]
        %v228 = vld [vmem:[%s188 + $0xd8] sm:$0xff]
        %v229 = vld [vmem:[%s188 + $0xe0] sm:$0xff]
        %v230 = vld [vmem:[%s188 + $0xe8] sm:$0xff]
        %v231 = vld [vmem:[%s188 + $0xf0] sm:$0xff]
        %v232 = vld [vmem:[%s188 + $0xf8] sm:$0xff]
        %v233 = vld [vmem:[%s188 + $0x100] sm:$0xff]
        %v234 = vld [vmem:[%s188 + $0x108] sm:$0xff]
        %v235 = vld [vmem:[%s188 + $0x110] sm:$0xff]
        %v236 = vld [vmem:[%s188 + $0x118] sm:$0xff]
        %v237 = vld [vmem:[%s188 + $0x120] sm:$0xff]
        %v238 = vld [vmem:[%s188 + $0x128] sm:$0xff]
        %v239 = vld [vmem:[%s188 + $0x130] sm:$0xff]
        %v240 = vld [vmem:[%s188 + $0x138] sm:$0xff]
        %v241 = vld [vmem:[%s188 + $0x140] sm:$0xff]
        %v242 = vld [vmem:[%s188 + $0x148] sm:$0xff]
        %v243 = vld [vmem:[%s188 + $0x150] sm:$0xff]
        %v244 = vld [vmem:[%s188 + $0x158] sm:$0xff]
        %v245 = vld [vmem:[%s188 + $0x160] sm:$0xff]
        %v246 = vld [vmem:[%s188 + $0x168] sm:$0xff]
        %v247 = vld [vmem:[%s188 + $0x170] sm:$0xff]
        %v248 = vld [vmem:[%s188 + $0x178] sm:$0xff]
        %v249 = vld [vmem:[%s188 + $0x180] sm:$0xff]
        %v250 = vld [vmem:[%s188 + $0x188] sm:$0xff]
        %v251 = vld [vmem:[%s188 + $0x190] sm:$0xff]
        %v252 = vld [vmem:[%s188 + $0x198] sm:$0xff]
        %v253 = vld [vmem:[%s188 + $0x1a0] sm:$0xff]
        %v254 = vld [vmem:[%s188 + $0x1a8] sm:$0xff]
        %v255 = vld [vmem:[%s188 + $0x1b0] sm:$0xff]
        %v256 = vld [vmem:[%s188 + $0x1b8] sm:$0xff]
        %v257 = vld [vmem:[%s188 + $0x1c0] sm:$0xff]
        %v258 = vld [vmem:[%s188 + $0x1c8] sm:$0xff]
        %v259 = vld [vmem:[%s188 + $0x1d0] sm:$0xff]
        %v260 = vld [vmem:[%s188 + $0x1d8] sm:$0xff]
        %v261 = vld [vmem:[%s188 + $0x1e0] sm:$0xff]
        %v262 = vld [vmem:[%s188 + $0x1e8] sm:$0xff]
        %v263 = vld [vmem:[%s188 + $0x1f0] sm:$0xff]
        %v264 = vld [vmem:[%s188 + $0x1f8] sm:$0xff]
        %v265 = vld [vmem:[%s1] sm:$0xf]
        %v266 = vld [vmem:[%s1 + $0x4] sm:$0xf]
        %v267 = vld [vmem:[%s1 + $0x8] sm:$0xf]
        %v268 = vld [vmem:[%s1 + $0xc] sm:$0xf]
        %v269 = vld [vmem:[%s1 + $0x10] sm:$0xf]
        %v270 = vld [vmem:[%s1 + $0x14] sm:$0xf]
        %v271 = vld [vmem:[%s1 + $0x18] sm:$0xf]
        %v272 = vld [vmem:[%s1 + $0x1c] sm:$0xf]
        %v273 = vld [vmem:[%s1 + $0x20] sm:$0xf]
        %v274 = vld [vmem:[%s1 + $0x24] sm:$0xf]
        %v275 = vld [vmem:[%s1 + $0x28] sm:$0xf]
        %v276 = vld [vmem:[%s1 + $0x2c] sm:$0xf]
        %v277 = vld [vmem:[%s1 + $0x30] sm:$0xf]
        %v278 = vld [vmem:[%s1 + $0x34] sm:$0xf]
        %v279 = vld [vmem:[%s1 + $0x38] sm:$0xf]
        %v280 = vld [vmem:[%s1 + $0x3c] sm:$0xf]
        %v281 = vld [vmem:[%s1 + $0x40] sm:$0xf]
        %v282 = vld [vmem:[%s1 + $0x44] sm:$0xf]
        %v283 = vld [vmem:[%s1 + $0x48] sm:$0xf]
        %v284 = vld [vmem:[%s1 + $0x4c] sm:$0xf]
        %v285 = vld [vmem:[%s1 + $0x50] sm:$0xf]
        %v286 = vld [vmem:[%s1 + $0x54] sm:$0xf]
        %v287 = vld [vmem:[%s1 + $0x58] sm:$0xf]
        %v288 = vld [vmem:[%s1 + $0x5c] sm:$0xf]
        %v289 = vld [vmem:[%s2] sm:$0x1]
        %v291 = vperm.slane %v289, 0
        %v357 = vunpack.c.l.b16 %v201
        %v358 = vunpack.c.h.b16 %v201
        %v359 = vunpack.c.l.b16 %v202
        %v360 = vunpack.c.h.b16 %v202
        %v361 = vunpack.c.l.b16 %v203
        %v362 = vunpack.c.h.b16 %v203
        %v363 = vunpack.c.l.b16 %v204
        %v364 = vunpack.c.h.b16 %v204
        %v365 = vunpack.c.l.b16 %v205
        %v366 = vunpack.c.h.b16 %v205
        %v367 = vunpack.c.l.b16 %v206
        %v368 = vunpack.c.h.b16 %v206
        %v369 = vunpack.c.l.b16 %v207
        %v370 = vunpack.c.h.b16 %v207
        %v371 = vunpack.c.l.b16 %v208
        %v372 = vunpack.c.h.b16 %v208
        %v373 = vunpack.c.l.b16 %v209
        %v374 = vunpack.c.h.b16 %v209
        %v375 = vunpack.c.l.b16 %v210
        %v376 = vunpack.c.h.b16 %v210
        %v377 = vunpack.c.l.b16 %v211
        %v378 = vunpack.c.h.b16 %v211
        %v379 = vunpack.c.l.b16 %v212
        %v380 = vunpack.c.h.b16 %v212
        %v381 = vunpack.c.l.b16 %v213
        %v382 = vunpack.c.h.b16 %v213
        %v383 = vunpack.c.l.b16 %v214
        %v384 = vunpack.c.h.b16 %v214
        %v385 = vunpack.c.l.b16 %v215
        %v386 = vunpack.c.h.b16 %v215
        %v387 = vunpack.c.l.b16 %v216
        %v388 = vunpack.c.h.b16 %v216
        %v389 = vunpack.c.l.b16 %v217
        %v390 = vunpack.c.h.b16 %v217
        %v391 = vunpack.c.l.b16 %v218
        %v392 = vunpack.c.h.b16 %v218
        %v393 = vunpack.c.l.b16 %v219
        %v394 = vunpack.c.h.b16 %v219
        %v395 = vunpack.c.l.b16 %v220
        %v396 = vunpack.c.h.b16 %v220
        %v397 = vunpack.c.l.b16 %v221
        %v398 = vunpack.c.h.b16 %v221
        %v399 = vunpack.c.l.b16 %v222
        %v400 = vunpack.c.h.b16 %v222
        %v401 = vunpack.c.l.b16 %v223
        %v402 = vunpack.c.h.b16 %v223
        %v403 = vunpack.c.l.b16 %v224
        %v404 = vunpack.c.h.b16 %v224
        %v405 = vunpack.c.l.b16 %v225
        %v406 = vunpack.c.h.b16 %v225
        %v407 = vunpack.c.l.b16 %v226
        %v408 = vunpack.c.h.b16 %v226
        %v409 = vunpack.c.l.b16 %v227
        %v410 = vunpack.c.h.b16 %v227
        %v411 = vunpack.c.l.b16 %v228
        %v412 = vunpack.c.h.b16 %v228
        %v413 = vunpack.c.l.b16 %v229
        %v414 = vunpack.c.h.b16 %v229
        %v415 = vunpack.c.l.b16 %v230
        %v416 = vunpack.c.h.b16 %v230
        %v417 = vunpack.c.l.b16 %v231
        %v418 = vunpack.c.h.b16 %v231
        %v419 = vunpack.c.l.b16 %v232
        %v420 = vunpack.c.h.b16 %v232
        %v421 = vunpack.c.l.b16 %v233
        %v422 = vunpack.c.h.b16 %v233
        %v423 = vunpack.c.l.b16 %v234
        %v424 = vunpack.c.h.b16 %v234
        %v425 = vunpack.c.l.b16 %v235
        %v426 = vunpack.c.h.b16 %v235
        %v427 = vunpack.c.l.b16 %v236
        %v428 = vunpack.c.h.b16 %v236
        %v429 = vunpack.c.l.b16 %v237
        %v430 = vunpack.c.h.b16 %v237
        %v431 = vunpack.c.l.b16 %v238
        %v432 = vunpack.c.h.b16 %v238
        %v433 = vunpack.c.l.b16 %v239
        %v434 = vunpack.c.h.b16 %v239
        %v435 = vunpack.c.l.b16 %v240
        %v436 = vunpack.c.h.b16 %v240
        %v437 = vunpack.c.l.b16 %v241
        %v438 = vunpack.c.h.b16 %v241
        %v439 = vunpack.c.l.b16 %v242
        %v440 = vunpack.c.h.b16 %v242
        %v441 = vunpack.c.l.b16 %v243
        %v442 = vunpack.c.h.b16 %v243
        %v443 = vunpack.c.l.b16 %v244
        %v444 = vunpack.c.h.b16 %v244
        %v445 = vunpack.c.l.b16 %v245
        %v446 = vunpack.c.h.b16 %v245
        %v447 = vunpack.c.l.b16 %v246
        %v448 = vunpack.c.h.b16 %v246
        %v449 = vunpack.c.l.b16 %v247
        %v450 = vunpack.c.h.b16 %v247
        %v451 = vunpack.c.l.b16 %v248
        %v452 = vunpack.c.h.b16 %v248
        %v453 = vunpack.c.l.b16 %v249
        %v454 = vunpack.c.h.b16 %v249
        %v455 = vunpack.c.l.b16 %v250
        %v456 = vunpack.c.h.b16 %v250
        %v457 = vunpack.c.l.b16 %v251
        %v458 = vunpack.c.h.b16 %v251
        %v459 = vunpack.c.l.b16 %v252
        %v460 = vunpack.c.h.b16 %v252
        %v461 = vunpack.c.l.b16 %v253
        %v462 = vunpack.c.h.b16 %v253
        %v463 = vunpack.c.l.b16 %v254
        %v464 = vunpack.c.h.b16 %v254
        %v465 = vunpack.c.l.b16 %v255
        %v466 = vunpack.c.h.b16 %v255
        %v467 = vunpack.c.l.b16 %v256
        %v468 = vunpack.c.h.b16 %v256
        %v469 = vunpack.c.l.b16 %v257
        %v470 = vunpack.c.h.b16 %v257
        %v471 = vunpack.c.l.b16 %v258
        %v472 = vunpack.c.h.b16 %v258
        %v473 = vunpack.c.l.b16 %v259
        %v474 = vunpack.c.h.b16 %v259
        %v475 = vunpack.c.l.b16 %v260
        %v476 = vunpack.c.h.b16 %v260
        %v477 = vunpack.c.l.b16 %v261
        %v478 = vunpack.c.h.b16 %v261
        %v479 = vunpack.c.l.b16 %v262
        %v480 = vunpack.c.h.b16 %v262
        %v481 = vunpack.c.l.b16 %v263
        %v482 = vunpack.c.h.b16 %v263
        %v483 = vunpack.c.l.b16 %v264
        %v484 = vunpack.c.h.b16 %v264
        %v485 = vpack.c.b16 %v359, %v357
        %v486 = vpack.c.b16 %v360, %v358
        %v487 = vpack.c.b16 %v363, %v361
        %v488 = vpack.c.b16 %v364, %v362
        %v489 = vpack.c.b16 %v367, %v365
        %v490 = vpack.c.b16 %v368, %v366
        %v491 = vpack.c.b16 %v371, %v369
        %v492 = vpack.c.b16 %v372, %v370
        %v493 = vpack.c.b16 %v375, %v373
        %v494 = vpack.c.b16 %v376, %v374
        %v495 = vpack.c.b16 %v379, %v377
        %v496 = vpack.c.b16 %v380, %v378
        %v497 = vpack.c.b16 %v383, %v381
        %v498 = vpack.c.b16 %v384, %v382
        %v499 = vpack.c.b16 %v387, %v385
        %v500 = vpack.c.b16 %v388, %v386
        %v501 = vpack.c.b16 %v391, %v389
        %v502 = vpack.c.b16 %v392, %v390
        %v503 = vpack.c.b16 %v395, %v393
        %v504 = vpack.c.b16 %v396, %v394
        %v505 = vpack.c.b16 %v399, %v397
        %v506 = vpack.c.b16 %v400, %v398
        %v507 = vpack.c.b16 %v403, %v401
        %v508 = vpack.c.b16 %v404, %v402
        %v509 = vpack.c.b16 %v407, %v405
        %v510 = vpack.c.b16 %v408, %v406
        %v511 = vpack.c.b16 %v411, %v409
        %v512 = vpack.c.b16 %v412, %v410
        %v513 = vpack.c.b16 %v415, %v413
        %v514 = vpack.c.b16 %v416, %v414
        %v515 = vpack.c.b16 %v419, %v417
        %v516 = vpack.c.b16 %v420, %v418
        %v517 = vpack.c.b16 %v423, %v421
        %v518 = vpack.c.b16 %v424, %v422
        %v519 = vpack.c.b16 %v427, %v425
        %v520 = vpack.c.b16 %v428, %v426
        %v521 = vpack.c.b16 %v431, %v429
        %v522 = vpack.c.b16 %v432, %v430
        %v523 = vpack.c.b16 %v435, %v433
        %v524 = vpack.c.b16 %v436, %v434
        %v525 = vpack.c.b16 %v439, %v437
        %v526 = vpack.c.b16 %v440, %v438
        %v527 = vpack.c.b16 %v443, %v441
        %v528 = vpack.c.b16 %v444, %v442
        %v529 = vpack.c.b16 %v447, %v445
        %v530 = vpack.c.b16 %v448, %v446
        %v531 = vpack.c.b16 %v451, %v449
        %v532 = vpack.c.b16 %v452, %v450
        %v533 = vpack.c.b16 %v455, %v453
        %v534 = vpack.c.b16 %v456, %v454
        %v535 = vpack.c.b16 %v459, %v457
        %v536 = vpack.c.b16 %v460, %v458
        %v537 = vpack.c.b16 %v463, %v461
        %v538 = vpack.c.b16 %v464, %v462
        %v539 = vpack.c.b16 %v467, %v465
        %v540 = vpack.c.b16 %v468, %v466
        %v541 = vpack.c.b16 %v471, %v469
        %v542 = vpack.c.b16 %v472, %v470
        %v543 = vpack.c.b16 %v475, %v473
        %v544 = vpack.c.b16 %v476, %v474
        %v545 = vpack.c.b16 %v479, %v477
        %v546 = vpack.c.b16 %v480, %v478
        %v547 = vpack.c.b16 %v483, %v481
        %v548 = vpack.c.b16 %v484, %v482
        %v605 = vunpack.c.l.b16 %v265
        %v606 = vunpack.c.l.b16 %v266
        %v607 = vunpack.c.l.b16 %v267
        %v608 = vunpack.c.l.b16 %v268
        %v609 = vunpack.c.l.b16 %v269
        %v610 = vunpack.c.l.b16 %v270
        %v611 = vunpack.c.l.b16 %v271
        %v612 = vunpack.c.l.b16 %v272
        %v613 = vunpack.c.l.b16 %v273
        %v614 = vunpack.c.l.b16 %v274
        %v615 = vunpack.c.l.b16 %v275
        %v616 = vunpack.c.l.b16 %v276
        %v617 = vunpack.c.l.b16 %v277
        %v618 = vunpack.c.l.b16 %v278
        %v619 = vunpack.c.l.b16 %v279
        %v620 = vunpack.c.l.b16 %v280
        %v621 = vunpack.c.l.b16 %v281
        %v622 = vunpack.c.l.b16 %v282
        %v623 = vunpack.c.l.b16 %v283
        %v624 = vunpack.c.l.b16 %v284
        %v625 = vunpack.c.l.b16 %v285
        %v626 = vunpack.c.l.b16 %v286
        %v627 = vunpack.c.l.b16 %v287
        %v628 = vunpack.c.l.b16 %v288
        %v629 = vpack.c.b16 %v606, %v605
        %v630 = vpack.c.b16 %v608, %v607
        %v631 = vpack.c.b16 %v610, %v609
        %v632 = vpack.c.b16 %v612, %v611
        %v633 = vpack.c.b16 %v614, %v613
        %v634 = vpack.c.b16 %v616, %v615
        %v635 = vpack.c.b16 %v618, %v617
        %v636 = vpack.c.b16 %v620, %v619
        %v637 = vpack.c.b16 %v622, %v621
        %v638 = vpack.c.b16 %v624, %v623
        %v639 = vpack.c.b16 %v626, %v625
        %v640 = vpack.c.b16 %v628, %v627
        %vm653 = vcmask 523264
        %v655 = vsel %vm653, %v486, 0
        %v658 = vsel %vm653, %v488, 0
        %v661 = vsel %vm653, %v490, 0
        %v664 = vsel %vm653, %v492, 0
        %v667 = vsel %vm653, %v494, 0
        %v670 = vsel %vm653, %v496, 0
        %v673 = vsel %vm653, %v498, 0
        %v676 = vsel %vm653, %v500, 0
        %v679 = vsel %vm653, %v502, 0
        %v682 = vsel %vm653, %v504, 0
        %v685 = vsel %vm653, %v506, 0
        %v688 = vsel %vm653, %v508, 0
        %v691 = vsel %vm653, %v510, 0
        %v694 = vsel %vm653, %v512, 0
        %v697 = vsel %vm653, %v514, 0
        %v700 = vsel %vm653, %v516, 0
        %v703 = vsel %vm653, %v518, 0
        %v706 = vsel %vm653, %v520, 0
        %v709 = vsel %vm653, %v522, 0
        %v712 = vsel %vm653, %v524, 0
        %v715 = vsel %vm653, %v526, 0
        %v718 = vsel %vm653, %v528, 0
        %v721 = vsel %vm653, %v530, 0
        %v724 = vsel %vm653, %v532, 0
        %v727 = vsel %vm653, %v534, 0
        %v730 = vsel %vm653, %v536, 0
        %v733 = vsel %vm653, %v538, 0
        %v736 = vsel %vm653, %v540, 0
        %v739 = vsel %vm653, %v542, 0
        %v742 = vsel %vm653, %v544, 0
        %v745 = vsel %vm653, %v546, 0
        %v748 = vsel %vm653, %v548, 0
        %750 = vmatpush.bf16.msra.mxu0 %v636
        %751 = vmatpush.bf16.msra.mxu0 %v635
        %752 = vmatpush.bf16.msra.mxu0 %v634
        %753 = vmatpush.bf16.msra.mxu0 %v633
        %754 = vmatpush.bf16.msra.mxu0 %v632
        %755 = vmatpush.bf16.msra.mxu0 %v631
        %756 = vmatpush.bf16.msra.mxu0 %v630
        %757 = vmatpush.bf16.msra.mxu0 %v629
        %758 = vmatmul.bf16.gmra.mxu0 %v485
        %v759 = vpop.f32.mrf.mxu0
        %v760 = vadd.f32 %v291, %v759
        %v761 = vpop.f32.mrf.mxu0
        %v762 = vadd.f32 %v291, %v761
        %763 = vmatmul.bf16.gmra.mxu0 %v487
        %v764 = vpop.f32.mrf.mxu0
        %v765 = vadd.f32 %v291, %v764
        %v766 = vpop.f32.mrf.mxu0
        %v767 = vadd.f32 %v291, %v766
        %768 = vmatmul.bf16.gmra.mxu0 %v489
        %v769 = vpop.f32.mrf.mxu0
        %v770 = vadd.f32 %v291, %v769
        %v771 = vpop.f32.mrf.mxu0
        %v772 = vadd.f32 %v291, %v771
        %773 = vmatmul.bf16.gmra.mxu0 %v491
        %v774 = vpop.f32.mrf.mxu0
        %v775 = vadd.f32 %v291, %v774
        %v776 = vpop.f32.mrf.mxu0
        %v777 = vadd.f32 %v291, %v776
        %778 = vmatmul.bf16.gmra.mxu0 %v493
        %v779 = vpop.f32.mrf.mxu0
        %v780 = vadd.f32 %v291, %v779
        %v781 = vpop.f32.mrf.mxu0
        %v782 = vadd.f32 %v291, %v781
        %783 = vmatmul.bf16.gmra.mxu0 %v495
        %v784 = vpop.f32.mrf.mxu0
        %v785 = vadd.f32 %v291, %v784
        %v786 = vpop.f32.mrf.mxu0
        %v787 = vadd.f32 %v291, %v786
        %788 = vmatmul.bf16.gmra.mxu0 %v497
        %v789 = vpop.f32.mrf.mxu0
        %v790 = vadd.f32 %v291, %v789
        %v791 = vpop.f32.mrf.mxu0
        %v792 = vadd.f32 %v291, %v791
        %793 = vmatmul.bf16.gmra.mxu0 %v499
        %v794 = vpop.f32.mrf.mxu0
        %v795 = vadd.f32 %v291, %v794
        %v796 = vpop.f32.mrf.mxu0
        %v797 = vadd.f32 %v291, %v796
        %798 = vmatmul.bf16.gmra.mxu0 %v501
        %v799 = vpop.f32.mrf.mxu0
        %v800 = vadd.f32 %v291, %v799
        %v801 = vpop.f32.mrf.mxu0
        %v802 = vadd.f32 %v291, %v801
        %803 = vmatmul.bf16.gmra.mxu0 %v503
        %v804 = vpop.f32.mrf.mxu0
        %v805 = vadd.f32 %v291, %v804
        %v806 = vpop.f32.mrf.mxu0
        %v807 = vadd.f32 %v291, %v806
        %808 = vmatmul.bf16.gmra.mxu0 %v505
        %v809 = vpop.f32.mrf.mxu0
        %v810 = vadd.f32 %v291, %v809
        %v811 = vpop.f32.mrf.mxu0
        %v812 = vadd.f32 %v291, %v811
        %813 = vmatmul.bf16.gmra.mxu0 %v507
        %v814 = vpop.f32.mrf.mxu0
        %v815 = vadd.f32 %v291, %v814
        %v816 = vpop.f32.mrf.mxu0
        %v817 = vadd.f32 %v291, %v816
        %818 = vmatmul.bf16.gmra.mxu0 %v509
        %v819 = vpop.f32.mrf.mxu0
        %v820 = vadd.f32 %v291, %v819
        %v821 = vpop.f32.mrf.mxu0
        %v822 = vadd.f32 %v291, %v821
        %823 = vmatmul.bf16.gmra.mxu0 %v511
        %v824 = vpop.f32.mrf.mxu0
        %v825 = vadd.f32 %v291, %v824
        %v826 = vpop.f32.mrf.mxu0
        %v827 = vadd.f32 %v291, %v826
        %828 = vmatmul.bf16.gmra.mxu0 %v513
        %v829 = vpop.f32.mrf.mxu0
        %v830 = vadd.f32 %v291, %v829
        %v831 = vpop.f32.mrf.mxu0
        %v832 = vadd.f32 %v291, %v831
        %833 = vmatmul.bf16.gmra.mxu0 %v515
        %v834 = vpop.f32.mrf.mxu0
        %v835 = vadd.f32 %v291, %v834
        %v836 = vpop.f32.mrf.mxu0
        %v837 = vadd.f32 %v291, %v836
        %838 = vmatmul.bf16.gmra.mxu0 %v517
        %v839 = vpop.f32.mrf.mxu0
        %v840 = vadd.f32 %v291, %v839
        %v841 = vpop.f32.mrf.mxu0
        %v842 = vadd.f32 %v291, %v841
        %843 = vmatmul.bf16.gmra.mxu0 %v519
        %v844 = vpop.f32.mrf.mxu0
        %v845 = vadd.f32 %v291, %v844
        %v846 = vpop.f32.mrf.mxu0
        %v847 = vadd.f32 %v291, %v846
        %848 = vmatmul.bf16.gmra.mxu0 %v521
        %v849 = vpop.f32.mrf.mxu0
        %v850 = vadd.f32 %v291, %v849
        %v851 = vpop.f32.mrf.mxu0
        %v852 = vadd.f32 %v291, %v851
        %853 = vmatmul.bf16.gmra.mxu0 %v523
        %v854 = vpop.f32.mrf.mxu0
        %v855 = vadd.f32 %v291, %v854
        %v856 = vpop.f32.mrf.mxu0
        %v857 = vadd.f32 %v291, %v856
        %858 = vmatmul.bf16.gmra.mxu0 %v525
        %v859 = vpop.f32.mrf.mxu0
        %v860 = vadd.f32 %v291, %v859
        %v861 = vpop.f32.mrf.mxu0
        %v862 = vadd.f32 %v291, %v861
        %863 = vmatmul.bf16.gmra.mxu0 %v527
        %v864 = vpop.f32.mrf.mxu0
        %v865 = vadd.f32 %v291, %v864
        %v866 = vpop.f32.mrf.mxu0
        %v867 = vadd.f32 %v291, %v866
        %868 = vmatmul.bf16.gmra.mxu0 %v529
        %v869 = vpop.f32.mrf.mxu0
        %v870 = vadd.f32 %v291, %v869
        %v871 = vpop.f32.mrf.mxu0
        %v872 = vadd.f32 %v291, %v871
        %873 = vmatmul.bf16.gmra.mxu0 %v531
        %v874 = vpop.f32.mrf.mxu0
        %v875 = vadd.f32 %v291, %v874
        %v876 = vpop.f32.mrf.mxu0
        %v877 = vadd.f32 %v291, %v876
        %878 = vmatmul.bf16.gmra.mxu0 %v533
        %v879 = vpop.f32.mrf.mxu0
        %v880 = vadd.f32 %v291, %v879
        %v881 = vpop.f32.mrf.mxu0
        %v882 = vadd.f32 %v291, %v881
        %883 = vmatmul.bf16.gmra.mxu0 %v535
        %v884 = vpop.f32.mrf.mxu0
        %v885 = vadd.f32 %v291, %v884
        %v886 = vpop.f32.mrf.mxu0
        %v887 = vadd.f32 %v291, %v886
        %888 = vmatmul.bf16.gmra.mxu0 %v537
        %v889 = vpop.f32.mrf.mxu0
        %v890 = vadd.f32 %v291, %v889
        %v891 = vpop.f32.mrf.mxu0
        %v892 = vadd.f32 %v291, %v891
        %893 = vmatmul.bf16.gmra.mxu0 %v539
        %v894 = vpop.f32.mrf.mxu0
        %v895 = vadd.f32 %v291, %v894
        %v896 = vpop.f32.mrf.mxu0
        %v897 = vadd.f32 %v291, %v896
        %898 = vmatmul.bf16.gmra.mxu0 %v541
        %v899 = vpop.f32.mrf.mxu0
        %v900 = vadd.f32 %v291, %v899
        %v901 = vpop.f32.mrf.mxu0
        %v902 = vadd.f32 %v291, %v901
        %903 = vmatmul.bf16.gmra.mxu0 %v543
        %v904 = vpop.f32.mrf.mxu0
        %v905 = vadd.f32 %v291, %v904
        %v906 = vpop.f32.mrf.mxu0
        %v907 = vadd.f32 %v291, %v906
        %908 = vmatmul.bf16.gmra.mxu0 %v545
        %v909 = vpop.f32.mrf.mxu0
        %v910 = vadd.f32 %v291, %v909
        %v911 = vpop.f32.mrf.mxu0
        %v912 = vadd.f32 %v291, %v911
        %913 = vmatmul.bf16.gmra.mxu0 %v547
        %v914 = vpop.f32.mrf.mxu0
        %v915 = vadd.f32 %v291, %v914
        %v916 = vpop.f32.mrf.mxu0
        %v917 = vadd.f32 %v291, %v916
        %918 = vdwg.mxu0
        %919 = vmatpush.bf16.msra.mxu0 0
        %920 = vmatpush.bf16.msra.mxu0 0
        %921 = vmatpush.bf16.msra.mxu0 0
        %922 = vmatpush.bf16.msra.mxu0 0
        %923 = vmatpush.bf16.msra.mxu0 %v640
        %924 = vmatpush.bf16.msra.mxu0 %v639
        %925 = vmatpush.bf16.msra.mxu0 %v638
        %926 = vmatpush.bf16.msra.mxu0 %v637
        %927 = vmatmul.bf16.gmra.mxu0 %v655
        %v928 = vpop.f32.mrf.mxu0
        %v929 = vadd.f32 %v760, %v928
        %v930 = vpop.f32.mrf.mxu0
        %v931 = vadd.f32 %v762, %v930
        %932 = vmatmul.bf16.gmra.mxu0 %v658
        %v933 = vpop.f32.mrf.mxu0
        %v934 = vadd.f32 %v765, %v933
        %v935 = vpop.f32.mrf.mxu0
        %v936 = vadd.f32 %v767, %v935
        %937 = vmatmul.bf16.gmra.mxu0 %v661
        %v938 = vpop.f32.mrf.mxu0
        %v939 = vadd.f32 %v770, %v938
        %v940 = vpop.f32.mrf.mxu0
        %v941 = vadd.f32 %v772, %v940
        %942 = vmatmul.bf16.gmra.mxu0 %v664
        %v943 = vpop.f32.mrf.mxu0
        %v944 = vadd.f32 %v775, %v943
        %v945 = vpop.f32.mrf.mxu0
        %v946 = vadd.f32 %v777, %v945
        %947 = vmatmul.bf16.gmra.mxu0 %v667
        %v948 = vpop.f32.mrf.mxu0
        %v949 = vadd.f32 %v780, %v948
        %v950 = vpop.f32.mrf.mxu0
        %v951 = vadd.f32 %v782, %v950
        %952 = vmatmul.bf16.gmra.mxu0 %v670
        %v953 = vpop.f32.mrf.mxu0
        %v954 = vadd.f32 %v785, %v953
        %v955 = vpop.f32.mrf.mxu0
        %v956 = vadd.f32 %v787, %v955
        %957 = vmatmul.bf16.gmra.mxu0 %v673
        %v958 = vpop.f32.mrf.mxu0
        %v959 = vadd.f32 %v790, %v958
        %v960 = vpop.f32.mrf.mxu0
        %v961 = vadd.f32 %v792, %v960
        %962 = vmatmul.bf16.gmra.mxu0 %v676
        %v963 = vpop.f32.mrf.mxu0
        %v964 = vadd.f32 %v795, %v963
        %v965 = vpop.f32.mrf.mxu0
        %v966 = vadd.f32 %v797, %v965
        %967 = vmatmul.bf16.gmra.mxu0 %v679
        %v968 = vpop.f32.mrf.mxu0
        %v969 = vadd.f32 %v800, %v968
        %v970 = vpop.f32.mrf.mxu0
        %v971 = vadd.f32 %v802, %v970
        %972 = vmatmul.bf16.gmra.mxu0 %v682
        %v973 = vpop.f32.mrf.mxu0
        %v974 = vadd.f32 %v805, %v973
        %v975 = vpop.f32.mrf.mxu0
        %v976 = vadd.f32 %v807, %v975
        %977 = vmatmul.bf16.gmra.mxu0 %v685
        %v978 = vpop.f32.mrf.mxu0
        %v979 = vadd.f32 %v810, %v978
        %v980 = vpop.f32.mrf.mxu0
        %v981 = vadd.f32 %v812, %v980
        %982 = vmatmul.bf16.gmra.mxu0 %v688
        %v983 = vpop.f32.mrf.mxu0
        %v984 = vadd.f32 %v815, %v983
        %v985 = vpop.f32.mrf.mxu0
        %v986 = vadd.f32 %v817, %v985
        %987 = vmatmul.bf16.gmra.mxu0 %v691
        %v988 = vpop.f32.mrf.mxu0
        %v989 = vadd.f32 %v820, %v988
        %v990 = vpop.f32.mrf.mxu0
        %v991 = vadd.f32 %v822, %v990
        %992 = vmatmul.bf16.gmra.mxu0 %v694
        %v993 = vpop.f32.mrf.mxu0
        %v994 = vadd.f32 %v825, %v993
        %v995 = vpop.f32.mrf.mxu0
        %v996 = vadd.f32 %v827, %v995
        %997 = vmatmul.bf16.gmra.mxu0 %v697
        %v998 = vpop.f32.mrf.mxu0
        %v999 = vadd.f32 %v830, %v998
        %v1000 = vpop.f32.mrf.mxu0
        %v1001 = vadd.f32 %v832, %v1000
        %1002 = vmatmul.bf16.gmra.mxu0 %v700
        %v1003 = vpop.f32.mrf.mxu0
        %v1004 = vadd.f32 %v835, %v1003
        %v1005 = vpop.f32.mrf.mxu0
        %v1006 = vadd.f32 %v837, %v1005
        %1007 = vmatmul.bf16.gmra.mxu0 %v703
        %v1008 = vpop.f32.mrf.mxu0
        %v1009 = vadd.f32 %v840, %v1008
        %v1010 = vpop.f32.mrf.mxu0
        %v1011 = vadd.f32 %v842, %v1010
        %1012 = vmatmul.bf16.gmra.mxu0 %v706
        %v1013 = vpop.f32.mrf.mxu0
        %v1014 = vadd.f32 %v845, %v1013
        %v1015 = vpop.f32.mrf.mxu0
        %v1016 = vadd.f32 %v847, %v1015
        %1017 = vmatmul.bf16.gmra.mxu0 %v709
        %v1018 = vpop.f32.mrf.mxu0
        %v1019 = vadd.f32 %v850, %v1018
        %v1020 = vpop.f32.mrf.mxu0
        %v1021 = vadd.f32 %v852, %v1020
        %1022 = vmatmul.bf16.gmra.mxu0 %v712
        %v1023 = vpop.f32.mrf.mxu0
        %v1024 = vadd.f32 %v855, %v1023
        %v1025 = vpop.f32.mrf.mxu0
        %v1026 = vadd.f32 %v857, %v1025
        %1027 = vmatmul.bf16.gmra.mxu0 %v715
        %v1028 = vpop.f32.mrf.mxu0
        %v1029 = vadd.f32 %v860, %v1028
        %v1030 = vpop.f32.mrf.mxu0
        %v1031 = vadd.f32 %v862, %v1030
        %1032 = vmatmul.bf16.gmra.mxu0 %v718
        %v1033 = vpop.f32.mrf.mxu0
        %v1034 = vadd.f32 %v865, %v1033
        %v1035 = vpop.f32.mrf.mxu0
        %v1036 = vadd.f32 %v867, %v1035
        %1037 = vmatmul.bf16.gmra.mxu0 %v721
        %v1038 = vpop.f32.mrf.mxu0
        %v1039 = vadd.f32 %v870, %v1038
        %v1040 = vpop.f32.mrf.mxu0
        %v1041 = vadd.f32 %v872, %v1040
        %1042 = vmatmul.bf16.gmra.mxu0 %v724
        %v1043 = vpop.f32.mrf.mxu0
        %v1044 = vadd.f32 %v875, %v1043
        %v1045 = vpop.f32.mrf.mxu0
        %v1046 = vadd.f32 %v877, %v1045
        %1047 = vmatmul.bf16.gmra.mxu0 %v727
        %v1048 = vpop.f32.mrf.mxu0
        %v1049 = vadd.f32 %v880, %v1048
        %v1050 = vpop.f32.mrf.mxu0
        %v1051 = vadd.f32 %v882, %v1050
        %1052 = vmatmul.bf16.gmra.mxu0 %v730
        %v1053 = vpop.f32.mrf.mxu0
        %v1054 = vadd.f32 %v885, %v1053
        %v1055 = vpop.f32.mrf.mxu0
        %v1056 = vadd.f32 %v887, %v1055
        %1057 = vmatmul.bf16.gmra.mxu0 %v733
        %v1058 = vpop.f32.mrf.mxu0
        %v1059 = vadd.f32 %v890, %v1058
        %v1060 = vpop.f32.mrf.mxu0
        %v1061 = vadd.f32 %v892, %v1060
        %1062 = vmatmul.bf16.gmra.mxu0 %v736
        %v1063 = vpop.f32.mrf.mxu0
        %v1064 = vadd.f32 %v895, %v1063
        %v1065 = vpop.f32.mrf.mxu0
        %v1066 = vadd.f32 %v897, %v1065
        %1067 = vmatmul.bf16.gmra.mxu0 %v739
        %v1068 = vpop.f32.mrf.mxu0
        %v1069 = vadd.f32 %v900, %v1068
        %v1070 = vpop.f32.mrf.mxu0
        %v1071 = vadd.f32 %v902, %v1070
        %1072 = vmatmul.bf16.gmra.mxu0 %v742
        %v1073 = vpop.f32.mrf.mxu0
        %v1074 = vadd.f32 %v905, %v1073
        %v1075 = vpop.f32.mrf.mxu0
        %v1076 = vadd.f32 %v907, %v1075
        %1077 = vmatmul.bf16.gmra.mxu0 %v745
        %v1078 = vpop.f32.mrf.mxu0
        %v1079 = vadd.f32 %v910, %v1078
        %v1080 = vpop.f32.mrf.mxu0
        %v1081 = vadd.f32 %v912, %v1080
        %1082 = vmatmul.bf16.gmra.mxu0 %v748
        %v1083 = vpop.f32.mrf.mxu0
        %v1084 = vadd.f32 %v915, %v1083
        %v1085 = vpop.f32.mrf.mxu0
        %v1086 = vadd.f32 %v917, %v1085
        %1087 = vdwg.mxu0
        %v1088 = vmin.f32 %v929, 0.0
        %v1089 = vmin.f32 %v931, 0.0
        %v1090 = vmin.f32 %v934, 0.0
        %v1091 = vmin.f32 %v936, 0.0
        %v1092 = vmin.f32 %v939, 0.0
        %v1093 = vmin.f32 %v941, 0.0
        %v1094 = vmin.f32 %v944, 0.0
        %v1095 = vmin.f32 %v946, 0.0
        %v1096 = vmin.f32 %v949, 0.0
        %v1097 = vmin.f32 %v951, 0.0
        %v1098 = vmin.f32 %v954, 0.0
        %v1099 = vmin.f32 %v956, 0.0
        %v1100 = vmin.f32 %v959, 0.0
        %v1101 = vmin.f32 %v961, 0.0
        %v1102 = vmin.f32 %v964, 0.0
        %v1103 = vmin.f32 %v966, 0.0
        %v1104 = vmin.f32 %v969, 0.0
        %v1105 = vmin.f32 %v971, 0.0
        %v1106 = vmin.f32 %v974, 0.0
        %v1107 = vmin.f32 %v976, 0.0
        %v1108 = vmin.f32 %v979, 0.0
        %v1109 = vmin.f32 %v981, 0.0
        %v1110 = vmin.f32 %v984, 0.0
        %v1111 = vmin.f32 %v986, 0.0
        %v1112 = vmin.f32 %v989, 0.0
        %v1113 = vmin.f32 %v991, 0.0
        %v1114 = vmin.f32 %v994, 0.0
        %v1115 = vmin.f32 %v996, 0.0
        %v1116 = vmin.f32 %v999, 0.0
        %v1117 = vmin.f32 %v1001, 0.0
        %v1118 = vmin.f32 %v1004, 0.0
        %v1119 = vmin.f32 %v1006, 0.0
        %v1120 = vmin.f32 %v1009, 0.0
        %v1121 = vmin.f32 %v1011, 0.0
        %v1122 = vmin.f32 %v1014, 0.0
        %v1123 = vmin.f32 %v1016, 0.0
        %v1124 = vmin.f32 %v1019, 0.0
        %v1125 = vmin.f32 %v1021, 0.0
        %v1126 = vmin.f32 %v1024, 0.0
        %v1127 = vmin.f32 %v1026, 0.0
        %v1128 = vmin.f32 %v1029, 0.0
        %v1129 = vmin.f32 %v1031, 0.0
        %v1130 = vmin.f32 %v1034, 0.0
        %v1131 = vmin.f32 %v1036, 0.0
        %v1132 = vmin.f32 %v1039, 0.0
        %v1133 = vmin.f32 %v1041, 0.0
        %v1134 = vmin.f32 %v1044, 0.0
        %v1135 = vmin.f32 %v1046, 0.0
        %v1136 = vmin.f32 %v1049, 0.0
        %v1137 = vmin.f32 %v1051, 0.0
        %v1138 = vmin.f32 %v1054, 0.0
        %v1139 = vmin.f32 %v1056, 0.0
        %v1140 = vmin.f32 %v1059, 0.0
        %v1141 = vmin.f32 %v1061, 0.0
        %v1142 = vmin.f32 %v1064, 0.0
        %v1143 = vmin.f32 %v1066, 0.0
        %v1144 = vmin.f32 %v1069, 0.0
        %v1145 = vmin.f32 %v1071, 0.0
        %v1146 = vmin.f32 %v1074, 0.0
        %v1147 = vmin.f32 %v1076, 0.0
        %v1148 = vmin.f32 %v1079, 0.0
        %v1149 = vmin.f32 %v1081, 0.0
        %v1150 = vmin.f32 %v1084, 0.0
        %v1151 = vmin.f32 %v1086, 0.0
        %v1152 = vmul.f32 %v1088, 1.442695
        %v1153 = vpow.pop %v1152
        %v1154 = vmul.f32 %v1089, 1.442695
        %v1155 = vpow.pop %v1154
        %v1156 = vmul.f32 %v1090, 1.442695
        %v1157 = vpow.pop %v1156
        %v1158 = vmul.f32 %v1091, 1.442695
        %v1159 = vpow.pop %v1158
        %v1160 = vmul.f32 %v1092, 1.442695
        %v1161 = vpow.pop %v1160
        %v1162 = vmul.f32 %v1093, 1.442695
        %v1163 = vpow.pop %v1162
        %v1164 = vmul.f32 %v1094, 1.442695
        %v1165 = vpow.pop %v1164
        %v1166 = vmul.f32 %v1095, 1.442695
        %v1167 = vpow.pop %v1166
        %v1168 = vmul.f32 %v1096, 1.442695
        %v1169 = vpow.pop %v1168
        %v1170 = vmul.f32 %v1097, 1.442695
        %v1171 = vpow.pop %v1170
        %v1172 = vmul.f32 %v1098, 1.442695
        %v1173 = vpow.pop %v1172
        %v1174 = vmul.f32 %v1099, 1.442695
        %v1175 = vpow.pop %v1174
        %v1176 = vmul.f32 %v1100, 1.442695
        %v1177 = vpow.pop %v1176
        %v1178 = vmul.f32 %v1101, 1.442695
        %v1179 = vpow.pop %v1178
        %v1180 = vmul.f32 %v1102, 1.442695
        %v1181 = vpow.pop %v1180
        %v1182 = vmul.f32 %v1103, 1.442695
        %v1183 = vpow.pop %v1182
        %v1184 = vmul.f32 %v1104, 1.442695
        %v1185 = vpow.pop %v1184
        %v1186 = vmul.f32 %v1105, 1.442695
        %v1187 = vpow.pop %v1186
        %v1188 = vmul.f32 %v1106, 1.442695
        %v1189 = vpow.pop %v1188
        %v1190 = vmul.f32 %v1107, 1.442695
        %v1191 = vpow.pop %v1190
        %v1192 = vmul.f32 %v1108, 1.442695
        %v1193 = vpow.pop %v1192
        %v1194 = vmul.f32 %v1109, 1.442695
        %v1195 = vpow.pop %v1194
        %v1196 = vmul.f32 %v1110, 1.442695
        %v1197 = vpow.pop %v1196
        %v1198 = vmul.f32 %v1111, 1.442695
        %v1199 = vpow.pop %v1198
        %v1200 = vmul.f32 %v1112, 1.442695
        %v1201 = vpow.pop %v1200
        %v1202 = vmul.f32 %v1113, 1.442695
        %v1203 = vpow.pop %v1202
        %v1204 = vmul.f32 %v1114, 1.442695
        %v1205 = vpow.pop %v1204
        %v1206 = vmul.f32 %v1115, 1.442695
        %v1207 = vpow.pop %v1206
        %v1208 = vmul.f32 %v1116, 1.442695
        %v1209 = vpow.pop %v1208
        %v1210 = vmul.f32 %v1117, 1.442695
        %v1211 = vpow.pop %v1210
        %v1212 = vmul.f32 %v1118, 1.442695
        %v1213 = vpow.pop %v1212
        %v1214 = vmul.f32 %v1119, 1.442695
        %v1215 = vpow.pop %v1214
        %v1216 = vmul.f32 %v1120, 1.442695
        %v1217 = vpow.pop %v1216
        %v1218 = vmul.f32 %v1121, 1.442695
        %v1219 = vpow.pop %v1218
        %v1220 = vmul.f32 %v1122, 1.442695
        %v1221 = vpow.pop %v1220
        %v1222 = vmul.f32 %v1123, 1.442695
        %v1223 = vpow.pop %v1222
        %v1224 = vmul.f32 %v1124, 1.442695
        %v1225 = vpow.pop %v1224
        %v1226 = vmul.f32 %v1125, 1.442695
        %v1227 = vpow.pop %v1226
        %v1228 = vmul.f32 %v1126, 1.442695
        %v1229 = vpow.pop %v1228
        %v1230 = vmul.f32 %v1127, 1.442695
        %v1231 = vpow.pop %v1230
        %v1232 = vmul.f32 %v1128, 1.442695
        %v1233 = vpow.pop %v1232
        %v1234 = vmul.f32 %v1129, 1.442695
        %v1235 = vpow.pop %v1234
        %v1236 = vmul.f32 %v1130, 1.442695
        %v1237 = vpow.pop %v1236
        %v1238 = vmul.f32 %v1131, 1.442695
        %v1239 = vpow.pop %v1238
        %v1240 = vmul.f32 %v1132, 1.442695
        %v1241 = vpow.pop %v1240
        %v1242 = vmul.f32 %v1133, 1.442695
        %v1243 = vpow.pop %v1242
        %v1244 = vmul.f32 %v1134, 1.442695
        %v1245 = vpow.pop %v1244
        %v1246 = vmul.f32 %v1135, 1.442695
        %v1247 = vpow.pop %v1246
        %v1248 = vmul.f32 %v1136, 1.442695
        %v1249 = vpow.pop %v1248
        %v1250 = vmul.f32 %v1137, 1.442695
        %v1251 = vpow.pop %v1250
        %v1252 = vmul.f32 %v1138, 1.442695
        %v1253 = vpow.pop %v1252
        %v1254 = vmul.f32 %v1139, 1.442695
        %v1255 = vpow.pop %v1254
        %v1256 = vmul.f32 %v1140, 1.442695
        %v1257 = vpow.pop %v1256
        %v1258 = vmul.f32 %v1141, 1.442695
        %v1259 = vpow.pop %v1258
        %v1260 = vmul.f32 %v1142, 1.442695
        %v1261 = vpow.pop %v1260
        %v1262 = vmul.f32 %v1143, 1.442695
        %v1263 = vpow.pop %v1262
        %v1264 = vmul.f32 %v1144, 1.442695
        %v1265 = vpow.pop %v1264
        %v1266 = vmul.f32 %v1145, 1.442695
        %v1267 = vpow.pop %v1266
        %v1268 = vmul.f32 %v1146, 1.442695
        %v1269 = vpow.pop %v1268
        %v1270 = vmul.f32 %v1147, 1.442695
        %v1271 = vpow.pop %v1270
        %v1272 = vmul.f32 %v1148, 1.442695
        %v1273 = vpow.pop %v1272
        %v1274 = vmul.f32 %v1149, 1.442695
        %v1275 = vpow.pop %v1274
        %v1276 = vmul.f32 %v1150, 1.442695
        %v1277 = vpow.pop %v1276
        %v1278 = vmul.f32 %v1151, 1.442695
        %v1279 = vpow.pop %v1278
        %v1280 = vsub.f32 %v1153, 1.0
        %v1281 = vsub.f32 %v1155, 1.0
        %v1282 = vsub.f32 %v1157, 1.0
        %v1283 = vsub.f32 %v1159, 1.0
        %v1284 = vsub.f32 %v1161, 1.0
        %v1285 = vsub.f32 %v1163, 1.0
        %v1286 = vsub.f32 %v1165, 1.0
        %v1287 = vsub.f32 %v1167, 1.0
        %v1288 = vsub.f32 %v1169, 1.0
        %v1289 = vsub.f32 %v1171, 1.0
        %v1290 = vsub.f32 %v1173, 1.0
        %v1291 = vsub.f32 %v1175, 1.0
        %v1292 = vsub.f32 %v1177, 1.0
        %v1293 = vsub.f32 %v1179, 1.0
        %v1294 = vsub.f32 %v1181, 1.0
        %v1295 = vsub.f32 %v1183, 1.0
        %v1296 = vsub.f32 %v1185, 1.0
        %v1297 = vsub.f32 %v1187, 1.0
        %v1298 = vsub.f32 %v1189, 1.0
        %v1299 = vsub.f32 %v1191, 1.0
        %v1300 = vsub.f32 %v1193, 1.0
        %v1301 = vsub.f32 %v1195, 1.0
        %v1302 = vsub.f32 %v1197, 1.0
        %v1303 = vsub.f32 %v1199, 1.0
        %v1304 = vsub.f32 %v1201, 1.0
        %v1305 = vsub.f32 %v1203, 1.0
        %v1306 = vsub.f32 %v1205, 1.0
        %v1307 = vsub.f32 %v1207, 1.0
        %v1308 = vsub.f32 %v1209, 1.0
        %v1309 = vsub.f32 %v1211, 1.0
        %v1310 = vsub.f32 %v1213, 1.0
        %v1311 = vsub.f32 %v1215, 1.0
        %v1312 = vsub.f32 %v1217, 1.0
        %v1313 = vsub.f32 %v1219, 1.0
        %v1314 = vsub.f32 %v1221, 1.0
        %v1315 = vsub.f32 %v1223, 1.0
        %v1316 = vsub.f32 %v1225, 1.0
        %v1317 = vsub.f32 %v1227, 1.0
        %v1318 = vsub.f32 %v1229, 1.0
        %v1319 = vsub.f32 %v1231, 1.0
        %v1320 = vsub.f32 %v1233, 1.0
        %v1321 = vsub.f32 %v1235, 1.0
        %v1322 = vsub.f32 %v1237, 1.0
        %v1323 = vsub.f32 %v1239, 1.0
        %v1324 = vsub.f32 %v1241, 1.0
        %v1325 = vsub.f32 %v1243, 1.0
        %v1326 = vsub.f32 %v1245, 1.0
        %v1327 = vsub.f32 %v1247, 1.0
        %v1328 = vsub.f32 %v1249, 1.0
        %v1329 = vsub.f32 %v1251, 1.0
        %v1330 = vsub.f32 %v1253, 1.0
        %v1331 = vsub.f32 %v1255, 1.0
        %v1332 = vsub.f32 %v1257, 1.0
        %v1333 = vsub.f32 %v1259, 1.0
        %v1334 = vsub.f32 %v1261, 1.0
        %v1335 = vsub.f32 %v1263, 1.0
        %v1336 = vsub.f32 %v1265, 1.0
        %v1337 = vsub.f32 %v1267, 1.0
        %v1338 = vsub.f32 %v1269, 1.0
        %v1339 = vsub.f32 %v1271, 1.0
        %v1340 = vsub.f32 %v1273, 1.0
        %v1341 = vsub.f32 %v1275, 1.0
        %v1342 = vsub.f32 %v1277, 1.0
        %v1343 = vsub.f32 %v1279, 1.0
        %vm1344 = vcmp.gt.f32.partialorder %v929, 0.0
        %vm1345 = vcmp.gt.f32.partialorder %v931, 0.0
        %vm1346 = vcmp.gt.f32.partialorder %v934, 0.0
        %vm1347 = vcmp.gt.f32.partialorder %v936, 0.0
        %vm1348 = vcmp.gt.f32.partialorder %v939, 0.0
        %vm1349 = vcmp.gt.f32.partialorder %v941, 0.0
        %vm1350 = vcmp.gt.f32.partialorder %v944, 0.0
        %vm1351 = vcmp.gt.f32.partialorder %v946, 0.0
        %vm1352 = vcmp.gt.f32.partialorder %v949, 0.0
        %vm1353 = vcmp.gt.f32.partialorder %v951, 0.0
        %vm1354 = vcmp.gt.f32.partialorder %v954, 0.0
        %vm1355 = vcmp.gt.f32.partialorder %v956, 0.0
        %vm1356 = vcmp.gt.f32.partialorder %v959, 0.0
        %vm1357 = vcmp.gt.f32.partialorder %v961, 0.0
        %vm1358 = vcmp.gt.f32.partialorder %v964, 0.0
        %vm1359 = vcmp.gt.f32.partialorder %v966, 0.0
        %vm1360 = vcmp.gt.f32.partialorder %v969, 0.0
        %vm1361 = vcmp.gt.f32.partialorder %v971, 0.0
        %vm1362 = vcmp.gt.f32.partialorder %v974, 0.0
        %vm1363 = vcmp.gt.f32.partialorder %v976, 0.0
        %vm1364 = vcmp.gt.f32.partialorder %v979, 0.0
        %vm1365 = vcmp.gt.f32.partialorder %v981, 0.0
        %vm1366 = vcmp.gt.f32.partialorder %v984, 0.0
        %vm1367 = vcmp.gt.f32.partialorder %v986, 0.0
        %vm1368 = vcmp.gt.f32.partialorder %v989, 0.0
        %vm1369 = vcmp.gt.f32.partialorder %v991, 0.0
        %vm1370 = vcmp.gt.f32.partialorder %v994, 0.0
        %vm1371 = vcmp.gt.f32.partialorder %v996, 0.0
        %vm1372 = vcmp.gt.f32.partialorder %v999, 0.0
        %vm1373 = vcmp.gt.f32.partialorder %v1001, 0.0
        %vm1374 = vcmp.gt.f32.partialorder %v1004, 0.0
        %vm1375 = vcmp.gt.f32.partialorder %v1006, 0.0
        %vm1376 = vcmp.gt.f32.partialorder %v1009, 0.0
        %vm1377 = vcmp.gt.f32.partialorder %v1011, 0.0
        %vm1378 = vcmp.gt.f32.partialorder %v1014, 0.0
        %vm1379 = vcmp.gt.f32.partialorder %v1016, 0.0
        %vm1380 = vcmp.gt.f32.partialorder %v1019, 0.0
        %vm1381 = vcmp.gt.f32.partialorder %v1021, 0.0
        %vm1382 = vcmp.gt.f32.partialorder %v1024, 0.0
        %vm1383 = vcmp.gt.f32.partialorder %v1026, 0.0
        %vm1384 = vcmp.gt.f32.partialorder %v1029, 0.0
        %vm1385 = vcmp.gt.f32.partialorder %v1031, 0.0
        %vm1386 = vcmp.gt.f32.partialorder %v1034, 0.0
        %vm1387 = vcmp.gt.f32.partialorder %v1036, 0.0
        %vm1388 = vcmp.gt.f32.partialorder %v1039, 0.0
        %vm1389 = vcmp.gt.f32.partialorder %v1041, 0.0
        %vm1390 = vcmp.gt.f32.partialorder %v1044, 0.0
        %vm1391 = vcmp.gt.f32.partialorder %v1046, 0.0
        %vm1392 = vcmp.gt.f32.partialorder %v1049, 0.0
        %vm1393 = vcmp.gt.f32.partialorder %v1051, 0.0
        %vm1394 = vcmp.gt.f32.partialorder %v1054, 0.0
        %vm1395 = vcmp.gt.f32.partialorder %v1056, 0.0
        %vm1396 = vcmp.gt.f32.partialorder %v1059, 0.0
        %vm1397 = vcmp.gt.f32.partialorder %v1061, 0.0
        %vm1398 = vcmp.gt.f32.partialorder %v1064, 0.0
        %vm1399 = vcmp.gt.f32.partialorder %v1066, 0.0
        %vm1400 = vcmp.gt.f32.partialorder %v1069, 0.0
        %vm1401 = vcmp.gt.f32.partialorder %v1071, 0.0
        %vm1402 = vcmp.gt.f32.partialorder %v1074, 0.0
        %vm1403 = vcmp.gt.f32.partialorder %v1076, 0.0
        %vm1404 = vcmp.gt.f32.partialorder %v1079, 0.0
        %vm1405 = vcmp.gt.f32.partialorder %v1081, 0.0
        %vm1406 = vcmp.gt.f32.partialorder %v1084, 0.0
        %vm1407 = vcmp.gt.f32.partialorder %v1086, 0.0
        %v1408 = vsel %vm1344, %v929, %v1280
        %v1409 = vsel %vm1345, %v931, %v1281
        %v1410 = vsel %vm1346, %v934, %v1282
        %v1411 = vsel %vm1347, %v936, %v1283
        %v1412 = vsel %vm1348, %v939, %v1284
        %v1413 = vsel %vm1349, %v941, %v1285
        %v1414 = vsel %vm1350, %v944, %v1286
        %v1415 = vsel %vm1351, %v946, %v1287
        %v1416 = vsel %vm1352, %v949, %v1288
        %v1417 = vsel %vm1353, %v951, %v1289
        %v1418 = vsel %vm1354, %v954, %v1290
        %v1419 = vsel %vm1355, %v956, %v1291
        %v1420 = vsel %vm1356, %v959, %v1292
        %v1421 = vsel %vm1357, %v961, %v1293
        %v1422 = vsel %vm1358, %v964, %v1294
        %v1423 = vsel %vm1359, %v966, %v1295
        %v1424 = vsel %vm1360, %v969, %v1296
        %v1425 = vsel %vm1361, %v971, %v1297
        %v1426 = vsel %vm1362, %v974, %v1298
        %v1427 = vsel %vm1363, %v976, %v1299
        %v1428 = vsel %vm1364, %v979, %v1300
        %v1429 = vsel %vm1365, %v981, %v1301
        %v1430 = vsel %vm1366, %v984, %v1302
        %v1431 = vsel %vm1367, %v986, %v1303
        %v1432 = vsel %vm1368, %v989, %v1304
        %v1433 = vsel %vm1369, %v991, %v1305
        %v1434 = vsel %vm1370, %v994, %v1306
        %v1435 = vsel %vm1371, %v996, %v1307
        %v1436 = vsel %vm1372, %v999, %v1308
        %v1437 = vsel %vm1373, %v1001, %v1309
        %v1438 = vsel %vm1374, %v1004, %v1310
        %v1439 = vsel %vm1375, %v1006, %v1311
        %v1440 = vsel %vm1376, %v1009, %v1312
        %v1441 = vsel %vm1377, %v1011, %v1313
        %v1442 = vsel %vm1378, %v1014, %v1314
        %v1443 = vsel %vm1379, %v1016, %v1315
        %v1444 = vsel %vm1380, %v1019, %v1316
        %v1445 = vsel %vm1381, %v1021, %v1317
        %v1446 = vsel %vm1382, %v1024, %v1318
        %v1447 = vsel %vm1383, %v1026, %v1319
        %v1448 = vsel %vm1384, %v1029, %v1320
        %v1449 = vsel %vm1385, %v1031, %v1321
        %v1450 = vsel %vm1386, %v1034, %v1322
        %v1451 = vsel %vm1387, %v1036, %v1323
        %v1452 = vsel %vm1388, %v1039, %v1324
        %v1453 = vsel %vm1389, %v1041, %v1325
        %v1454 = vsel %vm1390, %v1044, %v1326
        %v1455 = vsel %vm1391, %v1046, %v1327
        %v1456 = vsel %vm1392, %v1049, %v1328
        %v1457 = vsel %vm1393, %v1051, %v1329
        %v1458 = vsel %vm1394, %v1054, %v1330
        %v1459 = vsel %vm1395, %v1056, %v1331
        %v1460 = vsel %vm1396, %v1059, %v1332
        %v1461 = vsel %vm1397, %v1061, %v1333
        %v1462 = vsel %vm1398, %v1064, %v1334
        %v1463 = vsel %vm1399, %v1066, %v1335
        %v1464 = vsel %vm1400, %v1069, %v1336
        %v1465 = vsel %vm1401, %v1071, %v1337
        %v1466 = vsel %vm1402, %v1074, %v1338
        %v1467 = vsel %vm1403, %v1076, %v1339
        %v1468 = vsel %vm1404, %v1079, %v1340
        %v1469 = vsel %vm1405, %v1081, %v1341
        %v1470 = vsel %vm1406, %v1084, %v1342
        %v1471 = vsel %vm1407, %v1086, %v1343
        %v1472 = vpack.c.bf16 %v1408, %v1408
        %v1473 = vpack.c.bf16 %v1409, %v1409
        %v1474 = vpack.c.bf16 %v1410, %v1410
        %v1475 = vpack.c.bf16 %v1411, %v1411
        %v1476 = vpack.c.bf16 %v1412, %v1412
        %v1477 = vpack.c.bf16 %v1413, %v1413
        %v1478 = vpack.c.bf16 %v1414, %v1414
        %v1479 = vpack.c.bf16 %v1415, %v1415
        %v1480 = vpack.c.bf16 %v1416, %v1416
        %v1481 = vpack.c.bf16 %v1417, %v1417
        %v1482 = vpack.c.bf16 %v1418, %v1418
        %v1483 = vpack.c.bf16 %v1419, %v1419
        %v1484 = vpack.c.bf16 %v1420, %v1420
        %v1485 = vpack.c.bf16 %v1421, %v1421
        %v1486 = vpack.c.bf16 %v1422, %v1422
        %v1487 = vpack.c.bf16 %v1423, %v1423
        %v1488 = vpack.c.bf16 %v1424, %v1424
        %v1489 = vpack.c.bf16 %v1425, %v1425
        %v1490 = vpack.c.bf16 %v1426, %v1426
        %v1491 = vpack.c.bf16 %v1427, %v1427
        %v1492 = vpack.c.bf16 %v1428, %v1428
        %v1493 = vpack.c.bf16 %v1429, %v1429
        %v1494 = vpack.c.bf16 %v1430, %v1430
        %v1495 = vpack.c.bf16 %v1431, %v1431
        %v1496 = vpack.c.bf16 %v1432, %v1432
        %v1497 = vpack.c.bf16 %v1433, %v1433
        %v1498 = vpack.c.bf16 %v1434, %v1434
        %v1499 = vpack.c.bf16 %v1435, %v1435
        %v1500 = vpack.c.bf16 %v1436, %v1436
        %v1501 = vpack.c.bf16 %v1437, %v1437
        %v1502 = vpack.c.bf16 %v1438, %v1438
        %v1503 = vpack.c.bf16 %v1439, %v1439
        %v1504 = vpack.c.bf16 %v1440, %v1440
        %v1505 = vpack.c.bf16 %v1441, %v1441
        %v1506 = vpack.c.bf16 %v1442, %v1442
        %v1507 = vpack.c.bf16 %v1443, %v1443
        %v1508 = vpack.c.bf16 %v1444, %v1444
        %v1509 = vpack.c.bf16 %v1445, %v1445
        %v1510 = vpack.c.bf16 %v1446, %v1446
        %v1511 = vpack.c.bf16 %v1447, %v1447
        %v1512 = vpack.c.bf16 %v1448, %v1448
        %v1513 = vpack.c.bf16 %v1449, %v1449
        %v1514 = vpack.c.bf16 %v1450, %v1450
        %v1515 = vpack.c.bf16 %v1451, %v1451
        %v1516 = vpack.c.bf16 %v1452, %v1452
        %v1517 = vpack.c.bf16 %v1453, %v1453
        %v1518 = vpack.c.bf16 %v1454, %v1454
        %v1519 = vpack.c.bf16 %v1455, %v1455
        %v1520 = vpack.c.bf16 %v1456, %v1456
        %v1521 = vpack.c.bf16 %v1457, %v1457
        %v1522 = vpack.c.bf16 %v1458, %v1458
        %v1523 = vpack.c.bf16 %v1459, %v1459
        %v1524 = vpack.c.bf16 %v1460, %v1460
        %v1525 = vpack.c.bf16 %v1461, %v1461
        %v1526 = vpack.c.bf16 %v1462, %v1462
        %v1527 = vpack.c.bf16 %v1463, %v1463
        %v1528 = vpack.c.bf16 %v1464, %v1464
        %v1529 = vpack.c.bf16 %v1465, %v1465
        %v1530 = vpack.c.bf16 %v1466, %v1466
        %v1531 = vpack.c.bf16 %v1467, %v1467
        %v1532 = vpack.c.bf16 %v1468, %v1468
        %v1533 = vpack.c.bf16 %v1469, %v1469
        %v1534 = vpack.c.bf16 %v1470, %v1470
        %v1535 = vpack.c.bf16 %v1471, %v1471
        %vm1536 = vcmask 257024
        %1537 = vst.msk [vmem:[%s177] sm:$0xf] %vm1536, %v1472
        %1538 = vst.msk [vmem:[%s177 + $0x4] sm:$0xf] %vm1536, %v1473
        %1539 = vst.msk [vmem:[%s177 + $0x8] sm:$0xf] %vm1536, %v1474
        %1540 = vst.msk [vmem:[%s177 + $0xc] sm:$0xf] %vm1536, %v1475
        %1541 = vst.msk [vmem:[%s177 + $0x10] sm:$0xf] %vm1536, %v1476
        %1542 = vst.msk [vmem:[%s177 + $0x14] sm:$0xf] %vm1536, %v1477
        %1543 = vst.msk [vmem:[%s177 + $0x18] sm:$0xf] %vm1536, %v1478
        %1544 = vst.msk [vmem:[%s177 + $0x1c] sm:$0xf] %vm1536, %v1479
        %1545 = vst.msk [vmem:[%s177 + $0x20] sm:$0xf] %vm1536, %v1480
        %1546 = vst.msk [vmem:[%s177 + $0x24] sm:$0xf] %vm1536, %v1481
        %1547 = vst.msk [vmem:[%s177 + $0x28] sm:$0xf] %vm1536, %v1482
        %1548 = vst.msk [vmem:[%s177 + $0x2c] sm:$0xf] %vm1536, %v1483
        %1549 = vst.msk [vmem:[%s177 + $0x30] sm:$0xf] %vm1536, %v1484
        %1550 = vst.msk [vmem:[%s177 + $0x34] sm:$0xf] %vm1536, %v1485
        %1551 = vst.msk [vmem:[%s177 + $0x38] sm:$0xf] %vm1536, %v1486
        %1552 = vst.msk [vmem:[%s177 + $0x3c] sm:$0xf] %vm1536, %v1487
        %1553 = vst.msk [vmem:[%s177 + $0x40] sm:$0xf] %vm1536, %v1488
        %1554 = vst.msk [vmem:[%s177 + $0x44] sm:$0xf] %vm1536, %v1489
        %1555 = vst.msk [vmem:[%s177 + $0x48] sm:$0xf] %vm1536, %v1490
        %1556 = vst.msk [vmem:[%s177 + $0x4c] sm:$0xf] %vm1536, %v1491
        %1557 = vst.msk [vmem:[%s177 + $0x50] sm:$0xf] %vm1536, %v1492
        %1558 = vst.msk [vmem:[%s177 + $0x54] sm:$0xf] %vm1536, %v1493
        %1559 = vst.msk [vmem:[%s177 + $0x58] sm:$0xf] %vm1536, %v1494
        %1560 = vst.msk [vmem:[%s177 + $0x5c] sm:$0xf] %vm1536, %v1495
        %1561 = vst.msk [vmem:[%s177 + $0x60] sm:$0xf] %vm1536, %v1496
        %1562 = vst.msk [vmem:[%s177 + $0x64] sm:$0xf] %vm1536, %v1497
        %1563 = vst.msk [vmem:[%s177 + $0x68] sm:$0xf] %vm1536, %v1498
        %1564 = vst.msk [vmem:[%s177 + $0x6c] sm:$0xf] %vm1536, %v1499
        %1565 = vst.msk [vmem:[%s177 + $0x70] sm:$0xf] %vm1536, %v1500
        %1566 = vst.msk [vmem:[%s177 + $0x74] sm:$0xf] %vm1536, %v1501
        %1567 = vst.msk [vmem:[%s177 + $0x78] sm:$0xf] %vm1536, %v1502
        %1568 = vst.msk [vmem:[%s177 + $0x7c] sm:$0xf] %vm1536, %v1503
        %1569 = vst.msk [vmem:[%s177 + $0x80] sm:$0xf] %vm1536, %v1504
        %1570 = vst.msk [vmem:[%s177 + $0x84] sm:$0xf] %vm1536, %v1505
        %1571 = vst.msk [vmem:[%s177 + $0x88] sm:$0xf] %vm1536, %v1506
        %1572 = vst.msk [vmem:[%s177 + $0x8c] sm:$0xf] %vm1536, %v1507
        %1573 = vst.msk [vmem:[%s177 + $0x90] sm:$0xf] %vm1536, %v1508
        %1574 = vst.msk [vmem:[%s177 + $0x94] sm:$0xf] %vm1536, %v1509
        %1575 = vst.msk [vmem:[%s177 + $0x98] sm:$0xf] %vm1536, %v1510
        %1576 = vst.msk [vmem:[%s177 + $0x9c] sm:$0xf] %vm1536, %v1511
        %1577 = vst.msk [vmem:[%s177 + $0xa0] sm:$0xf] %vm1536, %v1512
        %1578 = vst.msk [vmem:[%s177 + $0xa4] sm:$0xf] %vm1536, %v1513
        %1579 = vst.msk [vmem:[%s177 + $0xa8] sm:$0xf] %vm1536, %v1514
        %1580 = vst.msk [vmem:[%s177 + $0xac] sm:$0xf] %vm1536, %v1515
        %1581 = vst.msk [vmem:[%s177 + $0xb0] sm:$0xf] %vm1536, %v1516
        %1582 = vst.msk [vmem:[%s177 + $0xb4] sm:$0xf] %vm1536, %v1517
        %1583 = vst.msk [vmem:[%s177 + $0xb8] sm:$0xf] %vm1536, %v1518
        %1584 = vst.msk [vmem:[%s177 + $0xbc] sm:$0xf] %vm1536, %v1519
        %1585 = vst.msk [vmem:[%s177 + $0xc0] sm:$0xf] %vm1536, %v1520
        %1586 = vst.msk [vmem:[%s177 + $0xc4] sm:$0xf] %vm1536, %v1521
        %1587 = vst.msk [vmem:[%s177 + $0xc8] sm:$0xf] %vm1536, %v1522
        %1588 = vst.msk [vmem:[%s177 + $0xcc] sm:$0xf] %vm1536, %v1523
        %1589 = vst.msk [vmem:[%s177 + $0xd0] sm:$0xf] %vm1536, %v1524
        %1590 = vst.msk [vmem:[%s177 + $0xd4] sm:$0xf] %vm1536, %v1525
        %1591 = vst.msk [vmem:[%s177 + $0xd8] sm:$0xf] %vm1536, %v1526
        %1592 = vst.msk [vmem:[%s177 + $0xdc] sm:$0xf] %vm1536, %v1527
        %1593 = vst.msk [vmem:[%s177 + $0xe0] sm:$0xf] %vm1536, %v1528
        %1594 = vst.msk [vmem:[%s177 + $0xe4] sm:$0xf] %vm1536, %v1529
        %1595 = vst.msk [vmem:[%s177 + $0xe8] sm:$0xf] %vm1536, %v1530
        %1596 = vst.msk [vmem:[%s177 + $0xec] sm:$0xf] %vm1536, %v1531
        %1597 = vst.msk [vmem:[%s177 + $0xf0] sm:$0xf] %vm1536, %v1532
        %1598 = vst.msk [vmem:[%s177 + $0xf4] sm:$0xf] %vm1536, %v1533
        %1599 = vst.msk [vmem:[%s177 + $0xf8] sm:$0xf] %vm1536, %v1534
        %1600 = vst.msk [vmem:[%s177 + $0xfc] sm:$0xf] %vm1536, %v1535
        %s1601 = sand.u32 %s90, 1
        %s1602 = sand.u32 %s90, 1
        %s1603 = smul.addr %s1602, 256
        %s1604 = scalar_lea.vmem [#allocation2], %s1603
        // Predicated region
        $region33: #{_lambda_.5} parent=31 // pred_check
          %p1605 = pneg %p100
        $region34: #{_lambda_.5} parent=31 // pred_check_branch
          %1607 = sbr.rel (%p1605) target = $region36
        $region35: #{_lambda_.5} parent=31 // pred_region
          %s1608 = smul.u32 64, %s14
          %s1609 = ssub.s32 100, %s1608
          %p1610 = scmp.lt.s32.totalorder %s1609, 64
          %s1611 = scalar_select %p1610, %s1609, 64
          %s1612 = smul.u32 4, %s1611
          %p1613 = scmp.ne.s32.totalorder 0, %s1612
          %s1614 = smul.addr %s1608, 4
          %s1615 = scalar_lea.vmem %s3, %s1614
          // Predicated region
          $region37: #{_lambda_.5} parent=35 // pred_check
            %p1616 = pneg %p1613
          $region38: #{_lambda_.5} parent=35 // pred_check_branch
            %1618 = sbr.rel (%p1616) target = $region40
          $region39: #{_lambda_.5} parent=35 // pred_region
            // Predicated region
            $region41: #{_lambda_.5} parent=39 // pred_check
              _
            $region42: #{_lambda_.5} parent=39 // pred_check_branch
              %1620 = sbr.rel target = $region44
            $region43: #{_lambda_.5} parent=39 // pred_region
              // Predicated region
              $region63: #{_lambda_.5} parent=43 // pred_check
                _
              $region64: #{_lambda_.5} parent=43 // pred_check_branch
                %1732 = sbr.rel (0) target = $region66
              $region65: #{_lambda_.5} parent=43 // pred_region
                %s1734 = ssub.s32 16, 1
                %s1735 = sshrl.u32 %s1611, 5
                // While loop
                $region67: #{_lambda_.5} parent=65 // loop_pre_header
                  _
                $region68: #{_lambda_.5} parent=65 // loop_header
                  %s1737 = sphi 0, %s1739
                  %p1738 = scmp.ge.s32.totalorder %s1737, %s1735
                  %s1742 = sphi 0, %s1811
                  %s1743 = sphi %s1604, %s1814
                  %s1744 = sphi %s1615, %s1815
                $region69: #{_lambda_.5} parent=65 // loop_header_branch
                  %1741 = sbr.rel (%p1738) target = $region73
                $region70: #{_lambda_.5} parent=65 // loop_body
                  %v1745 = vld [vmem:[%s1743] sm:%s1734]
                  %1746 = vst [vmem:[%s1744] sm:%s1734] %v1745
                  %v1747 = vld [vmem:[%s1743 + $0x4] sm:%s1734]
                  %1748 = vst [vmem:[%s1744 + $0x4] sm:%s1734] %v1747
                  %v1749 = vld [vmem:[%s1743 + $0x8] sm:%s1734]
                  %1750 = vst [vmem:[%s1744 + $0x8] sm:%s1734] %v1749
                  %v1751 = vld [vmem:[%s1743 + $0xc] sm:%s1734]
                  %1752 = vst [vmem:[%s1744 + $0xc] sm:%s1734] %v1751
                  %v1753 = vld [vmem:[%s1743 + $0x10] sm:%s1734]
                  %1754 = vst [vmem:[%s1744 + $0x10] sm:%s1734] %v1753
                  %v1755 = vld [vmem:[%s1743 + $0x14] sm:%s1734]
                  %1756 = vst [vmem:[%s1744 + $0x14] sm:%s1734] %v1755
                  %v1757 = vld [vmem:[%s1743 + $0x18] sm:%s1734]
                  %1758 = vst [vmem:[%s1744 + $0x18] sm:%s1734] %v1757
                  %v1759 = vld [vmem:[%s1743 + $0x1c] sm:%s1734]
                  %1760 = vst [vmem:[%s1744 + $0x1c] sm:%s1734] %v1759
                  %v1761 = vld [vmem:[%s1743 + $0x20] sm:%s1734]
                  %1762 = vst [vmem:[%s1744 + $0x20] sm:%s1734] %v1761
                  %v1763 = vld [vmem:[%s1743 + $0x24] sm:%s1734]
                  %1764 = vst [vmem:[%s1744 + $0x24] sm:%s1734] %v1763
                  %v1765 = vld [vmem:[%s1743 + $0x28] sm:%s1734]
                  %1766 = vst [vmem:[%s1744 + $0x28] sm:%s1734] %v1765
                  %v1767 = vld [vmem:[%s1743 + $0x2c] sm:%s1734]
                  %1768 = vst [vmem:[%s1744 + $0x2c] sm:%s1734] %v1767
                  %v1769 = vld [vmem:[%s1743 + $0x30] sm:%s1734]
                  %1770 = vst [vmem:[%s1744 + $0x30] sm:%s1734] %v1769
                  %v1771 = vld [vmem:[%s1743 + $0x34] sm:%s1734]
                  %1772 = vst [vmem:[%s1744 + $0x34] sm:%s1734] %v1771
                  %v1773 = vld [vmem:[%s1743 + $0x38] sm:%s1734]
                  %1774 = vst [vmem:[%s1744 + $0x38] sm:%s1734] %v1773
                  %v1775 = vld [vmem:[%s1743 + $0x3c] sm:%s1734]
                  %1776 = vst [vmem:[%s1744 + $0x3c] sm:%s1734] %v1775
                  %v1777 = vld [vmem:[%s1743 + $0x40] sm:%s1734]
                  %1778 = vst [vmem:[%s1744 + $0x40] sm:%s1734] %v1777
                  %v1779 = vld [vmem:[%s1743 + $0x44] sm:%s1734]
                  %1780 = vst [vmem:[%s1744 + $0x44] sm:%s1734] %v1779
                  %v1781 = vld [vmem:[%s1743 + $0x48] sm:%s1734]
                  %1782 = vst [vmem:[%s1744 + $0x48] sm:%s1734] %v1781
                  %v1783 = vld [vmem:[%s1743 + $0x4c] sm:%s1734]
                  %1784 = vst [vmem:[%s1744 + $0x4c] sm:%s1734] %v1783
                  %v1785 = vld [vmem:[%s1743 + $0x50] sm:%s1734]
                  %1786 = vst [vmem:[%s1744 + $0x50] sm:%s1734] %v1785
                  %v1787 = vld [vmem:[%s1743 + $0x54] sm:%s1734]
                  %1788 = vst [vmem:[%s1744 + $0x54] sm:%s1734] %v1787
                  %v1789 = vld [vmem:[%s1743 + $0x58] sm:%s1734]
                  %1790 = vst [vmem:[%s1744 + $0x58] sm:%s1734] %v1789
                  %v1791 = vld [vmem:[%s1743 + $0x5c] sm:%s1734]
                  %1792 = vst [vmem:[%s1744 + $0x5c] sm:%s1734] %v1791
                  %v1793 = vld [vmem:[%s1743 + $0x60] sm:%s1734]
                  %1794 = vst [vmem:[%s1744 + $0x60] sm:%s1734] %v1793
                  %v1795 = vld [vmem:[%s1743 + $0x64] sm:%s1734]
                  %1796 = vst [vmem:[%s1744 + $0x64] sm:%s1734] %v1795
                  %v1797 = vld [vmem:[%s1743 + $0x68] sm:%s1734]
                  %1798 = vst [vmem:[%s1744 + $0x68] sm:%s1734] %v1797
                  %v1799 = vld [vmem:[%s1743 + $0x6c] sm:%s1734]
                  %1800 = vst [vmem:[%s1744 + $0x6c] sm:%s1734] %v1799
                  %v1801 = vld [vmem:[%s1743 + $0x70] sm:%s1734]
                  %1802 = vst [vmem:[%s1744 + $0x70] sm:%s1734] %v1801
                  %v1803 = vld [vmem:[%s1743 + $0x74] sm:%s1734]
                  %1804 = vst [vmem:[%s1744 + $0x74] sm:%s1734] %v1803
                  %v1805 = vld [vmem:[%s1743 + $0x78] sm:%s1734]
                  %1806 = vst [vmem:[%s1744 + $0x78] sm:%s1734] %v1805
                  %v1807 = vld [vmem:[%s1743 + $0x7c] sm:%s1734]
                  %1808 = vst [vmem:[%s1744 + $0x7c] sm:%s1734] %v1807
                  %s1809 = sadd.s32 1, %s1742
                  %p1810 = scmp.ge.s32.totalorder %s1809, %s1735
                  %s1811 = scalar_select %p1810, 0, %s1809
                  %s1812 = smul.u32 %s1811, 128
                  %s1813 = smul.u32 %s1811, 128
                  %s1814 = scalar_lea.vmem %s1604, %s1812 [#allocation2]
                  %s1815 = scalar_lea.vmem %s1615, %s1813
                $region71: #{_lambda_.5} parent=65 // loop_footer
                  %s1739 = sadd.s32 %s1737, 1
                $region72: #{_lambda_.5} parent=65 // loop_footer_branch
                  %1736 = sbr.rel target = $region68
                $region73: #{_lambda_.5} parent=65 // loop_exit
                  _
                %s1816 = sshrl.u32 %s1611, 5
                %s1817 = sand.u32 %s1611, 31
                %s1818 = smul.u32 %s1816, 32
                %s1819 = smul.u32 4, %s1818
                %s1820 = scalar_lea.vmem %s1604, %s1819 [#allocation2]
                %s1821 = smul.u32 4, %s1818
                %s1822 = scalar_lea.vmem %s1615, %s1821
                // While loop
                $region74: #{_lambda_.5} parent=65 // loop_pre_header
                  _
                $region75: #{_lambda_.5} parent=65 // loop_header
                  %s1824 = sphi 0, %s1826
                  %p1825 = scmp.ge.s32.totalorder %s1824, %s1817
                  %s1829 = sphi 0, %s1836
                  %s1830 = sphi %s1820, %s1839
                  %s1831 = sphi %s1822, %s1840
                $region76: #{_lambda_.5} parent=65 // loop_header_branch
                  %1828 = sbr.rel (%p1825) target = $region80
                $region77: #{_lambda_.5} parent=65 // loop_body
                  %v1832 = vld [vmem:[%s1830] sm:%s1734]
                  %1833 = vst [vmem:[%s1831] sm:%s1734] %v1832
                  %s1834 = sadd.s32 1, %s1829
                  %p1835 = scmp.ge.s32.totalorder %s1834, %s1817
                  %s1836 = scalar_select %p1835, 0, %s1834
                  %s1837 = smul.u32 %s1836, 4
                  %s1838 = smul.u32 %s1836, 4
                  %s1839 = scalar_lea.vmem %s1820, %s1837 [#allocation2]
                  %s1840 = scalar_lea.vmem %s1822, %s1838
                $region78: #{_lambda_.5} parent=65 // loop_footer
                  %s1826 = sadd.s32 %s1824, 1
                $region79: #{_lambda_.5} parent=65 // loop_footer_branch
                  %1823 = sbr.rel target = $region75
                $region80: #{_lambda_.5} parent=65 // loop_exit
                  _
              $region66: #{_lambda_.5} parent=43 // pred_fallthru
                _
            $region44: #{_lambda_.5} parent=39 // pred_fallthru
              _
            // Predicated region
            $region45: #{_lambda_.5} parent=39 // pred_check
              _
            $region46: #{_lambda_.5} parent=39 // pred_check_branch
              %1622 = sbr.rel (0) target = $region48
            $region47: #{_lambda_.5} parent=39 // pred_region
              %s1624 = ssub.s32 16, 1
              %s1625 = sshrl.u32 %s1611, 5
              // While loop
              $region49: #{_lambda_.5} parent=47 // loop_pre_header
                _
              $region50: #{_lambda_.5} parent=47 // loop_header
                %s1627 = sphi 0, %s1629
                %p1628 = scmp.ge.s32.totalorder %s1627, %s1625
                %s1632 = sphi 0, %s1701
                %s1633 = sphi %s1604, %s1704
                %s1634 = sphi %s1615, %s1705
              $region51: #{_lambda_.5} parent=47 // loop_header_branch
                %1631 = sbr.rel (%p1628) target = $region55
              $region52: #{_lambda_.5} parent=47 // loop_body
                %v1635 = vld [vmem:[%s1633] sm:%s1624]
                %1636 = vst [vmem:[%s1634] sm:%s1624] %v1635
                %v1637 = vld [vmem:[%s1633 + $0x4] sm:%s1624]
                %1638 = vst [vmem:[%s1634 + $0x4] sm:%s1624] %v1637
                %v1639 = vld [vmem:[%s1633 + $0x8] sm:%s1624]
                %1640 = vst [vmem:[%s1634 + $0x8] sm:%s1624] %v1639
                %v1641 = vld [vmem:[%s1633 + $0xc] sm:%s1624]
                %1642 = vst [vmem:[%s1634 + $0xc] sm:%s1624] %v1641
                %v1643 = vld [vmem:[%s1633 + $0x10] sm:%s1624]
                %1644 = vst [vmem:[%s1634 + $0x10] sm:%s1624] %v1643
                %v1645 = vld [vmem:[%s1633 + $0x14] sm:%s1624]
                %1646 = vst [vmem:[%s1634 + $0x14] sm:%s1624] %v1645
                %v1647 = vld [vmem:[%s1633 + $0x18] sm:%s1624]
                %1648 = vst [vmem:[%s1634 + $0x18] sm:%s1624] %v1647
                %v1649 = vld [vmem:[%s1633 + $0x1c] sm:%s1624]
                %1650 = vst [vmem:[%s1634 + $0x1c] sm:%s1624] %v1649
                %v1651 = vld [vmem:[%s1633 + $0x20] sm:%s1624]
                %1652 = vst [vmem:[%s1634 + $0x20] sm:%s1624] %v1651
                %v1653 = vld [vmem:[%s1633 + $0x24] sm:%s1624]
                %1654 = vst [vmem:[%s1634 + $0x24] sm:%s1624] %v1653
                %v1655 = vld [vmem:[%s1633 + $0x28] sm:%s1624]
                %1656 = vst [vmem:[%s1634 + $0x28] sm:%s1624] %v1655
                %v1657 = vld [vmem:[%s1633 + $0x2c] sm:%s1624]
                %1658 = vst [vmem:[%s1634 + $0x2c] sm:%s1624] %v1657
                %v1659 = vld [vmem:[%s1633 + $0x30] sm:%s1624]
                %1660 = vst [vmem:[%s1634 + $0x30] sm:%s1624] %v1659
                %v1661 = vld [vmem:[%s1633 + $0x34] sm:%s1624]
                %1662 = vst [vmem:[%s1634 + $0x34] sm:%s1624] %v1661
                %v1663 = vld [vmem:[%s1633 + $0x38] sm:%s1624]
                %1664 = vst [vmem:[%s1634 + $0x38] sm:%s1624] %v1663
                %v1665 = vld [vmem:[%s1633 + $0x3c] sm:%s1624]
                %1666 = vst [vmem:[%s1634 + $0x3c] sm:%s1624] %v1665
                %v1667 = vld [vmem:[%s1633 + $0x40] sm:%s1624]
                %1668 = vst [vmem:[%s1634 + $0x40] sm:%s1624] %v1667
                %v1669 = vld [vmem:[%s1633 + $0x44] sm:%s1624]
                %1670 = vst [vmem:[%s1634 + $0x44] sm:%s1624] %v1669
                %v1671 = vld [vmem:[%s1633 + $0x48] sm:%s1624]
                %1672 = vst [vmem:[%s1634 + $0x48] sm:%s1624] %v1671
                %v1673 = vld [vmem:[%s1633 + $0x4c] sm:%s1624]
                %1674 = vst [vmem:[%s1634 + $0x4c] sm:%s1624] %v1673
                %v1675 = vld [vmem:[%s1633 + $0x50] sm:%s1624]
                %1676 = vst [vmem:[%s1634 + $0x50] sm:%s1624] %v1675
                %v1677 = vld [vmem:[%s1633 + $0x54] sm:%s1624]
                %1678 = vst [vmem:[%s1634 + $0x54] sm:%s1624] %v1677
                %v1679 = vld [vmem:[%s1633 + $0x58] sm:%s1624]
                %1680 = vst [vmem:[%s1634 + $0x58] sm:%s1624] %v1679
                %v1681 = vld [vmem:[%s1633 + $0x5c] sm:%s1624]
                %1682 = vst [vmem:[%s1634 + $0x5c] sm:%s1624] %v1681
                %v1683 = vld [vmem:[%s1633 + $0x60] sm:%s1624]
                %1684 = vst [vmem:[%s1634 + $0x60] sm:%s1624] %v1683
                %v1685 = vld [vmem:[%s1633 + $0x64] sm:%s1624]
                %1686 = vst [vmem:[%s1634 + $0x64] sm:%s1624] %v1685
                %v1687 = vld [vmem:[%s1633 + $0x68] sm:%s1624]
                %1688 = vst [vmem:[%s1634 + $0x68] sm:%s1624] %v1687
                %v1689 = vld [vmem:[%s1633 + $0x6c] sm:%s1624]
                %1690 = vst [vmem:[%s1634 + $0x6c] sm:%s1624] %v1689
                %v1691 = vld [vmem:[%s1633 + $0x70] sm:%s1624]
                %1692 = vst [vmem:[%s1634 + $0x70] sm:%s1624] %v1691
                %v1693 = vld [vmem:[%s1633 + $0x74] sm:%s1624]
                %1694 = vst [vmem:[%s1634 + $0x74] sm:%s1624] %v1693
                %v1695 = vld [vmem:[%s1633 + $0x78] sm:%s1624]
                %1696 = vst [vmem:[%s1634 + $0x78] sm:%s1624] %v1695
                %v1697 = vld [vmem:[%s1633 + $0x7c] sm:%s1624]
                %1698 = vst [vmem:[%s1634 + $0x7c] sm:%s1624] %v1697
                %s1699 = sadd.s32 1, %s1632
                %p1700 = scmp.ge.s32.totalorder %s1699, %s1625
                %s1701 = scalar_select %p1700, 0, %s1699
                %s1702 = smul.u32 %s1701, 128
                %s1703 = smul.u32 %s1701, 128
                %s1704 = scalar_lea.vmem %s1604, %s1702 [#allocation2]
                %s1705 = scalar_lea.vmem %s1615, %s1703
              $region53: #{_lambda_.5} parent=47 // loop_footer
                %s1629 = sadd.s32 %s1627, 1
              $region54: #{_lambda_.5} parent=47 // loop_footer_branch
                %1626 = sbr.rel target = $region50
              $region55: #{_lambda_.5} parent=47 // loop_exit
                _
              %s1706 = sshrl.u32 %s1611, 5
              %s1707 = sand.u32 %s1611, 31
              %s1708 = smul.u32 %s1706, 32
              %s1709 = smul.u32 4, %s1708
              %s1710 = scalar_lea.vmem %s1604, %s1709 [#allocation2]
              %s1711 = smul.u32 4, %s1708
              %s1712 = scalar_lea.vmem %s1615, %s1711
              // While loop
              $region56: #{_lambda_.5} parent=47 // loop_pre_header
                _
              $region57: #{_lambda_.5} parent=47 // loop_header
                %s1714 = sphi 0, %s1716
                %p1715 = scmp.ge.s32.totalorder %s1714, %s1707
                %s1719 = sphi 0, %s1726
                %s1720 = sphi %s1710, %s1729
                %s1721 = sphi %s1712, %s1730
              $region58: #{_lambda_.5} parent=47 // loop_header_branch
                %1718 = sbr.rel (%p1715) target = $region62
              $region59: #{_lambda_.5} parent=47 // loop_body
                %v1722 = vld [vmem:[%s1720] sm:%s1624]
                %1723 = vst [vmem:[%s1721] sm:%s1624] %v1722
                %s1724 = sadd.s32 1, %s1719
                %p1725 = scmp.ge.s32.totalorder %s1724, %s1707
                %s1726 = scalar_select %p1725, 0, %s1724
                %s1727 = smul.u32 %s1726, 4
                %s1728 = smul.u32 %s1726, 4
                %s1729 = scalar_lea.vmem %s1710, %s1727 [#allocation2]
                %s1730 = scalar_lea.vmem %s1712, %s1728
              $region60: #{_lambda_.5} parent=47 // loop_footer
                %s1716 = sadd.s32 %s1714, 1
              $region61: #{_lambda_.5} parent=47 // loop_footer_branch
                %1713 = sbr.rel target = $region57
              $region62: #{_lambda_.5} parent=47 // loop_exit
                _
            $region48: #{_lambda_.5} parent=39 // pred_fallthru
              _
          $region40: #{_lambda_.5} parent=35 // pred_fallthru
            _
          %1841 = vnop
        $region36: #{_lambda_.5} parent=31 // pred_fallthru
          _
      $region32: #{_lambda_.5} parent=5 // pred_fallthru
        _
      %p1842 = scmp.le.s32.totalorder 2, %s9
      // Predicated region
      $region81: #{_lambda_.5} parent=5 // pred_check
        %p1843 = pneg %p1842
      $region82: #{_lambda_.5} parent=5 // pred_check_branch
        %1845 = sbr.rel (%p1843) target = $region84
      $region83: #{_lambda_.5} parent=5 // pred_region
        %s1846 = ssub.s32 %s9, 2
        // Predicated region
        $region85: #{_lambda_.5} parent=83 // pred_check
          %p1847 = pneg %p106
        $region86: #{_lambda_.5} parent=83 // pred_check_branch
          %1849 = sbr.rel (%p1847) target = $region88
        $region87: #{_lambda_.5} parent=83 // pred_region
          %s1850 = sand.u32 %s91, 1
          %s1851 = sand.u32 %s91, 1
          %s1852 = smul.addr %s1851, 256
          %s1853 = scalar_lea.vmem [#allocation2], %s1852
        $region88: #{_lambda_.5} parent=83 // pred_fallthru
          _
      $region84: #{_lambda_.5} parent=5 // pred_fallthru
        _
    $region6: #{_lambda_.5} parent=1 // loop_footer
      %s13 = sadd.s32 1, %s9
    $region7: #{_lambda_.5} parent=1 // loop_footer_branch
      %8 = sbr.rel target = $region3
    $region8: #{_lambda_.5} parent=1 // loop_exit
      _

// kernel: _lambda_.6
$region0: #{_lambda_.6}
  #allocation0 [shape = 'u32[]', space=smem, size = 0x4, offset = 0x4, fixed_abs, tag = 'smem constant byte address 0x4 - core index']
  #allocation1 [shape = 'u32[72,128]{1,0:T(1,128)}', space=vmem, size = 0x9000, scoped, tag = 'internal scratch']
  %s0 = inlined_call_operand.vmem [shape: bf16[162,512], index: 0, kind: input, shape index: {}]
  %s1 = inlined_call_operand.vmem [shape: bf16[512,64], index: 1, kind: input, shape index: {}]
  %s2 = inlined_call_operand.vmem [shape: f32[1,64], index: 2, kind: input, shape index: {}]
  %s3 = inlined_call_operand.vmem [shape: bf16[162,64], index: 3, kind: output, shape index: {}]
  %s4 = sld [smem:[#allocation0]]
  $region22: #{_lambda_.6} parent=0
    _
  %s6 = ssub.s32 1, %s4
  %s7 = scalar_select 0, %s6, %s4
  // Predicated region
  $region2: #{_lambda_.6} parent=0 // pred_check
    _
  $region3: #{_lambda_.6} parent=0 // pred_check_branch
    %9 = sbr.rel (0) target = $region5
  $region4: #{_lambda_.6} parent=0 // pred_region
    _
  $region5: #{_lambda_.6} parent=0 // pred_fallthru
    _
  // Predicated region
  $region6: #{_lambda_.6} parent=0 // pred_check
    _
  $region7: #{_lambda_.6} parent=0 // pred_check_branch
    %11 = sbr.rel (0) target = $region9
  $region8: #{_lambda_.6} parent=0 // pred_region
    _
  $region9: #{_lambda_.6} parent=0 // pred_fallthru
    _
  // Predicated region
  $region10: #{_lambda_.6} parent=0 // pred_check
    _
  $region11: #{_lambda_.6} parent=0 // pred_check_branch
    %13 = sbr.rel (0) target = $region13
  $region12: #{_lambda_.6} parent=0 // pred_region
    _
  $region13: #{_lambda_.6} parent=0 // pred_fallthru
    _
  %v14 = vld [vmem:[%s0] sm:$0xff]
  %v15 = vld [vmem:[%s0 + $0x8] sm:$0xff]
  %v16 = vld [vmem:[%s0 + $0x10] sm:$0xff]
  %v17 = vld [vmem:[%s0 + $0x18] sm:$0xff]
  %v18 = vld [vmem:[%s0 + $0x20] sm:$0xff]
  %v19 = vld [vmem:[%s0 + $0x28] sm:$0xff]
  %v20 = vld [vmem:[%s0 + $0x30] sm:$0xff]
  %v21 = vld [vmem:[%s0 + $0x38] sm:$0xff]
  %v22 = vld [vmem:[%s0 + $0x40] sm:$0xff]
  %v23 = vld [vmem:[%s0 + $0x48] sm:$0xff]
  %v24 = vld [vmem:[%s0 + $0x50] sm:$0xff]
  %v25 = vld [vmem:[%s0 + $0x58] sm:$0xff]
  %v26 = vld [vmem:[%s0 + $0x60] sm:$0xff]
  %v27 = vld [vmem:[%s0 + $0x68] sm:$0xff]
  %v28 = vld [vmem:[%s0 + $0x70] sm:$0xff]
  %v29 = vld [vmem:[%s0 + $0x78] sm:$0xff]
  %v30 = vld [vmem:[%s0 + $0x80] sm:$0xff]
  %v31 = vld [vmem:[%s0 + $0x88] sm:$0xff]
  %v32 = vld [vmem:[%s0 + $0x90] sm:$0xff]
  %v33 = vld [vmem:[%s0 + $0x98] sm:$0xff]
  %v34 = vld [vmem:[%s0 + $0xa0] sm:$0xff]
  %v35 = vld [vmem:[%s0 + $0xa8] sm:$0xff]
  %v36 = vld [vmem:[%s0 + $0xb0] sm:$0xff]
  %v37 = vld [vmem:[%s0 + $0xb8] sm:$0xff]
  %v38 = vld [vmem:[%s0 + $0xc0] sm:$0xff]
  %v39 = vld [vmem:[%s0 + $0xc8] sm:$0xff]
  %v40 = vld [vmem:[%s0 + $0xd0] sm:$0xff]
  %v41 = vld [vmem:[%s0 + $0xd8] sm:$0xff]
  %v42 = vld [vmem:[%s0 + $0xe0] sm:$0xff]
  %v43 = vld [vmem:[%s0 + $0xe8] sm:$0xff]
  %v44 = vld [vmem:[%s0 + $0xf0] sm:$0xff]
  %v45 = vld [vmem:[%s0 + $0xf8] sm:$0xff]
  %v46 = vld [vmem:[%s0 + $0x100] sm:$0xff]
  %v47 = vld [vmem:[%s0 + $0x108] sm:$0xff]
  %v48 = vld [vmem:[%s0 + $0x110] sm:$0xff]
  %v49 = vld [vmem:[%s0 + $0x118] sm:$0xff]
  %v50 = vld [vmem:[%s0 + $0x120] sm:$0xff]
  %v51 = vld [vmem:[%s0 + $0x128] sm:$0xff]
  %v52 = vld [vmem:[%s0 + $0x130] sm:$0xff]
  %v53 = vld [vmem:[%s0 + $0x138] sm:$0xff]
  %v54 = vld [vmem:[%s0 + $0x140] sm:$0x11]
  %v55 = vld [vmem:[%s0 + $0x148] sm:$0x11]
  %v56 = vld [vmem:[%s1] sm:$0xf]
  %v57 = vld [vmem:[%s1 + $0x4] sm:$0xf]
  %v58 = vld [vmem:[%s1 + $0x8] sm:$0xf]
  %v59 = vld [vmem:[%s1 + $0xc] sm:$0xf]
  %v60 = vld [vmem:[%s1 + $0x10] sm:$0xf]
  %v61 = vld [vmem:[%s1 + $0x14] sm:$0xf]
  %v62 = vld [vmem:[%s1 + $0x18] sm:$0xf]
  %v63 = vld [vmem:[%s1 + $0x1c] sm:$0xf]
  %v64 = vld [vmem:[%s1 + $0x20] sm:$0xf]
  %v65 = vld [vmem:[%s1 + $0x24] sm:$0xf]
  %v66 = vld [vmem:[%s1 + $0x28] sm:$0xf]
  %v67 = vld [vmem:[%s1 + $0x2c] sm:$0xf]
  %v68 = vld [vmem:[%s1 + $0x30] sm:$0xf]
  %v69 = vld [vmem:[%s1 + $0x34] sm:$0xf]
  %v70 = vld [vmem:[%s1 + $0x38] sm:$0xf]
  %v71 = vld [vmem:[%s1 + $0x3c] sm:$0xf]
  %v72 = vld [vmem:[%s1 + $0x40] sm:$0xf]
  %v73 = vld [vmem:[%s1 + $0x44] sm:$0xf]
  %v74 = vld [vmem:[%s1 + $0x48] sm:$0xf]
  %v75 = vld [vmem:[%s1 + $0x4c] sm:$0xf]
  %v76 = vld [vmem:[%s1 + $0x50] sm:$0xf]
  %v77 = vld [vmem:[%s1 + $0x54] sm:$0xf]
  %v78 = vld [vmem:[%s1 + $0x58] sm:$0xf]
  %v79 = vld [vmem:[%s1 + $0x5c] sm:$0xf]
  %v80 = vld [vmem:[%s1 + $0x60] sm:$0xf]
  %v81 = vld [vmem:[%s1 + $0x64] sm:$0xf]
  %v82 = vld [vmem:[%s1 + $0x68] sm:$0xf]
  %v83 = vld [vmem:[%s1 + $0x6c] sm:$0xf]
  %v84 = vld [vmem:[%s1 + $0x70] sm:$0xf]
  %v85 = vld [vmem:[%s1 + $0x74] sm:$0xf]
  %v86 = vld [vmem:[%s1 + $0x78] sm:$0xf]
  %v87 = vld [vmem:[%s1 + $0x7c] sm:$0xf]
  %v88 = vld [vmem:[%s1 + $0x80] sm:$0xf]
  %v89 = vld [vmem:[%s1 + $0x84] sm:$0xf]
  %v90 = vld [vmem:[%s1 + $0x88] sm:$0xf]
  %v91 = vld [vmem:[%s1 + $0x8c] sm:$0xf]
  %v92 = vld [vmem:[%s1 + $0x90] sm:$0xf]
  %v93 = vld [vmem:[%s1 + $0x94] sm:$0xf]
  %v94 = vld [vmem:[%s1 + $0x98] sm:$0xf]
  %v95 = vld [vmem:[%s1 + $0x9c] sm:$0xf]
  %v96 = vld [vmem:[%s1 + $0xa0] sm:$0xf]
  %v97 = vld [vmem:[%s1 + $0xa4] sm:$0xf]
  %v98 = vld [vmem:[%s1 + $0xa8] sm:$0xf]
  %v99 = vld [vmem:[%s1 + $0xac] sm:$0xf]
  %v100 = vld [vmem:[%s1 + $0xb0] sm:$0xf]
  %v101 = vld [vmem:[%s1 + $0xb4] sm:$0xf]
  %v102 = vld [vmem:[%s1 + $0xb8] sm:$0xf]
  %v103 = vld [vmem:[%s1 + $0xbc] sm:$0xf]
  %v104 = vld [vmem:[%s1 + $0xc0] sm:$0xf]
  %v105 = vld [vmem:[%s1 + $0xc4] sm:$0xf]
  %v106 = vld [vmem:[%s1 + $0xc8] sm:$0xf]
  %v107 = vld [vmem:[%s1 + $0xcc] sm:$0xf]
  %v108 = vld [vmem:[%s1 + $0xd0] sm:$0xf]
  %v109 = vld [vmem:[%s1 + $0xd4] sm:$0xf]
  %v110 = vld [vmem:[%s1 + $0xd8] sm:$0xf]
  %v111 = vld [vmem:[%s1 + $0xdc] sm:$0xf]
  %v112 = vld [vmem:[%s1 + $0xe0] sm:$0xf]
  %v113 = vld [vmem:[%s1 + $0xe4] sm:$0xf]
  %v114 = vld [vmem:[%s1 + $0xe8] sm:$0xf]
  %v115 = vld [vmem:[%s1 + $0xec] sm:$0xf]
  %v116 = vld [vmem:[%s1 + $0xf0] sm:$0xf]
  %v117 = vld [vmem:[%s1 + $0xf4] sm:$0xf]
  %v118 = vld [vmem:[%s1 + $0xf8] sm:$0xf]
  %v119 = vld [vmem:[%s1 + $0xfc] sm:$0xf]
  %v120 = vld [vmem:[%s2] sm:$0x1]
  %v122 = vperm.slane %v120, 0
  %v166 = vunpack.c.l.b16 %v14
  %v167 = vunpack.c.h.b16 %v14
  %v168 = vunpack.c.l.b16 %v15
  %v169 = vunpack.c.h.b16 %v15
  %v170 = vunpack.c.l.b16 %v16
  %v171 = vunpack.c.h.b16 %v16
  %v172 = vunpack.c.l.b16 %v17
  %v173 = vunpack.c.h.b16 %v17
  %v174 = vunpack.c.l.b16 %v18
  %v175 = vunpack.c.h.b16 %v18
  %v176 = vunpack.c.l.b16 %v19
  %v177 = vunpack.c.h.b16 %v19
  %v178 = vunpack.c.l.b16 %v20
  %v179 = vunpack.c.h.b16 %v20
  %v180 = vunpack.c.l.b16 %v21
  %v181 = vunpack.c.h.b16 %v21
  %v182 = vunpack.c.l.b16 %v22
  %v183 = vunpack.c.h.b16 %v22
  %v184 = vunpack.c.l.b16 %v23
  %v185 = vunpack.c.h.b16 %v23
  %v186 = vunpack.c.l.b16 %v24
  %v187 = vunpack.c.h.b16 %v24
  %v188 = vunpack.c.l.b16 %v25
  %v189 = vunpack.c.h.b16 %v25
  %v190 = vunpack.c.l.b16 %v26
  %v191 = vunpack.c.h.b16 %v26
  %v192 = vunpack.c.l.b16 %v27
  %v193 = vunpack.c.h.b16 %v27
  %v194 = vunpack.c.l.b16 %v28
  %v195 = vunpack.c.h.b16 %v28
  %v196 = vunpack.c.l.b16 %v29
  %v197 = vunpack.c.h.b16 %v29
  %v198 = vunpack.c.l.b16 %v30
  %v199 = vunpack.c.h.b16 %v30
  %v200 = vunpack.c.l.b16 %v31
  %v201 = vunpack.c.h.b16 %v31
  %v202 = vunpack.c.l.b16 %v32
  %v203 = vunpack.c.h.b16 %v32
  %v204 = vunpack.c.l.b16 %v33
  %v205 = vunpack.c.h.b16 %v33
  %v206 = vunpack.c.l.b16 %v34
  %v207 = vunpack.c.h.b16 %v34
  %v208 = vunpack.c.l.b16 %v35
  %v209 = vunpack.c.h.b16 %v35
  %v210 = vunpack.c.l.b16 %v36
  %v211 = vunpack.c.h.b16 %v36
  %v212 = vunpack.c.l.b16 %v37
  %v213 = vunpack.c.h.b16 %v37
  %v214 = vunpack.c.l.b16 %v38
  %v215 = vunpack.c.h.b16 %v38
  %v216 = vunpack.c.l.b16 %v39
  %v217 = vunpack.c.h.b16 %v39
  %v218 = vunpack.c.l.b16 %v40
  %v219 = vunpack.c.h.b16 %v40
  %v220 = vunpack.c.l.b16 %v41
  %v221 = vunpack.c.h.b16 %v41
  %v222 = vunpack.c.l.b16 %v42
  %v223 = vunpack.c.h.b16 %v42
  %v224 = vunpack.c.l.b16 %v43
  %v225 = vunpack.c.h.b16 %v43
  %v226 = vunpack.c.l.b16 %v44
  %v227 = vunpack.c.h.b16 %v44
  %v228 = vunpack.c.l.b16 %v45
  %v229 = vunpack.c.h.b16 %v45
  %v230 = vunpack.c.l.b16 %v46
  %v231 = vunpack.c.h.b16 %v46
  %v232 = vunpack.c.l.b16 %v47
  %v233 = vunpack.c.h.b16 %v47
  %v234 = vunpack.c.l.b16 %v48
  %v235 = vunpack.c.h.b16 %v48
  %v236 = vunpack.c.l.b16 %v49
  %v237 = vunpack.c.h.b16 %v49
  %v238 = vunpack.c.l.b16 %v50
  %v239 = vunpack.c.h.b16 %v50
  %v240 = vunpack.c.l.b16 %v51
  %v241 = vunpack.c.h.b16 %v51
  %v242 = vunpack.c.l.b16 %v52
  %v243 = vunpack.c.h.b16 %v52
  %v244 = vunpack.c.l.b16 %v53
  %v245 = vunpack.c.h.b16 %v53
  %v246 = vunpack.c.l.b16 %v54
  %v247 = vunpack.c.h.b16 %v54
  %v248 = vunpack.c.l.b16 %v55
  %v249 = vunpack.c.h.b16 %v55
  %v250 = vpack.c.b16 %v170, %v166
  %v251 = vpack.c.b16 %v171, %v167
  %v252 = vpack.c.b16 %v172, %v168
  %v253 = vpack.c.b16 %v173, %v169
  %v254 = vpack.c.b16 %v178, %v174
  %v255 = vpack.c.b16 %v179, %v175
  %v256 = vpack.c.b16 %v180, %v176
  %v257 = vpack.c.b16 %v181, %v177
  %v258 = vpack.c.b16 %v186, %v182
  %v259 = vpack.c.b16 %v187, %v183
  %v260 = vpack.c.b16 %v188, %v184
  %v261 = vpack.c.b16 %v189, %v185
  %v262 = vpack.c.b16 %v194, %v190
  %v263 = vpack.c.b16 %v195, %v191
  %v264 = vpack.c.b16 %v196, %v192
  %v265 = vpack.c.b16 %v197, %v193
  %v266 = vpack.c.b16 %v202, %v198
  %v267 = vpack.c.b16 %v203, %v199
  %v268 = vpack.c.b16 %v204, %v200
  %v269 = vpack.c.b16 %v205, %v201
  %v270 = vpack.c.b16 %v210, %v206
  %v271 = vpack.c.b16 %v211, %v207
  %v272 = vpack.c.b16 %v212, %v208
  %v273 = vpack.c.b16 %v213, %v209
  %v274 = vpack.c.b16 %v218, %v214
  %v275 = vpack.c.b16 %v219, %v215
  %v276 = vpack.c.b16 %v220, %v216
  %v277 = vpack.c.b16 %v221, %v217
  %v278 = vpack.c.b16 %v226, %v222
  %v279 = vpack.c.b16 %v227, %v223
  %v280 = vpack.c.b16 %v228, %v224
  %v281 = vpack.c.b16 %v229, %v225
  %v282 = vpack.c.b16 %v234, %v230
  %v283 = vpack.c.b16 %v235, %v231
  %v284 = vpack.c.b16 %v236, %v232
  %v285 = vpack.c.b16 %v237, %v233
  %v286 = vpack.c.b16 %v242, %v238
  %v287 = vpack.c.b16 %v243, %v239
  %v288 = vpack.c.b16 %v244, %v240
  %v289 = vpack.c.b16 %v245, %v241
  %v290 = vpack.c.b16 %v246, %v246
  %v291 = vpack.c.b16 %v247, %v247
  %v292 = vpack.c.b16 %v248, %v248
  %v293 = vpack.c.b16 %v249, %v249
  %v402 = vunpack.c.l.b16 %v56
  %v403 = vunpack.c.l.b16 %v57
  %v404 = vunpack.c.l.b16 %v58
  %v405 = vunpack.c.l.b16 %v59
  %v406 = vunpack.c.l.b16 %v60
  %v407 = vunpack.c.l.b16 %v61
  %v408 = vunpack.c.l.b16 %v62
  %v409 = vunpack.c.l.b16 %v63
  %v410 = vunpack.c.l.b16 %v64
  %v411 = vunpack.c.l.b16 %v65
  %v412 = vunpack.c.l.b16 %v66
  %v413 = vunpack.c.l.b16 %v67
  %v414 = vunpack.c.l.b16 %v68
  %v415 = vunpack.c.l.b16 %v69
  %v416 = vunpack.c.l.b16 %v70
  %v417 = vunpack.c.l.b16 %v71
  %v418 = vunpack.c.l.b16 %v72
  %v419 = vunpack.c.l.b16 %v73
  %v420 = vunpack.c.l.b16 %v74
  %v421 = vunpack.c.l.b16 %v75
  %v422 = vunpack.c.l.b16 %v76
  %v423 = vunpack.c.l.b16 %v77
  %v424 = vunpack.c.l.b16 %v78
  %v425 = vunpack.c.l.b16 %v79
  %v426 = vunpack.c.l.b16 %v80
  %v427 = vunpack.c.l.b16 %v81
  %v428 = vunpack.c.l.b16 %v82
  %v429 = vunpack.c.l.b16 %v83
  %v430 = vunpack.c.l.b16 %v84
  %v431 = vunpack.c.l.b16 %v85
  %v432 = vunpack.c.l.b16 %v86
  %v433 = vunpack.c.l.b16 %v87
  %v434 = vunpack.c.l.b16 %v88
  %v435 = vunpack.c.l.b16 %v89
  %v436 = vunpack.c.l.b16 %v90
  %v437 = vunpack.c.l.b16 %v91
  %v438 = vunpack.c.l.b16 %v92
  %v439 = vunpack.c.l.b16 %v93
  %v440 = vunpack.c.l.b16 %v94
  %v441 = vunpack.c.l.b16 %v95
  %v442 = vunpack.c.l.b16 %v96
  %v443 = vunpack.c.l.b16 %v97
  %v444 = vunpack.c.l.b16 %v98
  %v445 = vunpack.c.l.b16 %v99
  %v446 = vunpack.c.l.b16 %v100
  %v447 = vunpack.c.l.b16 %v101
  %v448 = vunpack.c.l.b16 %v102
  %v449 = vunpack.c.l.b16 %v103
  %v450 = vunpack.c.l.b16 %v104
  %v451 = vunpack.c.l.b16 %v105
  %v452 = vunpack.c.l.b16 %v106
  %v453 = vunpack.c.l.b16 %v107
  %v454 = vunpack.c.l.b16 %v108
  %v455 = vunpack.c.l.b16 %v109
  %v456 = vunpack.c.l.b16 %v110
  %v457 = vunpack.c.l.b16 %v111
  %v458 = vunpack.c.l.b16 %v112
  %v459 = vunpack.c.l.b16 %v113
  %v460 = vunpack.c.l.b16 %v114
  %v461 = vunpack.c.l.b16 %v115
  %v462 = vunpack.c.l.b16 %v116
  %v463 = vunpack.c.l.b16 %v117
  %v464 = vunpack.c.l.b16 %v118
  %v465 = vunpack.c.l.b16 %v119
  %v466 = vpack.c.b16 %v403, %v402
  %v467 = vpack.c.b16 %v405, %v404
  %v468 = vpack.c.b16 %v407, %v406
  %v469 = vpack.c.b16 %v409, %v408
  %v470 = vpack.c.b16 %v411, %v410
  %v471 = vpack.c.b16 %v413, %v412
  %v472 = vpack.c.b16 %v415, %v414
  %v473 = vpack.c.b16 %v417, %v416
  %v474 = vpack.c.b16 %v419, %v418
  %v475 = vpack.c.b16 %v421, %v420
  %v476 = vpack.c.b16 %v423, %v422
  %v477 = vpack.c.b16 %v425, %v424
  %v478 = vpack.c.b16 %v427, %v426
  %v479 = vpack.c.b16 %v429, %v428
  %v480 = vpack.c.b16 %v431, %v430
  %v481 = vpack.c.b16 %v433, %v432
  %v482 = vpack.c.b16 %v435, %v434
  %v483 = vpack.c.b16 %v437, %v436
  %v484 = vpack.c.b16 %v439, %v438
  %v485 = vpack.c.b16 %v441, %v440
  %v486 = vpack.c.b16 %v443, %v442
  %v487 = vpack.c.b16 %v445, %v444
  %v488 = vpack.c.b16 %v447, %v446
  %v489 = vpack.c.b16 %v449, %v448
  %v490 = vpack.c.b16 %v451, %v450
  %v491 = vpack.c.b16 %v453, %v452
  %v492 = vpack.c.b16 %v455, %v454
  %v493 = vpack.c.b16 %v457, %v456
  %v494 = vpack.c.b16 %v459, %v458
  %v495 = vpack.c.b16 %v461, %v460
  %v496 = vpack.c.b16 %v463, %v462
  %v497 = vpack.c.b16 %v465, %v464
  %530 = vmatpush.bf16.msra.mxu0 %v473
  %531 = vmatpush.bf16.msra.mxu0 %v472
  %532 = vmatpush.bf16.msra.mxu0 %v471
  %533 = vmatpush.bf16.msra.mxu0 %v470
  %534 = vmatpush.bf16.msra.mxu0 %v469
  %535 = vmatpush.bf16.msra.mxu0 %v468
  %536 = vmatpush.bf16.msra.mxu0 %v467
  %537 = vmatpush.bf16.msra.mxu0 %v466
  %538 = vmatmul.bf16.gmra.mxu0 %v250
  %v539 = vpop.f32.mrf.mxu0
  %v540 = vadd.f32 %v122, %v539
  %v541 = vpop.f32.mrf.mxu0
  %v542 = vadd.f32 %v122, %v541
  %543 = vmatmul.bf16.gmra.mxu0 %v254
  %v544 = vpop.f32.mrf.mxu0
  %v545 = vadd.f32 %v122, %v544
  %v546 = vpop.f32.mrf.mxu0
  %v547 = vadd.f32 %v122, %v546
  %548 = vmatmul.bf16.gmra.mxu0 %v258
  %v549 = vpop.f32.mrf.mxu0
  %v550 = vadd.f32 %v122, %v549
  %v551 = vpop.f32.mrf.mxu0
  %v552 = vadd.f32 %v122, %v551
  %553 = vmatmul.bf16.gmra.mxu0 %v262
  %v554 = vpop.f32.mrf.mxu0
  %v555 = vadd.f32 %v122, %v554
  %v556 = vpop.f32.mrf.mxu0
  %v557 = vadd.f32 %v122, %v556
  %558 = vmatmul.bf16.gmra.mxu0 %v266
  %v559 = vpop.f32.mrf.mxu0
  %v560 = vadd.f32 %v122, %v559
  %v561 = vpop.f32.mrf.mxu0
  %v562 = vadd.f32 %v122, %v561
  %563 = vmatmul.bf16.gmra.mxu0 %v270
  %v564 = vpop.f32.mrf.mxu0
  %v565 = vadd.f32 %v122, %v564
  %v566 = vpop.f32.mrf.mxu0
  %v567 = vadd.f32 %v122, %v566
  %568 = vmatmul.bf16.gmra.mxu0 %v274
  %v569 = vpop.f32.mrf.mxu0
  %v570 = vadd.f32 %v122, %v569
  %v571 = vpop.f32.mrf.mxu0
  %v572 = vadd.f32 %v122, %v571
  %573 = vmatmul.bf16.gmra.mxu0 %v278
  %v574 = vpop.f32.mrf.mxu0
  %v575 = vadd.f32 %v122, %v574
  %v576 = vpop.f32.mrf.mxu0
  %v577 = vadd.f32 %v122, %v576
  %578 = vmatmul.bf16.gmra.mxu0 %v282
  %v579 = vpop.f32.mrf.mxu0
  %v580 = vadd.f32 %v122, %v579
  %v581 = vpop.f32.mrf.mxu0
  %v582 = vadd.f32 %v122, %v581
  %583 = vmatmul.bf16.gmra.mxu0 %v286
  %v584 = vpop.f32.mrf.mxu0
  %v585 = vadd.f32 %v122, %v584
  %v586 = vpop.f32.mrf.mxu0
  %v587 = vadd.f32 %v122, %v586
  %588 = vmatmul.bf16.gmra.mxu0 %v290
  %v589 = vpop.f32.mrf.mxu0
  %v590 = vadd.f32 %v122, %v589
  %v591 = vpop.f32.mrf.mxu0
  %592 = vdwg.mxu0
  %593 = vmatpush.bf16.msra.mxu0 %v481
  %594 = vmatpush.bf16.msra.mxu0 %v480
  %595 = vmatpush.bf16.msra.mxu0 %v479
  %596 = vmatpush.bf16.msra.mxu0 %v478
  %597 = vmatpush.bf16.msra.mxu0 %v477
  %598 = vmatpush.bf16.msra.mxu0 %v476
  %599 = vmatpush.bf16.msra.mxu0 %v475
  %600 = vmatpush.bf16.msra.mxu0 %v474
  %601 = vmatmul.bf16.gmra.mxu0 %v251
  %v602 = vpop.f32.mrf.mxu0
  %v603 = vadd.f32 %v540, %v602
  %v604 = vpop.f32.mrf.mxu0
  %v605 = vadd.f32 %v542, %v604
  %606 = vmatmul.bf16.gmra.mxu0 %v255
  %v607 = vpop.f32.mrf.mxu0
  %v608 = vadd.f32 %v545, %v607
  %v609 = vpop.f32.mrf.mxu0
  %v610 = vadd.f32 %v547, %v609
  %611 = vmatmul.bf16.gmra.mxu0 %v259
  %v612 = vpop.f32.mrf.mxu0
  %v613 = vadd.f32 %v550, %v612
  %v614 = vpop.f32.mrf.mxu0
  %v615 = vadd.f32 %v552, %v614
  %616 = vmatmul.bf16.gmra.mxu0 %v263
  %v617 = vpop.f32.mrf.mxu0
  %v618 = vadd.f32 %v555, %v617
  %v619 = vpop.f32.mrf.mxu0
  %v620 = vadd.f32 %v557, %v619
  %621 = vmatmul.bf16.gmra.mxu0 %v267
  %v622 = vpop.f32.mrf.mxu0
  %v623 = vadd.f32 %v560, %v622
  %v624 = vpop.f32.mrf.mxu0
  %v625 = vadd.f32 %v562, %v624
  %626 = vmatmul.bf16.gmra.mxu0 %v271
  %v627 = vpop.f32.mrf.mxu0
  %v628 = vadd.f32 %v565, %v627
  %v629 = vpop.f32.mrf.mxu0
  %v630 = vadd.f32 %v567, %v629
  %631 = vmatmul.bf16.gmra.mxu0 %v275
  %v632 = vpop.f32.mrf.mxu0
  %v633 = vadd.f32 %v570, %v632
  %v634 = vpop.f32.mrf.mxu0
  %v635 = vadd.f32 %v572, %v634
  %636 = vmatmul.bf16.gmra.mxu0 %v279
  %v637 = vpop.f32.mrf.mxu0
  %v638 = vadd.f32 %v575, %v637
  %v639 = vpop.f32.mrf.mxu0
  %v640 = vadd.f32 %v577, %v639
  %641 = vmatmul.bf16.gmra.mxu0 %v283
  %v642 = vpop.f32.mrf.mxu0
  %v643 = vadd.f32 %v580, %v642
  %v644 = vpop.f32.mrf.mxu0
  %v645 = vadd.f32 %v582, %v644
  %646 = vmatmul.bf16.gmra.mxu0 %v287
  %v647 = vpop.f32.mrf.mxu0
  %v648 = vadd.f32 %v585, %v647
  %v649 = vpop.f32.mrf.mxu0
  %v650 = vadd.f32 %v587, %v649
  %651 = vmatmul.bf16.gmra.mxu0 %v291
  %v652 = vpop.f32.mrf.mxu0
  %v653 = vadd.f32 %v590, %v652
  %v654 = vpop.f32.mrf.mxu0
  %655 = vdwg.mxu0
  %656 = vmatpush.bf16.msra.mxu0 %v489
  %657 = vmatpush.bf16.msra.mxu0 %v488
  %658 = vmatpush.bf16.msra.mxu0 %v487
  %659 = vmatpush.bf16.msra.mxu0 %v486
  %660 = vmatpush.bf16.msra.mxu0 %v485
  %661 = vmatpush.bf16.msra.mxu0 %v484
  %662 = vmatpush.bf16.msra.mxu0 %v483
  %663 = vmatpush.bf16.msra.mxu0 %v482
  %664 = vmatmul.bf16.gmra.mxu0 %v252
  %v665 = vpop.f32.mrf.mxu0
  %v666 = vadd.f32 %v603, %v665
  %v667 = vpop.f32.mrf.mxu0
  %v668 = vadd.f32 %v605, %v667
  %669 = vmatmul.bf16.gmra.mxu0 %v256
  %v670 = vpop.f32.mrf.mxu0
  %v671 = vadd.f32 %v608, %v670
  %v672 = vpop.f32.mrf.mxu0
  %v673 = vadd.f32 %v610, %v672
  %674 = vmatmul.bf16.gmra.mxu0 %v260
  %v675 = vpop.f32.mrf.mxu0
  %v676 = vadd.f32 %v613, %v675
  %v677 = vpop.f32.mrf.mxu0
  %v678 = vadd.f32 %v615, %v677
  %679 = vmatmul.bf16.gmra.mxu0 %v264
  %v680 = vpop.f32.mrf.mxu0
  %v681 = vadd.f32 %v618, %v680
  %v682 = vpop.f32.mrf.mxu0
  %v683 = vadd.f32 %v620, %v682
  %684 = vmatmul.bf16.gmra.mxu0 %v268
  %v685 = vpop.f32.mrf.mxu0
  %v686 = vadd.f32 %v623, %v685
  %v687 = vpop.f32.mrf.mxu0
  %v688 = vadd.f32 %v625, %v687
  %689 = vmatmul.bf16.gmra.mxu0 %v272
  %v690 = vpop.f32.mrf.mxu0
  %v691 = vadd.f32 %v628, %v690
  %v692 = vpop.f32.mrf.mxu0
  %v693 = vadd.f32 %v630, %v692
  %694 = vmatmul.bf16.gmra.mxu0 %v276
  %v695 = vpop.f32.mrf.mxu0
  %v696 = vadd.f32 %v633, %v695
  %v697 = vpop.f32.mrf.mxu0
  %v698 = vadd.f32 %v635, %v697
  %699 = vmatmul.bf16.gmra.mxu0 %v280
  %v700 = vpop.f32.mrf.mxu0
  %v701 = vadd.f32 %v638, %v700
  %v702 = vpop.f32.mrf.mxu0
  %v703 = vadd.f32 %v640, %v702
  %704 = vmatmul.bf16.gmra.mxu0 %v284
  %v705 = vpop.f32.mrf.mxu0
  %v706 = vadd.f32 %v643, %v705
  %v707 = vpop.f32.mrf.mxu0
  %v708 = vadd.f32 %v645, %v707
  %709 = vmatmul.bf16.gmra.mxu0 %v288
  %v710 = vpop.f32.mrf.mxu0
  %v711 = vadd.f32 %v648, %v710
  %v712 = vpop.f32.mrf.mxu0
  %v713 = vadd.f32 %v650, %v712
  %714 = vmatmul.bf16.gmra.mxu0 %v292
  %v715 = vpop.f32.mrf.mxu0
  %v716 = vadd.f32 %v653, %v715
  %v717 = vpop.f32.mrf.mxu0
  %718 = vdwg.mxu0
  %719 = vmatpush.bf16.msra.mxu0 %v497
  %720 = vmatpush.bf16.msra.mxu0 %v496
  %721 = vmatpush.bf16.msra.mxu0 %v495
  %722 = vmatpush.bf16.msra.mxu0 %v494
  %723 = vmatpush.bf16.msra.mxu0 %v493
  %724 = vmatpush.bf16.msra.mxu0 %v492
  %725 = vmatpush.bf16.msra.mxu0 %v491
  %726 = vmatpush.bf16.msra.mxu0 %v490
  %727 = vmatmul.bf16.gmra.mxu0 %v253
  %v728 = vpop.f32.mrf.mxu0
  %v729 = vadd.f32 %v666, %v728
  %v730 = vpop.f32.mrf.mxu0
  %v731 = vadd.f32 %v668, %v730
  %732 = vmatmul.bf16.gmra.mxu0 %v257
  %v733 = vpop.f32.mrf.mxu0
  %v734 = vadd.f32 %v671, %v733
  %v735 = vpop.f32.mrf.mxu0
  %v736 = vadd.f32 %v673, %v735
  %737 = vmatmul.bf16.gmra.mxu0 %v261
  %v738 = vpop.f32.mrf.mxu0
  %v739 = vadd.f32 %v676, %v738
  %v740 = vpop.f32.mrf.mxu0
  %v741 = vadd.f32 %v678, %v740
  %742 = vmatmul.bf16.gmra.mxu0 %v265
  %v743 = vpop.f32.mrf.mxu0
  %v744 = vadd.f32 %v681, %v743
  %v745 = vpop.f32.mrf.mxu0
  %v746 = vadd.f32 %v683, %v745
  %747 = vmatmul.bf16.gmra.mxu0 %v269
  %v748 = vpop.f32.mrf.mxu0
  %v749 = vadd.f32 %v686, %v748
  %v750 = vpop.f32.mrf.mxu0
  %v751 = vadd.f32 %v688, %v750
  %752 = vmatmul.bf16.gmra.mxu0 %v273
  %v753 = vpop.f32.mrf.mxu0
  %v754 = vadd.f32 %v691, %v753
  %v755 = vpop.f32.mrf.mxu0
  %v756 = vadd.f32 %v693, %v755
  %757 = vmatmul.bf16.gmra.mxu0 %v277
  %v758 = vpop.f32.mrf.mxu0
  %v759 = vadd.f32 %v696, %v758
  %v760 = vpop.f32.mrf.mxu0
  %v761 = vadd.f32 %v698, %v760
  %762 = vmatmul.bf16.gmra.mxu0 %v281
  %v763 = vpop.f32.mrf.mxu0
  %v764 = vadd.f32 %v701, %v763
  %v765 = vpop.f32.mrf.mxu0
  %v766 = vadd.f32 %v703, %v765
  %767 = vmatmul.bf16.gmra.mxu0 %v285
  %v768 = vpop.f32.mrf.mxu0
  %v769 = vadd.f32 %v706, %v768
  %v770 = vpop.f32.mrf.mxu0
  %v771 = vadd.f32 %v708, %v770
  %772 = vmatmul.bf16.gmra.mxu0 %v289
  %v773 = vpop.f32.mrf.mxu0
  %v774 = vadd.f32 %v711, %v773
  %v775 = vpop.f32.mrf.mxu0
  %v776 = vadd.f32 %v713, %v775
  %777 = vmatmul.bf16.gmra.mxu0 %v293
  %v778 = vpop.f32.mrf.mxu0
  %v779 = vadd.f32 %v716, %v778
  %v780 = vpop.f32.mrf.mxu0
  %781 = vdwg.mxu0
  %v782 = vmin.f32 %v729, 0.0
  %v783 = vmin.f32 %v731, 0.0
  %v784 = vmin.f32 %v734, 0.0
  %v785 = vmin.f32 %v736, 0.0
  %v786 = vmin.f32 %v739, 0.0
  %v787 = vmin.f32 %v741, 0.0
  %v788 = vmin.f32 %v744, 0.0
  %v789 = vmin.f32 %v746, 0.0
  %v790 = vmin.f32 %v749, 0.0
  %v791 = vmin.f32 %v751, 0.0
  %v792 = vmin.f32 %v754, 0.0
  %v793 = vmin.f32 %v756, 0.0
  %v794 = vmin.f32 %v759, 0.0
  %v795 = vmin.f32 %v761, 0.0
  %v796 = vmin.f32 %v764, 0.0
  %v797 = vmin.f32 %v766, 0.0
  %v798 = vmin.f32 %v769, 0.0
  %v799 = vmin.f32 %v771, 0.0
  %v800 = vmin.f32 %v774, 0.0
  %v801 = vmin.f32 %v776, 0.0
  %v802 = vmin.f32 %v779, 0.0
  %v803 = vmul.f32 %v782, 1.442695
  %v804 = vpow.pop %v803
  %v805 = vmul.f32 %v783, 1.442695
  %v806 = vpow.pop %v805
  %v807 = vmul.f32 %v784, 1.442695
  %v808 = vpow.pop %v807
  %v809 = vmul.f32 %v785, 1.442695
  %v810 = vpow.pop %v809
  %v811 = vmul.f32 %v786, 1.442695
  %v812 = vpow.pop %v811
  %v813 = vmul.f32 %v787, 1.442695
  %v814 = vpow.pop %v813
  %v815 = vmul.f32 %v788, 1.442695
  %v816 = vpow.pop %v815
  %v817 = vmul.f32 %v789, 1.442695
  %v818 = vpow.pop %v817
  %v819 = vmul.f32 %v790, 1.442695
  %v820 = vpow.pop %v819
  %v821 = vmul.f32 %v791, 1.442695
  %v822 = vpow.pop %v821
  %v823 = vmul.f32 %v792, 1.442695
  %v824 = vpow.pop %v823
  %v825 = vmul.f32 %v793, 1.442695
  %v826 = vpow.pop %v825
  %v827 = vmul.f32 %v794, 1.442695
  %v828 = vpow.pop %v827
  %v829 = vmul.f32 %v795, 1.442695
  %v830 = vpow.pop %v829
  %v831 = vmul.f32 %v796, 1.442695
  %v832 = vpow.pop %v831
  %v833 = vmul.f32 %v797, 1.442695
  %v834 = vpow.pop %v833
  %v835 = vmul.f32 %v798, 1.442695
  %v836 = vpow.pop %v835
  %v837 = vmul.f32 %v799, 1.442695
  %v838 = vpow.pop %v837
  %v839 = vmul.f32 %v800, 1.442695
  %v840 = vpow.pop %v839
  %v841 = vmul.f32 %v801, 1.442695
  %v842 = vpow.pop %v841
  %v843 = vmul.f32 %v802, 1.442695
  %v844 = vpow.pop %v843
  %v845 = vsub.f32 %v804, 1.0
  %v846 = vsub.f32 %v806, 1.0
  %v847 = vsub.f32 %v808, 1.0
  %v848 = vsub.f32 %v810, 1.0
  %v849 = vsub.f32 %v812, 1.0
  %v850 = vsub.f32 %v814, 1.0
  %v851 = vsub.f32 %v816, 1.0
  %v852 = vsub.f32 %v818, 1.0
  %v853 = vsub.f32 %v820, 1.0
  %v854 = vsub.f32 %v822, 1.0
  %v855 = vsub.f32 %v824, 1.0
  %v856 = vsub.f32 %v826, 1.0
  %v857 = vsub.f32 %v828, 1.0
  %v858 = vsub.f32 %v830, 1.0
  %v859 = vsub.f32 %v832, 1.0
  %v860 = vsub.f32 %v834, 1.0
  %v861 = vsub.f32 %v836, 1.0
  %v862 = vsub.f32 %v838, 1.0
  %v863 = vsub.f32 %v840, 1.0
  %v864 = vsub.f32 %v842, 1.0
  %v865 = vsub.f32 %v844, 1.0
  %vm866 = vcmp.gt.f32.partialorder %v729, 0.0
  %vm867 = vcmp.gt.f32.partialorder %v731, 0.0
  %vm868 = vcmp.gt.f32.partialorder %v734, 0.0
  %vm869 = vcmp.gt.f32.partialorder %v736, 0.0
  %vm870 = vcmp.gt.f32.partialorder %v739, 0.0
  %vm871 = vcmp.gt.f32.partialorder %v741, 0.0
  %vm872 = vcmp.gt.f32.partialorder %v744, 0.0
  %vm873 = vcmp.gt.f32.partialorder %v746, 0.0
  %vm874 = vcmp.gt.f32.partialorder %v749, 0.0
  %vm875 = vcmp.gt.f32.partialorder %v751, 0.0
  %vm876 = vcmp.gt.f32.partialorder %v754, 0.0
  %vm877 = vcmp.gt.f32.partialorder %v756, 0.0
  %vm878 = vcmp.gt.f32.partialorder %v759, 0.0
  %vm879 = vcmp.gt.f32.partialorder %v761, 0.0
  %vm880 = vcmp.gt.f32.partialorder %v764, 0.0
  %vm881 = vcmp.gt.f32.partialorder %v766, 0.0
  %vm882 = vcmp.gt.f32.partialorder %v769, 0.0
  %vm883 = vcmp.gt.f32.partialorder %v771, 0.0
  %vm884 = vcmp.gt.f32.partialorder %v774, 0.0
  %vm885 = vcmp.gt.f32.partialorder %v776, 0.0
  %vm886 = vcmp.gt.f32.partialorder %v779, 0.0
  %v887 = vsel %vm866, %v729, %v845
  %v888 = vsel %vm867, %v731, %v846
  %v889 = vsel %vm868, %v734, %v847
  %v890 = vsel %vm869, %v736, %v848
  %v891 = vsel %vm870, %v739, %v849
  %v892 = vsel %vm871, %v741, %v850
  %v893 = vsel %vm872, %v744, %v851
  %v894 = vsel %vm873, %v746, %v852
  %v895 = vsel %vm874, %v749, %v853
  %v896 = vsel %vm875, %v751, %v854
  %v897 = vsel %vm876, %v754, %v855
  %v898 = vsel %vm877, %v756, %v856
  %v899 = vsel %vm878, %v759, %v857
  %v900 = vsel %vm879, %v761, %v858
  %v901 = vsel %vm880, %v764, %v859
  %v902 = vsel %vm881, %v766, %v860
  %v903 = vsel %vm882, %v769, %v861
  %v904 = vsel %vm883, %v771, %v862
  %v905 = vsel %vm884, %v774, %v863
  %v906 = vsel %vm885, %v776, %v864
  %v907 = vsel %vm886, %v779, %v865
  %v908 = vpack.c.bf16 %v887, %v887
  %v909 = vpack.c.bf16 %v888, %v888
  %v910 = vpack.c.bf16 %v889, %v889
  %v911 = vpack.c.bf16 %v890, %v890
  %v912 = vpack.c.bf16 %v891, %v891
  %v913 = vpack.c.bf16 %v892, %v892
  %v914 = vpack.c.bf16 %v893, %v893
  %v915 = vpack.c.bf16 %v894, %v894
  %v916 = vpack.c.bf16 %v895, %v895
  %v917 = vpack.c.bf16 %v896, %v896
  %v918 = vpack.c.bf16 %v897, %v897
  %v919 = vpack.c.bf16 %v898, %v898
  %v920 = vpack.c.bf16 %v899, %v899
  %v921 = vpack.c.bf16 %v900, %v900
  %v922 = vpack.c.bf16 %v901, %v901
  %v923 = vpack.c.bf16 %v902, %v902
  %v924 = vpack.c.bf16 %v903, %v903
  %v925 = vpack.c.bf16 %v904, %v904
  %v926 = vpack.c.bf16 %v905, %v905
  %v927 = vpack.c.bf16 %v906, %v906
  %v928 = vpack.c.bf16 %v907, %v907
  %vm929 = vcmask 519168
  %930 = vst.msk [vmem:[%s3] sm:$0xf] %vm929, %v908
  %931 = vst.msk [vmem:[%s3 + $0x4] sm:$0xf] %vm929, %v909
  %932 = vst.msk [vmem:[%s3 + $0x8] sm:$0xf] %vm929, %v910
  %933 = vst.msk [vmem:[%s3 + $0xc] sm:$0xf] %vm929, %v911
  %934 = vst.msk [vmem:[%s3 + $0x10] sm:$0xf] %vm929, %v912
  %935 = vst.msk [vmem:[%s3 + $0x14] sm:$0xf] %vm929, %v913
  %936 = vst.msk [vmem:[%s3 + $0x18] sm:$0xf] %vm929, %v914
  %937 = vst.msk [vmem:[%s3 + $0x1c] sm:$0xf] %vm929, %v915
  %938 = vst.msk [vmem:[%s3 + $0x20] sm:$0xf] %vm929, %v916
  %939 = vst.msk [vmem:[%s3 + $0x24] sm:$0xf] %vm929, %v917
  %940 = vst.msk [vmem:[%s3 + $0x28] sm:$0xf] %vm929, %v918
  %941 = vst.msk [vmem:[%s3 + $0x2c] sm:$0xf] %vm929, %v919
  %942 = vst.msk [vmem:[%s3 + $0x30] sm:$0xf] %vm929, %v920
  %943 = vst.msk [vmem:[%s3 + $0x34] sm:$0xf] %vm929, %v921
  %944 = vst.msk [vmem:[%s3 + $0x38] sm:$0xf] %vm929, %v922
  %945 = vst.msk [vmem:[%s3 + $0x3c] sm:$0xf] %vm929, %v923
  %946 = vst.msk [vmem:[%s3 + $0x40] sm:$0xf] %vm929, %v924
  %947 = vst.msk [vmem:[%s3 + $0x44] sm:$0xf] %vm929, %v925
  %948 = vst.msk [vmem:[%s3 + $0x48] sm:$0xf] %vm929, %v926
  %949 = vst.msk [vmem:[%s3 + $0x4c] sm:$0xf] %vm929, %v927
  %vm950 = vcmask 516096
  %951 = vst.msk [vmem:[%s3 + $0x50] sm:$0x1] %vm950, %v928
  // Predicated region
  $region14: #{_lambda_.6} parent=0 // pred_check
    _
  $region15: #{_lambda_.6} parent=0 // pred_check_branch
    %953 = sbr.rel (0) target = $region17
  $region16: #{_lambda_.6} parent=0 // pred_region
    _
  $region17: #{_lambda_.6} parent=0 // pred_fallthru
    _
  // Predicated region
  $region18: #{_lambda_.6} parent=0 // pred_check
    _
  $region19: #{_lambda_.6} parent=0 // pred_check_branch
    %955 = sbr.rel (0) target = $region21
  $region20: #{_lambda_.6} parent=0 // pred_region
    _
  $region21: #{_lambda_.6} parent=0 // pred_fallthru
    _

// kernel: _lambda_.7
$region0: #{_lambda_.7}
  #allocation0 [shape = 'u32[]', space=smem, size = 0x4, offset = 0x4, fixed_abs, tag = 'smem constant byte address 0x4 - core index']
  #allocation1 [shape = 'u32[72,128]{1,0:T(1,128)}', space=vmem, size = 0x9000, scoped, tag = 'internal scratch']
  %s0 = inlined_call_operand.vmem [shape: bf16[32,576], index: 0, kind: input, shape index: {}]
  %s1 = inlined_call_operand.vmem [shape: bf16[576,128], index: 1, kind: input, shape index: {}]
  %s2 = inlined_call_operand.vmem [shape: f32[1,128], index: 2, kind: input, shape index: {}]
  %s3 = inlined_call_operand.vmem [shape: bf16[32,128], index: 3, kind: output, shape index: {}]
  %s4 = sld [smem:[#allocation0]]
  $region22: #{_lambda_.7} parent=0
    _
  %s6 = ssub.s32 1, %s4
  %s7 = scalar_select 0, %s6, %s4
  // Predicated region
  $region2: #{_lambda_.7} parent=0 // pred_check
    _
  $region3: #{_lambda_.7} parent=0 // pred_check_branch
    %9 = sbr.rel (0) target = $region5
  $region4: #{_lambda_.7} parent=0 // pred_region
    _
  $region5: #{_lambda_.7} parent=0 // pred_fallthru
    _
  // Predicated region
  $region6: #{_lambda_.7} parent=0 // pred_check
    _
  $region7: #{_lambda_.7} parent=0 // pred_check_branch
    %11 = sbr.rel (0) target = $region9
  $region8: #{_lambda_.7} parent=0 // pred_region
    _
  $region9: #{_lambda_.7} parent=0 // pred_fallthru
    _
  // Predicated region
  $region10: #{_lambda_.7} parent=0 // pred_check
    _
  $region11: #{_lambda_.7} parent=0 // pred_check_branch
    %13 = sbr.rel (0) target = $region13
  $region12: #{_lambda_.7} parent=0 // pred_region
    _
  $region13: #{_lambda_.7} parent=0 // pred_fallthru
    _
  %v15 = vld [vmem:[%s0] sm:$0xff]
  %v16 = vld [vmem:[%s0 + $0x8] sm:$0xff]
  %v17 = vld [vmem:[%s0 + $0x10] sm:$0xf]
  %v18 = vld [vmem:[%s0 + $0x14] sm:$0xff]
  %v19 = vld [vmem:[%s0 + $0x1c] sm:$0xff]
  %v20 = vld [vmem:[%s0 + $0x24] sm:$0xf]
  %v21 = vld [vmem:[%s0 + $0x28] sm:$0xff]
  %v22 = vld [vmem:[%s0 + $0x30] sm:$0xff]
  %v23 = vld [vmem:[%s0 + $0x38] sm:$0xf]
  %v24 = vld [vmem:[%s0 + $0x3c] sm:$0xff]
  %v25 = vld [vmem:[%s0 + $0x44] sm:$0xff]
  %v26 = vld [vmem:[%s0 + $0x4c] sm:$0xf]
  %v27 = vld [vmem:[%s1] sm:$0xf]
  %v28 = vld [vmem:[%s1 + $0x4] sm:$0xf]
  %v29 = vld [vmem:[%s1 + $0x8] sm:$0xf]
  %v30 = vld [vmem:[%s1 + $0xc] sm:$0xf]
  %v31 = vld [vmem:[%s1 + $0x10] sm:$0xf]
  %v32 = vld [vmem:[%s1 + $0x14] sm:$0xf]
  %v33 = vld [vmem:[%s1 + $0x18] sm:$0xf]
  %v34 = vld [vmem:[%s1 + $0x1c] sm:$0xf]
  %v35 = vld [vmem:[%s1 + $0x20] sm:$0xf]
  %v36 = vld [vmem:[%s1 + $0x24] sm:$0xf]
  %v37 = vld [vmem:[%s1 + $0x28] sm:$0xf]
  %v38 = vld [vmem:[%s1 + $0x2c] sm:$0xf]
  %v39 = vld [vmem:[%s1 + $0x30] sm:$0xf]
  %v40 = vld [vmem:[%s1 + $0x34] sm:$0xf]
  %v41 = vld [vmem:[%s1 + $0x38] sm:$0xf]
  %v42 = vld [vmem:[%s1 + $0x3c] sm:$0xf]
  %v43 = vld [vmem:[%s1 + $0x40] sm:$0xf]
  %v44 = vld [vmem:[%s1 + $0x44] sm:$0xf]
  %v45 = vld [vmem:[%s1 + $0x48] sm:$0xf]
  %v46 = vld [vmem:[%s1 + $0x4c] sm:$0xf]
  %v47 = vld [vmem:[%s1 + $0x50] sm:$0xf]
  %v48 = vld [vmem:[%s1 + $0x54] sm:$0xf]
  %v49 = vld [vmem:[%s1 + $0x58] sm:$0xf]
  %v50 = vld [vmem:[%s1 + $0x5c] sm:$0xf]
  %v51 = vld [vmem:[%s1 + $0x60] sm:$0xf]
  %v52 = vld [vmem:[%s1 + $0x64] sm:$0xf]
  %v53 = vld [vmem:[%s1 + $0x68] sm:$0xf]
  %v54 = vld [vmem:[%s1 + $0x6c] sm:$0xf]
  %v55 = vld [vmem:[%s1 + $0x70] sm:$0xf]
  %v56 = vld [vmem:[%s1 + $0x74] sm:$0xf]
  %v57 = vld [vmem:[%s1 + $0x78] sm:$0xf]
  %v58 = vld [vmem:[%s1 + $0x7c] sm:$0xf]
  %v59 = vld [vmem:[%s1 + $0x80] sm:$0xf]
  %v60 = vld [vmem:[%s1 + $0x84] sm:$0xf]
  %v61 = vld [vmem:[%s1 + $0x88] sm:$0xf]
  %v62 = vld [vmem:[%s1 + $0x8c] sm:$0xf]
  %v63 = vld [vmem:[%s1 + $0x90] sm:$0xf]
  %v64 = vld [vmem:[%s1 + $0x94] sm:$0xf]
  %v65 = vld [vmem:[%s1 + $0x98] sm:$0xf]
  %v66 = vld [vmem:[%s1 + $0x9c] sm:$0xf]
  %v67 = vld [vmem:[%s1 + $0xa0] sm:$0xf]
  %v68 = vld [vmem:[%s1 + $0xa4] sm:$0xf]
  %v69 = vld [vmem:[%s1 + $0xa8] sm:$0xf]
  %v70 = vld [vmem:[%s1 + $0xac] sm:$0xf]
  %v71 = vld [vmem:[%s1 + $0xb0] sm:$0xf]
  %v72 = vld [vmem:[%s1 + $0xb4] sm:$0xf]
  %v73 = vld [vmem:[%s1 + $0xb8] sm:$0xf]
  %v74 = vld [vmem:[%s1 + $0xbc] sm:$0xf]
  %v75 = vld [vmem:[%s1 + $0xc0] sm:$0xf]
  %v76 = vld [vmem:[%s1 + $0xc4] sm:$0xf]
  %v77 = vld [vmem:[%s1 + $0xc8] sm:$0xf]
  %v78 = vld [vmem:[%s1 + $0xcc] sm:$0xf]
  %v79 = vld [vmem:[%s1 + $0xd0] sm:$0xf]
  %v80 = vld [vmem:[%s1 + $0xd4] sm:$0xf]
  %v81 = vld [vmem:[%s1 + $0xd8] sm:$0xf]
  %v82 = vld [vmem:[%s1 + $0xdc] sm:$0xf]
  %v83 = vld [vmem:[%s1 + $0xe0] sm:$0xf]
  %v84 = vld [vmem:[%s1 + $0xe4] sm:$0xf]
  %v85 = vld [vmem:[%s1 + $0xe8] sm:$0xf]
  %v86 = vld [vmem:[%s1 + $0xec] sm:$0xf]
  %v87 = vld [vmem:[%s1 + $0xf0] sm:$0xf]
  %v88 = vld [vmem:[%s1 + $0xf4] sm:$0xf]
  %v89 = vld [vmem:[%s1 + $0xf8] sm:$0xf]
  %v90 = vld [vmem:[%s1 + $0xfc] sm:$0xf]
  %v91 = vld [vmem:[%s1 + $0x100] sm:$0xf]
  %v92 = vld [vmem:[%s1 + $0x104] sm:$0xf]
  %v93 = vld [vmem:[%s1 + $0x108] sm:$0xf]
  %v94 = vld [vmem:[%s1 + $0x10c] sm:$0xf]
  %v95 = vld [vmem:[%s1 + $0x110] sm:$0xf]
  %v96 = vld [vmem:[%s1 + $0x114] sm:$0xf]
  %v97 = vld [vmem:[%s1 + $0x118] sm:$0xf]
  %v98 = vld [vmem:[%s1 + $0x11c] sm:$0xf]
  %v99 = vld [vmem:[%s2] sm:$0x1]
  %v101 = vperm.slane %v99, 0
  %v115 = vunpack.c.l.b16 %v15
  %v116 = vunpack.c.h.b16 %v15
  %v117 = vunpack.c.l.b16 %v16
  %v118 = vunpack.c.h.b16 %v16
  %v119 = vunpack.c.l.b16 %v17
  %v120 = vunpack.c.l.b16 %v18
  %v121 = vunpack.c.h.b16 %v18
  %v122 = vunpack.c.l.b16 %v19
  %v123 = vunpack.c.h.b16 %v19
  %v124 = vunpack.c.l.b16 %v20
  %v125 = vunpack.c.l.b16 %v21
  %v126 = vunpack.c.h.b16 %v21
  %v127 = vunpack.c.l.b16 %v22
  %v128 = vunpack.c.h.b16 %v22
  %v129 = vunpack.c.l.b16 %v23
  %v130 = vunpack.c.l.b16 %v24
  %v131 = vunpack.c.h.b16 %v24
  %v132 = vunpack.c.l.b16 %v25
  %v133 = vunpack.c.h.b16 %v25
  %v134 = vunpack.c.l.b16 %v26
  %v135 = vpack.c.b16 %v120, %v115
  %v136 = vpack.c.b16 %v121, %v116
  %v137 = vpack.c.b16 %v122, %v117
  %v138 = vpack.c.b16 %v123, %v118
  %v139 = vpack.c.b16 %v124, %v119
  %v140 = vpack.c.b16 %v130, %v125
  %v141 = vpack.c.b16 %v131, %v126
  %v142 = vpack.c.b16 %v132, %v127
  %v143 = vpack.c.b16 %v133, %v128
  %v144 = vpack.c.b16 %v134, %v129
  %v225 = vunpack.c.l.b16 %v27
  %v226 = vunpack.c.l.b16 %v28
  %v227 = vunpack.c.l.b16 %v29
  %v228 = vunpack.c.l.b16 %v30
  %v229 = vunpack.c.l.b16 %v31
  %v230 = vunpack.c.l.b16 %v32
  %v231 = vunpack.c.l.b16 %v33
  %v232 = vunpack.c.l.b16 %v34
  %v233 = vunpack.c.l.b16 %v35
  %v234 = vunpack.c.l.b16 %v36
  %v235 = vunpack.c.l.b16 %v37
  %v236 = vunpack.c.l.b16 %v38
  %v237 = vunpack.c.l.b16 %v39
  %v238 = vunpack.c.l.b16 %v40
  %v239 = vunpack.c.l.b16 %v41
  %v240 = vunpack.c.l.b16 %v42
  %v241 = vunpack.c.l.b16 %v43
  %v242 = vunpack.c.l.b16 %v44
  %v243 = vunpack.c.l.b16 %v45
  %v244 = vunpack.c.l.b16 %v46
  %v245 = vunpack.c.l.b16 %v47
  %v246 = vunpack.c.l.b16 %v48
  %v247 = vunpack.c.l.b16 %v49
  %v248 = vunpack.c.l.b16 %v50
  %v249 = vunpack.c.l.b16 %v51
  %v250 = vunpack.c.l.b16 %v52
  %v251 = vunpack.c.l.b16 %v53
  %v252 = vunpack.c.l.b16 %v54
  %v253 = vunpack.c.l.b16 %v55
  %v254 = vunpack.c.l.b16 %v56
  %v255 = vunpack.c.l.b16 %v57
  %v256 = vunpack.c.l.b16 %v58
  %v257 = vunpack.c.l.b16 %v59
  %v258 = vunpack.c.l.b16 %v60
  %v259 = vunpack.c.l.b16 %v61
  %v260 = vunpack.c.l.b16 %v62
  %v261 = vunpack.c.l.b16 %v63
  %v262 = vunpack.c.l.b16 %v64
  %v263 = vunpack.c.l.b16 %v65
  %v264 = vunpack.c.l.b16 %v66
  %v265 = vunpack.c.l.b16 %v67
  %v266 = vunpack.c.l.b16 %v68
  %v267 = vunpack.c.l.b16 %v69
  %v268 = vunpack.c.l.b16 %v70
  %v269 = vunpack.c.l.b16 %v71
  %v270 = vunpack.c.l.b16 %v72
  %v271 = vunpack.c.l.b16 %v73
  %v272 = vunpack.c.l.b16 %v74
  %v273 = vunpack.c.l.b16 %v75
  %v274 = vunpack.c.l.b16 %v76
  %v275 = vunpack.c.l.b16 %v77
  %v276 = vunpack.c.l.b16 %v78
  %v277 = vunpack.c.l.b16 %v79
  %v278 = vunpack.c.l.b16 %v80
  %v279 = vunpack.c.l.b16 %v81
  %v280 = vunpack.c.l.b16 %v82
  %v281 = vunpack.c.l.b16 %v83
  %v282 = vunpack.c.l.b16 %v84
  %v283 = vunpack.c.l.b16 %v85
  %v284 = vunpack.c.l.b16 %v86
  %v285 = vunpack.c.l.b16 %v87
  %v286 = vunpack.c.l.b16 %v88
  %v287 = vunpack.c.l.b16 %v89
  %v288 = vunpack.c.l.b16 %v90
  %v289 = vunpack.c.l.b16 %v91
  %v290 = vunpack.c.l.b16 %v92
  %v291 = vunpack.c.l.b16 %v93
  %v292 = vunpack.c.l.b16 %v94
  %v293 = vunpack.c.l.b16 %v95
  %v294 = vunpack.c.l.b16 %v96
  %v295 = vunpack.c.l.b16 %v97
  %v296 = vunpack.c.l.b16 %v98
  %v297 = vpack.c.b16 %v226, %v225
  %v298 = vpack.c.b16 %v228, %v227
  %v299 = vpack.c.b16 %v230, %v229
  %v300 = vpack.c.b16 %v232, %v231
  %v301 = vpack.c.b16 %v234, %v233
  %v302 = vpack.c.b16 %v236, %v235
  %v303 = vpack.c.b16 %v238, %v237
  %v304 = vpack.c.b16 %v240, %v239
  %v305 = vpack.c.b16 %v242, %v241
  %v306 = vpack.c.b16 %v244, %v243
  %v307 = vpack.c.b16 %v246, %v245
  %v308 = vpack.c.b16 %v248, %v247
  %v309 = vpack.c.b16 %v250, %v249
  %v310 = vpack.c.b16 %v252, %v251
  %v311 = vpack.c.b16 %v254, %v253
  %v312 = vpack.c.b16 %v256, %v255
  %v313 = vpack.c.b16 %v258, %v257
  %v314 = vpack.c.b16 %v260, %v259
  %v315 = vpack.c.b16 %v262, %v261
  %v316 = vpack.c.b16 %v264, %v263
  %v317 = vpack.c.b16 %v266, %v265
  %v318 = vpack.c.b16 %v268, %v267
  %v319 = vpack.c.b16 %v270, %v269
  %v320 = vpack.c.b16 %v272, %v271
  %v321 = vpack.c.b16 %v274, %v273
  %v322 = vpack.c.b16 %v276, %v275
  %v323 = vpack.c.b16 %v278, %v277
  %v324 = vpack.c.b16 %v280, %v279
  %v325 = vpack.c.b16 %v282, %v281
  %v326 = vpack.c.b16 %v284, %v283
  %v327 = vpack.c.b16 %v286, %v285
  %v328 = vpack.c.b16 %v288, %v287
  %v329 = vpack.c.b16 %v290, %v289
  %v330 = vpack.c.b16 %v292, %v291
  %v331 = vpack.c.b16 %v294, %v293
  %v332 = vpack.c.b16 %v296, %v295
  %vm369 = vcmask 523264
  %v371 = vsel %vm369, %v139, 0
  %v374 = vsel %vm369, %v144, 0
  %376 = vmatpush.bf16.msra.mxu0 %v304
  %377 = vmatpush.bf16.msra.mxu0 %v303
  %378 = vmatpush.bf16.msra.mxu0 %v302
  %379 = vmatpush.bf16.msra.mxu0 %v301
  %380 = vmatpush.bf16.msra.mxu0 %v300
  %381 = vmatpush.bf16.msra.mxu0 %v299
  %382 = vmatpush.bf16.msra.mxu0 %v298
  %383 = vmatpush.bf16.msra.mxu0 %v297
  %384 = vmatmul.bf16.gmra.mxu0 %v135
  %v385 = vpop.f32.mrf.mxu0
  %v386 = vadd.f32 %v101, %v385
  %v387 = vpop.f32.mrf.mxu0
  %v388 = vadd.f32 %v101, %v387
  %389 = vmatmul.bf16.gmra.mxu0 %v140
  %v390 = vpop.f32.mrf.mxu0
  %v391 = vadd.f32 %v101, %v390
  %v392 = vpop.f32.mrf.mxu0
  %v393 = vadd.f32 %v101, %v392
  %394 = vdwg.mxu0
  %395 = vmatpush.bf16.msra.mxu0 %v312
  %396 = vmatpush.bf16.msra.mxu0 %v311
  %397 = vmatpush.bf16.msra.mxu0 %v310
  %398 = vmatpush.bf16.msra.mxu0 %v309
  %399 = vmatpush.bf16.msra.mxu0 %v308
  %400 = vmatpush.bf16.msra.mxu0 %v307
  %401 = vmatpush.bf16.msra.mxu0 %v306
  %402 = vmatpush.bf16.msra.mxu0 %v305
  %403 = vmatmul.bf16.gmra.mxu0 %v136
  %v404 = vpop.f32.mrf.mxu0
  %v405 = vadd.f32 %v386, %v404
  %v406 = vpop.f32.mrf.mxu0
  %v407 = vadd.f32 %v388, %v406
  %408 = vmatmul.bf16.gmra.mxu0 %v141
  %v409 = vpop.f32.mrf.mxu0
  %v410 = vadd.f32 %v391, %v409
  %v411 = vpop.f32.mrf.mxu0
  %v412 = vadd.f32 %v393, %v411
  %413 = vdwg.mxu0
  %414 = vmatpush.bf16.msra.mxu0 %v320
  %415 = vmatpush.bf16.msra.mxu0 %v319
  %416 = vmatpush.bf16.msra.mxu0 %v318
  %417 = vmatpush.bf16.msra.mxu0 %v317
  %418 = vmatpush.bf16.msra.mxu0 %v316
  %419 = vmatpush.bf16.msra.mxu0 %v315
  %420 = vmatpush.bf16.msra.mxu0 %v314
  %421 = vmatpush.bf16.msra.mxu0 %v313
  %422 = vmatmul.bf16.gmra.mxu0 %v137
  %v423 = vpop.f32.mrf.mxu0
  %v424 = vadd.f32 %v405, %v423
  %v425 = vpop.f32.mrf.mxu0
  %v426 = vadd.f32 %v407, %v425
  %427 = vmatmul.bf16.gmra.mxu0 %v142
  %v428 = vpop.f32.mrf.mxu0
  %v429 = vadd.f32 %v410, %v428
  %v430 = vpop.f32.mrf.mxu0
  %v431 = vadd.f32 %v412, %v430
  %432 = vdwg.mxu0
  %433 = vmatpush.bf16.msra.mxu0 %v328
  %434 = vmatpush.bf16.msra.mxu0 %v327
  %435 = vmatpush.bf16.msra.mxu0 %v326
  %436 = vmatpush.bf16.msra.mxu0 %v325
  %437 = vmatpush.bf16.msra.mxu0 %v324
  %438 = vmatpush.bf16.msra.mxu0 %v323
  %439 = vmatpush.bf16.msra.mxu0 %v322
  %440 = vmatpush.bf16.msra.mxu0 %v321
  %441 = vmatmul.bf16.gmra.mxu0 %v138
  %v442 = vpop.f32.mrf.mxu0
  %v443 = vadd.f32 %v424, %v442
  %v444 = vpop.f32.mrf.mxu0
  %v445 = vadd.f32 %v426, %v444
  %446 = vmatmul.bf16.gmra.mxu0 %v143
  %v447 = vpop.f32.mrf.mxu0
  %v448 = vadd.f32 %v429, %v447
  %v449 = vpop.f32.mrf.mxu0
  %v450 = vadd.f32 %v431, %v449
  %451 = vdwg.mxu0
  %452 = vmatpush.bf16.msra.mxu0 0
  %453 = vmatpush.bf16.msra.mxu0 0
  %454 = vmatpush.bf16.msra.mxu0 0
  %455 = vmatpush.bf16.msra.mxu0 0
  %456 = vmatpush.bf16.msra.mxu0 %v332
  %457 = vmatpush.bf16.msra.mxu0 %v331
  %458 = vmatpush.bf16.msra.mxu0 %v330
  %459 = vmatpush.bf16.msra.mxu0 %v329
  %460 = vmatmul.bf16.gmra.mxu0 %v371
  %v461 = vpop.f32.mrf.mxu0
  %v462 = vadd.f32 %v443, %v461
  %v463 = vpop.f32.mrf.mxu0
  %v464 = vadd.f32 %v445, %v463
  %465 = vmatmul.bf16.gmra.mxu0 %v374
  %v466 = vpop.f32.mrf.mxu0
  %v467 = vadd.f32 %v448, %v466
  %v468 = vpop.f32.mrf.mxu0
  %v469 = vadd.f32 %v450, %v468
  %470 = vdwg.mxu0
  %v471 = vmin.f32 %v462, 0.0
  %v472 = vmin.f32 %v464, 0.0
  %v473 = vmin.f32 %v467, 0.0
  %v474 = vmin.f32 %v469, 0.0
  %v475 = vmul.f32 %v471, 1.442695
  %v476 = vpow.pop %v475
  %v477 = vmul.f32 %v472, 1.442695
  %v478 = vpow.pop %v477
  %v479 = vmul.f32 %v473, 1.442695
  %v480 = vpow.pop %v479
  %v481 = vmul.f32 %v474, 1.442695
  %v482 = vpow.pop %v481
  %v483 = vsub.f32 %v476, 1.0
  %v484 = vsub.f32 %v478, 1.0
  %v485 = vsub.f32 %v480, 1.0
  %v486 = vsub.f32 %v482, 1.0
  %vm487 = vcmp.gt.f32.partialorder %v462, 0.0
  %vm488 = vcmp.gt.f32.partialorder %v464, 0.0
  %vm489 = vcmp.gt.f32.partialorder %v467, 0.0
  %vm490 = vcmp.gt.f32.partialorder %v469, 0.0
  %v491 = vsel %vm487, %v462, %v483
  %v492 = vsel %vm488, %v464, %v484
  %v493 = vsel %vm489, %v467, %v485
  %v494 = vsel %vm490, %v469, %v486
  %v495 = vpack.c.bf16 %v491, %v491
  %v496 = vpack.c.bf16 %v492, %v492
  %v497 = vpack.c.bf16 %v493, %v493
  %v498 = vpack.c.bf16 %v494, %v494
  %499 = vst [vmem:[%s3] sm:$0xf] %v495
  %500 = vst [vmem:[%s3 + $0x4] sm:$0xf] %v496
  %501 = vst [vmem:[%s3 + $0x8] sm:$0xf] %v497
  %502 = vst [vmem:[%s3 + $0xc] sm:$0xf] %v498
  // Predicated region
  $region14: #{_lambda_.7} parent=0 // pred_check
    _
  $region15: #{_lambda_.7} parent=0 // pred_check_branch
    %504 = sbr.rel (0) target = $region17
  $region16: #{_lambda_.7} parent=0 // pred_region
    _
  $region17: #{_lambda_.7} parent=0 // pred_fallthru
    _
  // Predicated region
  $region18: #{_lambda_.7} parent=0 // pred_check
    _
  $region19: #{_lambda_.7} parent=0 // pred_check_branch
    %506 = sbr.rel (0) target = $region21
  $region20: #{_lambda_.7} parent=0 // pred_region
    _
  $region21: #{_lambda_.7} parent=0 // pred_fallthru
    _

// kernel: _lambda_.8
$region0: #{_lambda_.8}
  #allocation0 [shape = 'u32[]', space=smem, size = 0x4, offset = 0x4, fixed_abs, tag = 'smem constant byte address 0x4 - core index']
  #allocation1 [shape = 'u32[72,128]{1,0:T(1,128)}', space=vmem, size = 0x9000, scoped, tag = 'internal scratch']
  %s0 = inlined_call_operand.vmem [shape: bf16[8,1152], index: 0, kind: input, shape index: {}]
  %s1 = inlined_call_operand.vmem [shape: bf16[1152,128], index: 1, kind: input, shape index: {}]
  %s2 = inlined_call_operand.vmem [shape: f32[1,128], index: 2, kind: input, shape index: {}]
  %s3 = inlined_call_operand.vmem [shape: bf16[8,128], index: 3, kind: output, shape index: {}]
  %s4 = sld [smem:[#allocation0]]
  $region22: #{_lambda_.8} parent=0
    _
  %s6 = ssub.s32 1, %s4
  %s7 = scalar_select 0, %s6, %s4
  // Predicated region
  $region2: #{_lambda_.8} parent=0 // pred_check
    _
  $region3: #{_lambda_.8} parent=0 // pred_check_branch
    %9 = sbr.rel (0) target = $region5
  $region4: #{_lambda_.8} parent=0 // pred_region
    _
  $region5: #{_lambda_.8} parent=0 // pred_fallthru
    _
  // Predicated region
  $region6: #{_lambda_.8} parent=0 // pred_check
    _
  $region7: #{_lambda_.8} parent=0 // pred_check_branch
    %11 = sbr.rel (0) target = $region9
  $region8: #{_lambda_.8} parent=0 // pred_region
    _
  $region9: #{_lambda_.8} parent=0 // pred_fallthru
    _
  // Predicated region
  $region10: #{_lambda_.8} parent=0 // pred_check
    _
  $region11: #{_lambda_.8} parent=0 // pred_check_branch
    %13 = sbr.rel (0) target = $region13
  $region12: #{_lambda_.8} parent=0 // pred_region
    _
  $region13: #{_lambda_.8} parent=0 // pred_fallthru
    _
  %v14 = vld [vmem:[%s0] sm:$0xff]
  %v15 = vld [vmem:[%s0 + $0x8] sm:$0xff]
  %v16 = vld [vmem:[%s0 + $0x10] sm:$0xff]
  %v17 = vld [vmem:[%s0 + $0x18] sm:$0xff]
  %v18 = vld [vmem:[%s0 + $0x20] sm:$0xf]
  %v19 = vld [vmem:[%s1] sm:$0xf]
  %v20 = vld [vmem:[%s1 + $0x4] sm:$0xf]
  %v21 = vld [vmem:[%s1 + $0x8] sm:$0xf]
  %v22 = vld [vmem:[%s1 + $0xc] sm:$0xf]
  %v23 = vld [vmem:[%s1 + $0x10] sm:$0xf]
  %v24 = vld [vmem:[%s1 + $0x14] sm:$0xf]
  %v25 = vld [vmem:[%s1 + $0x18] sm:$0xf]
  %v26 = vld [vmem:[%s1 + $0x1c] sm:$0xf]
  %v27 = vld [vmem:[%s1 + $0x20] sm:$0xf]
  %v28 = vld [vmem:[%s1 + $0x24] sm:$0xf]
  %v29 = vld [vmem:[%s1 + $0x28] sm:$0xf]
  %v30 = vld [vmem:[%s1 + $0x2c] sm:$0xf]
  %v31 = vld [vmem:[%s1 + $0x30] sm:$0xf]
  %v32 = vld [vmem:[%s1 + $0x34] sm:$0xf]
  %v33 = vld [vmem:[%s1 + $0x38] sm:$0xf]
  %v34 = vld [vmem:[%s1 + $0x3c] sm:$0xf]
  %v35 = vld [vmem:[%s1 + $0x40] sm:$0xf]
  %v36 = vld [vmem:[%s1 + $0x44] sm:$0xf]
  %v37 = vld [vmem:[%s1 + $0x48] sm:$0xf]
  %v38 = vld [vmem:[%s1 + $0x4c] sm:$0xf]
  %v39 = vld [vmem:[%s1 + $0x50] sm:$0xf]
  %v40 = vld [vmem:[%s1 + $0x54] sm:$0xf]
  %v41 = vld [vmem:[%s1 + $0x58] sm:$0xf]
  %v42 = vld [vmem:[%s1 + $0x5c] sm:$0xf]
  %v43 = vld [vmem:[%s1 + $0x60] sm:$0xf]
  %v44 = vld [vmem:[%s1 + $0x64] sm:$0xf]
  %v45 = vld [vmem:[%s1 + $0x68] sm:$0xf]
  %v46 = vld [vmem:[%s1 + $0x6c] sm:$0xf]
  %v47 = vld [vmem:[%s1 + $0x70] sm:$0xf]
  %v48 = vld [vmem:[%s1 + $0x74] sm:$0xf]
  %v49 = vld [vmem:[%s1 + $0x78] sm:$0xf]
  %v50 = vld [vmem:[%s1 + $0x7c] sm:$0xf]
  %v51 = vld [vmem:[%s1 + $0x80] sm:$0xf]
  %v52 = vld [vmem:[%s1 + $0x84] sm:$0xf]
  %v53 = vld [vmem:[%s1 + $0x88] sm:$0xf]
  %v54 = vld [vmem:[%s1 + $0x8c] sm:$0xf]
  %v55 = vld [vmem:[%s1 + $0x90] sm:$0xf]
  %v56 = vld [vmem:[%s1 + $0x94] sm:$0xf]
  %v57 = vld [vmem:[%s1 + $0x98] sm:$0xf]
  %v58 = vld [vmem:[%s1 + $0x9c] sm:$0xf]
  %v59 = vld [vmem:[%s1 + $0xa0] sm:$0xf]
  %v60 = vld [vmem:[%s1 + $0xa4] sm:$0xf]
  %v61 = vld [vmem:[%s1 + $0xa8] sm:$0xf]
  %v62 = vld [vmem:[%s1 + $0xac] sm:$0xf]
  %v63 = vld [vmem:[%s1 + $0xb0] sm:$0xf]
  %v64 = vld [vmem:[%s1 + $0xb4] sm:$0xf]
  %v65 = vld [vmem:[%s1 + $0xb8] sm:$0xf]
  %v66 = vld [vmem:[%s1 + $0xbc] sm:$0xf]
  %v67 = vld [vmem:[%s1 + $0xc0] sm:$0xf]
  %v68 = vld [vmem:[%s1 + $0xc4] sm:$0xf]
  %v69 = vld [vmem:[%s1 + $0xc8] sm:$0xf]
  %v70 = vld [vmem:[%s1 + $0xcc] sm:$0xf]
  %v71 = vld [vmem:[%s1 + $0xd0] sm:$0xf]
  %v72 = vld [vmem:[%s1 + $0xd4] sm:$0xf]
  %v73 = vld [vmem:[%s1 + $0xd8] sm:$0xf]
  %v74 = vld [vmem:[%s1 + $0xdc] sm:$0xf]
  %v75 = vld [vmem:[%s1 + $0xe0] sm:$0xf]
  %v76 = vld [vmem:[%s1 + $0xe4] sm:$0xf]
  %v77 = vld [vmem:[%s1 + $0xe8] sm:$0xf]
  %v78 = vld [vmem:[%s1 + $0xec] sm:$0xf]
  %v79 = vld [vmem:[%s1 + $0xf0] sm:$0xf]
  %v80 = vld [vmem:[%s1 + $0xf4] sm:$0xf]
  %v81 = vld [vmem:[%s1 + $0xf8] sm:$0xf]
  %v82 = vld [vmem:[%s1 + $0xfc] sm:$0xf]
  %v83 = vld [vmem:[%s1 + $0x100] sm:$0xf]
  %v84 = vld [vmem:[%s1 + $0x104] sm:$0xf]
  %v85 = vld [vmem:[%s1 + $0x108] sm:$0xf]
  %v86 = vld [vmem:[%s1 + $0x10c] sm:$0xf]
  %v87 = vld [vmem:[%s1 + $0x110] sm:$0xf]
  %v88 = vld [vmem:[%s1 + $0x114] sm:$0xf]
  %v89 = vld [vmem:[%s1 + $0x118] sm:$0xf]
  %v90 = vld [vmem:[%s1 + $0x11c] sm:$0xf]
  %v91 = vld [vmem:[%s1 + $0x120] sm:$0xf]
  %v92 = vld [vmem:[%s1 + $0x124] sm:$0xf]
  %v93 = vld [vmem:[%s1 + $0x128] sm:$0xf]
  %v94 = vld [vmem:[%s1 + $0x12c] sm:$0xf]
  %v95 = vld [vmem:[%s1 + $0x130] sm:$0xf]
  %v96 = vld [vmem:[%s1 + $0x134] sm:$0xf]
  %v97 = vld [vmem:[%s1 + $0x138] sm:$0xf]
  %v98 = vld [vmem:[%s1 + $0x13c] sm:$0xf]
  %v99 = vld [vmem:[%s1 + $0x140] sm:$0xf]
  %v100 = vld [vmem:[%s1 + $0x144] sm:$0xf]
  %v101 = vld [vmem:[%s1 + $0x148] sm:$0xf]
  %v102 = vld [vmem:[%s1 + $0x14c] sm:$0xf]
  %v103 = vld [vmem:[%s1 + $0x150] sm:$0xf]
  %v104 = vld [vmem:[%s1 + $0x154] sm:$0xf]
  %v105 = vld [vmem:[%s1 + $0x158] sm:$0xf]
  %v106 = vld [vmem:[%s1 + $0x15c] sm:$0xf]
  %v107 = vld [vmem:[%s1 + $0x160] sm:$0xf]
  %v108 = vld [vmem:[%s1 + $0x164] sm:$0xf]
  %v109 = vld [vmem:[%s1 + $0x168] sm:$0xf]
  %v110 = vld [vmem:[%s1 + $0x16c] sm:$0xf]
  %v111 = vld [vmem:[%s1 + $0x170] sm:$0xf]
  %v112 = vld [vmem:[%s1 + $0x174] sm:$0xf]
  %v113 = vld [vmem:[%s1 + $0x178] sm:$0xf]
  %v114 = vld [vmem:[%s1 + $0x17c] sm:$0xf]
  %v115 = vld [vmem:[%s1 + $0x180] sm:$0xf]
  %v116 = vld [vmem:[%s1 + $0x184] sm:$0xf]
  %v117 = vld [vmem:[%s1 + $0x188] sm:$0xf]
  %v118 = vld [vmem:[%s1 + $0x18c] sm:$0xf]
  %v119 = vld [vmem:[%s1 + $0x190] sm:$0xf]
  %v120 = vld [vmem:[%s1 + $0x194] sm:$0xf]
  %v121 = vld [vmem:[%s1 + $0x198] sm:$0xf]
  %v122 = vld [vmem:[%s1 + $0x19c] sm:$0xf]
  %v123 = vld [vmem:[%s1 + $0x1a0] sm:$0xf]
  %v124 = vld [vmem:[%s1 + $0x1a4] sm:$0xf]
  %v125 = vld [vmem:[%s1 + $0x1a8] sm:$0xf]
  %v126 = vld [vmem:[%s1 + $0x1ac] sm:$0xf]
  %v127 = vld [vmem:[%s1 + $0x1b0] sm:$0xf]
  %v128 = vld [vmem:[%s1 + $0x1b4] sm:$0xf]
  %v129 = vld [vmem:[%s1 + $0x1b8] sm:$0xf]
  %v130 = vld [vmem:[%s1 + $0x1bc] sm:$0xf]
  %v131 = vld [vmem:[%s1 + $0x1c0] sm:$0xf]
  %v132 = vld [vmem:[%s1 + $0x1c4] sm:$0xf]
  %v133 = vld [vmem:[%s1 + $0x1c8] sm:$0xf]
  %v134 = vld [vmem:[%s1 + $0x1cc] sm:$0xf]
  %v135 = vld [vmem:[%s1 + $0x1d0] sm:$0xf]
  %v136 = vld [vmem:[%s1 + $0x1d4] sm:$0xf]
  %v137 = vld [vmem:[%s1 + $0x1d8] sm:$0xf]
  %v138 = vld [vmem:[%s1 + $0x1dc] sm:$0xf]
  %v139 = vld [vmem:[%s1 + $0x1e0] sm:$0xf]
  %v140 = vld [vmem:[%s1 + $0x1e4] sm:$0xf]
  %v141 = vld [vmem:[%s1 + $0x1e8] sm:$0xf]
  %v142 = vld [vmem:[%s1 + $0x1ec] sm:$0xf]
  %v143 = vld [vmem:[%s1 + $0x1f0] sm:$0xf]
  %v144 = vld [vmem:[%s1 + $0x1f4] sm:$0xf]
  %v145 = vld [vmem:[%s1 + $0x1f8] sm:$0xf]
  %v146 = vld [vmem:[%s1 + $0x1fc] sm:$0xf]
  %v147 = vld [vmem:[%s1 + $0x200] sm:$0xf]
  %v148 = vld [vmem:[%s1 + $0x204] sm:$0xf]
  %v149 = vld [vmem:[%s1 + $0x208] sm:$0xf]
  %v150 = vld [vmem:[%s1 + $0x20c] sm:$0xf]
  %v151 = vld [vmem:[%s1 + $0x210] sm:$0xf]
  %v152 = vld [vmem:[%s1 + $0x214] sm:$0xf]
  %v153 = vld [vmem:[%s1 + $0x218] sm:$0xf]
  %v154 = vld [vmem:[%s1 + $0x21c] sm:$0xf]
  %v155 = vld [vmem:[%s1 + $0x220] sm:$0xf]
  %v156 = vld [vmem:[%s1 + $0x224] sm:$0xf]
  %v157 = vld [vmem:[%s1 + $0x228] sm:$0xf]
  %v158 = vld [vmem:[%s1 + $0x22c] sm:$0xf]
  %v159 = vld [vmem:[%s1 + $0x230] sm:$0xf]
  %v160 = vld [vmem:[%s1 + $0x234] sm:$0xf]
  %v161 = vld [vmem:[%s1 + $0x238] sm:$0xf]
  %v162 = vld [vmem:[%s1 + $0x23c] sm:$0xf]
  %v163 = vld [vmem:[%s2] sm:$0x1]
  %v165 = vperm.slane %v163, 0
  %v172 = vunpack.c.l.b16 %v14
  %v173 = vunpack.c.h.b16 %v14
  %v174 = vunpack.c.l.b16 %v15
  %v175 = vunpack.c.h.b16 %v15
  %v176 = vunpack.c.l.b16 %v16
  %v177 = vunpack.c.h.b16 %v16
  %v178 = vunpack.c.l.b16 %v17
  %v179 = vunpack.c.h.b16 %v17
  %v180 = vunpack.c.l.b16 %v18
  %v181 = vpack.c.b16 %v172, %v172
  %v182 = vpack.c.b16 %v173, %v173
  %v183 = vpack.c.b16 %v174, %v174
  %v184 = vpack.c.b16 %v175, %v175
  %v185 = vpack.c.b16 %v176, %v176
  %v186 = vpack.c.b16 %v177, %v177
  %v187 = vpack.c.b16 %v178, %v178
  %v188 = vpack.c.b16 %v179, %v179
  %v189 = vpack.c.b16 %v180, %v180
  %v343 = vunpack.c.l.b16 %v19
  %v344 = vunpack.c.l.b16 %v20
  %v345 = vunpack.c.l.b16 %v21
  %v346 = vunpack.c.l.b16 %v22
  %v347 = vunpack.c.l.b16 %v23
  %v348 = vunpack.c.l.b16 %v24
  %v349 = vunpack.c.l.b16 %v25
  %v350 = vunpack.c.l.b16 %v26
  %v351 = vunpack.c.l.b16 %v27
  %v352 = vunpack.c.l.b16 %v28
  %v353 = vunpack.c.l.b16 %v29
  %v354 = vunpack.c.l.b16 %v30
  %v355 = vunpack.c.l.b16 %v31
  %v356 = vunpack.c.l.b16 %v32
  %v357 = vunpack.c.l.b16 %v33
  %v358 = vunpack.c.l.b16 %v34
  %v359 = vunpack.c.l.b16 %v35
  %v360 = vunpack.c.l.b16 %v36
  %v361 = vunpack.c.l.b16 %v37
  %v362 = vunpack.c.l.b16 %v38
  %v363 = vunpack.c.l.b16 %v39
  %v364 = vunpack.c.l.b16 %v40
  %v365 = vunpack.c.l.b16 %v41
  %v366 = vunpack.c.l.b16 %v42
  %v367 = vunpack.c.l.b16 %v43
  %v368 = vunpack.c.l.b16 %v44
  %v369 = vunpack.c.l.b16 %v45
  %v370 = vunpack.c.l.b16 %v46
  %v371 = vunpack.c.l.b16 %v47
  %v372 = vunpack.c.l.b16 %v48
  %v373 = vunpack.c.l.b16 %v49
  %v374 = vunpack.c.l.b16 %v50
  %v375 = vunpack.c.l.b16 %v51
  %v376 = vunpack.c.l.b16 %v52
  %v377 = vunpack.c.l.b16 %v53
  %v378 = vunpack.c.l.b16 %v54
  %v379 = vunpack.c.l.b16 %v55
  %v380 = vunpack.c.l.b16 %v56
  %v381 = vunpack.c.l.b16 %v57
  %v382 = vunpack.c.l.b16 %v58
  %v383 = vunpack.c.l.b16 %v59
  %v384 = vunpack.c.l.b16 %v60
  %v385 = vunpack.c.l.b16 %v61
  %v386 = vunpack.c.l.b16 %v62
  %v387 = vunpack.c.l.b16 %v63
  %v388 = vunpack.c.l.b16 %v64
  %v389 = vunpack.c.l.b16 %v65
  %v390 = vunpack.c.l.b16 %v66
  %v391 = vunpack.c.l.b16 %v67
  %v392 = vunpack.c.l.b16 %v68
  %v393 = vunpack.c.l.b16 %v69
  %v394 = vunpack.c.l.b16 %v70
  %v395 = vunpack.c.l.b16 %v71
  %v396 = vunpack.c.l.b16 %v72
  %v397 = vunpack.c.l.b16 %v73
  %v398 = vunpack.c.l.b16 %v74
  %v399 = vunpack.c.l.b16 %v75
  %v400 = vunpack.c.l.b16 %v76
  %v401 = vunpack.c.l.b16 %v77
  %v402 = vunpack.c.l.b16 %v78
  %v403 = vunpack.c.l.b16 %v79
  %v404 = vunpack.c.l.b16 %v80
  %v405 = vunpack.c.l.b16 %v81
  %v406 = vunpack.c.l.b16 %v82
  %v407 = vunpack.c.l.b16 %v83
  %v408 = vunpack.c.l.b16 %v84
  %v409 = vunpack.c.l.b16 %v85
  %v410 = vunpack.c.l.b16 %v86
  %v411 = vunpack.c.l.b16 %v87
  %v412 = vunpack.c.l.b16 %v88
  %v413 = vunpack.c.l.b16 %v89
  %v414 = vunpack.c.l.b16 %v90
  %v415 = vunpack.c.l.b16 %v91
  %v416 = vunpack.c.l.b16 %v92
  %v417 = vunpack.c.l.b16 %v93
  %v418 = vunpack.c.l.b16 %v94
  %v419 = vunpack.c.l.b16 %v95
  %v420 = vunpack.c.l.b16 %v96
  %v421 = vunpack.c.l.b16 %v97
  %v422 = vunpack.c.l.b16 %v98
  %v423 = vunpack.c.l.b16 %v99
  %v424 = vunpack.c.l.b16 %v100
  %v425 = vunpack.c.l.b16 %v101
  %v426 = vunpack.c.l.b16 %v102
  %v427 = vunpack.c.l.b16 %v103
  %v428 = vunpack.c.l.b16 %v104
  %v429 = vunpack.c.l.b16 %v105
  %v430 = vunpack.c.l.b16 %v106
  %v431 = vunpack.c.l.b16 %v107
  %v432 = vunpack.c.l.b16 %v108
  %v433 = vunpack.c.l.b16 %v109
  %v434 = vunpack.c.l.b16 %v110
  %v435 = vunpack.c.l.b16 %v111
  %v436 = vunpack.c.l.b16 %v112
  %v437 = vunpack.c.l.b16 %v113
  %v438 = vunpack.c.l.b16 %v114
  %v439 = vunpack.c.l.b16 %v115
  %v440 = vunpack.c.l.b16 %v116
  %v441 = vunpack.c.l.b16 %v117
  %v442 = vunpack.c.l.b16 %v118
  %v443 = vunpack.c.l.b16 %v119
  %v444 = vunpack.c.l.b16 %v120
  %v445 = vunpack.c.l.b16 %v121
  %v446 = vunpack.c.l.b16 %v122
  %v447 = vunpack.c.l.b16 %v123
  %v448 = vunpack.c.l.b16 %v124
  %v449 = vunpack.c.l.b16 %v125
  %v450 = vunpack.c.l.b16 %v126
  %v451 = vunpack.c.l.b16 %v127
  %v452 = vunpack.c.l.b16 %v128
  %v453 = vunpack.c.l.b16 %v129
  %v454 = vunpack.c.l.b16 %v130
  %v455 = vunpack.c.l.b16 %v131
  %v456 = vunpack.c.l.b16 %v132
  %v457 = vunpack.c.l.b16 %v133
  %v458 = vunpack.c.l.b16 %v134
  %v459 = vunpack.c.l.b16 %v135
  %v460 = vunpack.c.l.b16 %v136
  %v461 = vunpack.c.l.b16 %v137
  %v462 = vunpack.c.l.b16 %v138
  %v463 = vunpack.c.l.b16 %v139
  %v464 = vunpack.c.l.b16 %v140
  %v465 = vunpack.c.l.b16 %v141
  %v466 = vunpack.c.l.b16 %v142
  %v467 = vunpack.c.l.b16 %v143
  %v468 = vunpack.c.l.b16 %v144
  %v469 = vunpack.c.l.b16 %v145
  %v470 = vunpack.c.l.b16 %v146
  %v471 = vunpack.c.l.b16 %v147
  %v472 = vunpack.c.l.b16 %v148
  %v473 = vunpack.c.l.b16 %v149
  %v474 = vunpack.c.l.b16 %v150
  %v475 = vunpack.c.l.b16 %v151
  %v476 = vunpack.c.l.b16 %v152
  %v477 = vunpack.c.l.b16 %v153
  %v478 = vunpack.c.l.b16 %v154
  %v479 = vunpack.c.l.b16 %v155
  %v480 = vunpack.c.l.b16 %v156
  %v481 = vunpack.c.l.b16 %v157
  %v482 = vunpack.c.l.b16 %v158
  %v483 = vunpack.c.l.b16 %v159
  %v484 = vunpack.c.l.b16 %v160
  %v485 = vunpack.c.l.b16 %v161
  %v486 = vunpack.c.l.b16 %v162
  %v487 = vpack.c.b16 %v344, %v343
  %v488 = vpack.c.b16 %v346, %v345
  %v489 = vpack.c.b16 %v348, %v347
  %v490 = vpack.c.b16 %v350, %v349
  %v491 = vpack.c.b16 %v352, %v351
  %v492 = vpack.c.b16 %v354, %v353
  %v493 = vpack.c.b16 %v356, %v355
  %v494 = vpack.c.b16 %v358, %v357
  %v495 = vpack.c.b16 %v360, %v359
  %v496 = vpack.c.b16 %v362, %v361
  %v497 = vpack.c.b16 %v364, %v363
  %v498 = vpack.c.b16 %v366, %v365
  %v499 = vpack.c.b16 %v368, %v367
  %v500 = vpack.c.b16 %v370, %v369
  %v501 = vpack.c.b16 %v372, %v371
  %v502 = vpack.c.b16 %v374, %v373
  %v503 = vpack.c.b16 %v376, %v375
  %v504 = vpack.c.b16 %v378, %v377
  %v505 = vpack.c.b16 %v380, %v379
  %v506 = vpack.c.b16 %v382, %v381
  %v507 = vpack.c.b16 %v384, %v383
  %v508 = vpack.c.b16 %v386, %v385
  %v509 = vpack.c.b16 %v388, %v387
  %v510 = vpack.c.b16 %v390, %v389
  %v511 = vpack.c.b16 %v392, %v391
  %v512 = vpack.c.b16 %v394, %v393
  %v513 = vpack.c.b16 %v396, %v395
  %v514 = vpack.c.b16 %v398, %v397
  %v515 = vpack.c.b16 %v400, %v399
  %v516 = vpack.c.b16 %v402, %v401
  %v517 = vpack.c.b16 %v404, %v403
  %v518 = vpack.c.b16 %v406, %v405
  %v519 = vpack.c.b16 %v408, %v407
  %v520 = vpack.c.b16 %v410, %v409
  %v521 = vpack.c.b16 %v412, %v411
  %v522 = vpack.c.b16 %v414, %v413
  %v523 = vpack.c.b16 %v416, %v415
  %v524 = vpack.c.b16 %v418, %v417
  %v525 = vpack.c.b16 %v420, %v419
  %v526 = vpack.c.b16 %v422, %v421
  %v527 = vpack.c.b16 %v424, %v423
  %v528 = vpack.c.b16 %v426, %v425
  %v529 = vpack.c.b16 %v428, %v427
  %v530 = vpack.c.b16 %v430, %v429
  %v531 = vpack.c.b16 %v432, %v431
  %v532 = vpack.c.b16 %v434, %v433
  %v533 = vpack.c.b16 %v436, %v435
  %v534 = vpack.c.b16 %v438, %v437
  %v535 = vpack.c.b16 %v440, %v439
  %v536 = vpack.c.b16 %v442, %v441
  %v537 = vpack.c.b16 %v444, %v443
  %v538 = vpack.c.b16 %v446, %v445
  %v539 = vpack.c.b16 %v448, %v447
  %v540 = vpack.c.b16 %v450, %v449
  %v541 = vpack.c.b16 %v452, %v451
  %v542 = vpack.c.b16 %v454, %v453
  %v543 = vpack.c.b16 %v456, %v455
  %v544 = vpack.c.b16 %v458, %v457
  %v545 = vpack.c.b16 %v460, %v459
  %v546 = vpack.c.b16 %v462, %v461
  %v547 = vpack.c.b16 %v464, %v463
  %v548 = vpack.c.b16 %v466, %v465
  %v549 = vpack.c.b16 %v468, %v467
  %v550 = vpack.c.b16 %v470, %v469
  %v551 = vpack.c.b16 %v472, %v471
  %v552 = vpack.c.b16 %v474, %v473
  %v553 = vpack.c.b16 %v476, %v475
  %v554 = vpack.c.b16 %v478, %v477
  %v555 = vpack.c.b16 %v480, %v479
  %v556 = vpack.c.b16 %v482, %v481
  %v557 = vpack.c.b16 %v484, %v483
  %v558 = vpack.c.b16 %v486, %v485
  %631 = vmatpush.bf16.msra.mxu0 %v494
  %632 = vmatpush.bf16.msra.mxu0 %v493
  %633 = vmatpush.bf16.msra.mxu0 %v492
  %634 = vmatpush.bf16.msra.mxu0 %v491
  %635 = vmatpush.bf16.msra.mxu0 %v490
  %636 = vmatpush.bf16.msra.mxu0 %v489
  %637 = vmatpush.bf16.msra.mxu0 %v488
  %638 = vmatpush.bf16.msra.mxu0 %v487
  %639 = vmatmul.bf16.gmra.mxu0 %v181
  %v640 = vpop.f32.mrf.mxu0
  %v641 = vadd.f32 %v165, %v640
  %v642 = vpop.f32.mrf.mxu0
  %643 = vdwg.mxu0
  %644 = vmatpush.bf16.msra.mxu0 %v502
  %645 = vmatpush.bf16.msra.mxu0 %v501
  %646 = vmatpush.bf16.msra.mxu0 %v500
  %647 = vmatpush.bf16.msra.mxu0 %v499
  %648 = vmatpush.bf16.msra.mxu0 %v498
  %649 = vmatpush.bf16.msra.mxu0 %v497
  %650 = vmatpush.bf16.msra.mxu0 %v496
  %651 = vmatpush.bf16.msra.mxu0 %v495
  %652 = vmatmul.bf16.gmra.mxu0 %v182
  %v653 = vpop.f32.mrf.mxu0
  %v654 = vadd.f32 %v641, %v653
  %v655 = vpop.f32.mrf.mxu0
  %656 = vdwg.mxu0
  %657 = vmatpush.bf16.msra.mxu0 %v510
  %658 = vmatpush.bf16.msra.mxu0 %v509
  %659 = vmatpush.bf16.msra.mxu0 %v508
  %660 = vmatpush.bf16.msra.mxu0 %v507
  %661 = vmatpush.bf16.msra.mxu0 %v506
  %662 = vmatpush.bf16.msra.mxu0 %v505
  %663 = vmatpush.bf16.msra.mxu0 %v504
  %664 = vmatpush.bf16.msra.mxu0 %v503
  %665 = vmatmul.bf16.gmra.mxu0 %v183
  %v666 = vpop.f32.mrf.mxu0
  %v667 = vadd.f32 %v654, %v666
  %v668 = vpop.f32.mrf.mxu0
  %669 = vdwg.mxu0
  %670 = vmatpush.bf16.msra.mxu0 %v518
  %671 = vmatpush.bf16.msra.mxu0 %v517
  %672 = vmatpush.bf16.msra.mxu0 %v516
  %673 = vmatpush.bf16.msra.mxu0 %v515
  %674 = vmatpush.bf16.msra.mxu0 %v514
  %675 = vmatpush.bf16.msra.mxu0 %v513
  %676 = vmatpush.bf16.msra.mxu0 %v512
  %677 = vmatpush.bf16.msra.mxu0 %v511
  %678 = vmatmul.bf16.gmra.mxu0 %v184
  %v679 = vpop.f32.mrf.mxu0
  %v680 = vadd.f32 %v667, %v679
  %v681 = vpop.f32.mrf.mxu0
  %682 = vdwg.mxu0
  %683 = vmatpush.bf16.msra.mxu0 %v526
  %684 = vmatpush.bf16.msra.mxu0 %v525
  %685 = vmatpush.bf16.msra.mxu0 %v524
  %686 = vmatpush.bf16.msra.mxu0 %v523
  %687 = vmatpush.bf16.msra.mxu0 %v522
  %688 = vmatpush.bf16.msra.mxu0 %v521
  %689 = vmatpush.bf16.msra.mxu0 %v520
  %690 = vmatpush.bf16.msra.mxu0 %v519
  %691 = vmatmul.bf16.gmra.mxu0 %v185
  %v692 = vpop.f32.mrf.mxu0
  %v693 = vadd.f32 %v680, %v692
  %v694 = vpop.f32.mrf.mxu0
  %695 = vdwg.mxu0
  %696 = vmatpush.bf16.msra.mxu0 %v534
  %697 = vmatpush.bf16.msra.mxu0 %v533
  %698 = vmatpush.bf16.msra.mxu0 %v532
  %699 = vmatpush.bf16.msra.mxu0 %v531
  %700 = vmatpush.bf16.msra.mxu0 %v530
  %701 = vmatpush.bf16.msra.mxu0 %v529
  %702 = vmatpush.bf16.msra.mxu0 %v528
  %703 = vmatpush.bf16.msra.mxu0 %v527
  %704 = vmatmul.bf16.gmra.mxu0 %v186
  %v705 = vpop.f32.mrf.mxu0
  %v706 = vadd.f32 %v693, %v705
  %v707 = vpop.f32.mrf.mxu0
  %708 = vdwg.mxu0
  %709 = vmatpush.bf16.msra.mxu0 %v542
  %710 = vmatpush.bf16.msra.mxu0 %v541
  %711 = vmatpush.bf16.msra.mxu0 %v540
  %712 = vmatpush.bf16.msra.mxu0 %v539
  %713 = vmatpush.bf16.msra.mxu0 %v538
  %714 = vmatpush.bf16.msra.mxu0 %v537
  %715 = vmatpush.bf16.msra.mxu0 %v536
  %716 = vmatpush.bf16.msra.mxu0 %v535
  %717 = vmatmul.bf16.gmra.mxu0 %v187
  %v718 = vpop.f32.mrf.mxu0
  %v719 = vadd.f32 %v706, %v718
  %v720 = vpop.f32.mrf.mxu0
  %721 = vdwg.mxu0
  %722 = vmatpush.bf16.msra.mxu0 %v550
  %723 = vmatpush.bf16.msra.mxu0 %v549
  %724 = vmatpush.bf16.msra.mxu0 %v548
  %725 = vmatpush.bf16.msra.mxu0 %v547
  %726 = vmatpush.bf16.msra.mxu0 %v546
  %727 = vmatpush.bf16.msra.mxu0 %v545
  %728 = vmatpush.bf16.msra.mxu0 %v544
  %729 = vmatpush.bf16.msra.mxu0 %v543
  %730 = vmatmul.bf16.gmra.mxu0 %v188
  %v731 = vpop.f32.mrf.mxu0
  %v732 = vadd.f32 %v719, %v731
  %v733 = vpop.f32.mrf.mxu0
  %734 = vdwg.mxu0
  %735 = vmatpush.bf16.msra.mxu0 %v558
  %736 = vmatpush.bf16.msra.mxu0 %v557
  %737 = vmatpush.bf16.msra.mxu0 %v556
  %738 = vmatpush.bf16.msra.mxu0 %v555
  %739 = vmatpush.bf16.msra.mxu0 %v554
  %740 = vmatpush.bf16.msra.mxu0 %v553
  %741 = vmatpush.bf16.msra.mxu0 %v552
  %742 = vmatpush.bf16.msra.mxu0 %v551
  %743 = vmatmul.bf16.gmra.mxu0 %v189
  %v744 = vpop.f32.mrf.mxu0
  %v745 = vadd.f32 %v732, %v744
  %v746 = vpop.f32.mrf.mxu0
  %747 = vdwg.mxu0
  %v748 = vmin.f32 %v745, 0.0
  %v749 = vmul.f32 %v748, 1.442695
  %v750 = vpow.pop %v749
  %v751 = vsub.f32 %v750, 1.0
  %vm752 = vcmp.gt.f32.partialorder %v745, 0.0
  %v753 = vsel %vm752, %v745, %v751
  %v754 = vpack.c.bf16 %v753, %v753
  %755 = vst [vmem:[%s3] sm:$0xf] %v754
  // Predicated region
  $region14: #{_lambda_.8} parent=0 // pred_check
    _
  $region15: #{_lambda_.8} parent=0 // pred_check_branch
    %757 = sbr.rel (0) target = $region17
  $region16: #{_lambda_.8} parent=0 // pred_region
    _
  $region17: #{_lambda_.8} parent=0 // pred_fallthru
    _
  // Predicated region
  $region18: #{_lambda_.8} parent=0 // pred_check
    _
  $region19: #{_lambda_.8} parent=0 // pred_check_branch
    %759 = sbr.rel (0) target = $region21
  $region20: #{_lambda_.8} parent=0 // pred_region
    _
  $region21: #{_lambda_.8} parent=0 // pred_fallthru
    _

// kernel: _lambda_.9
$region0: #{_lambda_.9}
  #allocation0 [shape = 'u32[]', space=smem, size = 0x4, offset = 0x4, fixed_abs, tag = 'smem constant byte address 0x4 - core index']
  #allocation1 [shape = 'u32[72,128]{1,0:T(1,128)}', space=vmem, size = 0x9000, scoped, tag = 'internal scratch']
  %s0 = inlined_call_operand.vmem [shape: bf16[2,512], index: 0, kind: input, shape index: {}]
  %s1 = inlined_call_operand.vmem [shape: bf16[512,512], index: 1, kind: input, shape index: {}]
  %s2 = inlined_call_operand.vmem [shape: f32[1,512], index: 2, kind: input, shape index: {}]
  %s3 = inlined_call_operand.hbm [shape: f32[2,512], index: 3, kind: output, shape index: {}]
  %s4 = sld [smem:[#allocation0]]
  $region22: #{_lambda_.9} parent=0
    _
  %s6 = ssub.s32 1, %s4
  %s7 = scalar_select 0, %s6, %s4
  $region1: #{_lambda_.9} parent=0
    #allocation2 [shape = 'u8[4096]{0}', space=vmem, size = 0x1000, scoped, tag = 'output window, operand 0, single buffered']
    #allocation3 [shape = 's32[1]{0}', space=sflag, size = 0x4, scoped, tag = 'scoped memory for _lambda_.9']
    %8 = vsyncpa [#allocation3], 0
    // Predicated region
    $region2: #{_lambda_.9} parent=1 // pred_check
      _
    $region3: #{_lambda_.9} parent=1 // pred_check_branch
      %10 = sbr.rel (0) target = $region5
    $region4: #{_lambda_.9} parent=1 // pred_region
      _
    $region5: #{_lambda_.9} parent=1 // pred_fallthru
      _
    // Predicated region
    $region6: #{_lambda_.9} parent=1 // pred_check
      _
    $region7: #{_lambda_.9} parent=1 // pred_check_branch
      %12 = sbr.rel (0) target = $region9
    $region8: #{_lambda_.9} parent=1 // pred_region
      _
    $region9: #{_lambda_.9} parent=1 // pred_fallthru
      _
    // Predicated region
    $region10: #{_lambda_.9} parent=1 // pred_check
      _
    $region11: #{_lambda_.9} parent=1 // pred_check_branch
      %14 = sbr.rel (0) target = $region13
    $region12: #{_lambda_.9} parent=1 // pred_region
      _
    $region13: #{_lambda_.9} parent=1 // pred_fallthru
      _
    %v15 = vld [vmem:[%s0] sm:$0xf]
    %v16 = vld [vmem:[%s1] sm:$0xff]
    %v17 = vld [vmem:[%s1 + $0x8] sm:$0xff]
    %v18 = vld [vmem:[%s1 + $0x10] sm:$0xff]
    %v19 = vld [vmem:[%s1 + $0x18] sm:$0xff]
    %v20 = vld [vmem:[%s1 + $0x20] sm:$0xff]
    %v21 = vld [vmem:[%s1 + $0x28] sm:$0xff]
    %v22 = vld [vmem:[%s1 + $0x30] sm:$0xff]
    %v23 = vld [vmem:[%s1 + $0x38] sm:$0xff]
    %v24 = vld [vmem:[%s1 + $0x40] sm:$0xff]
    %v25 = vld [vmem:[%s1 + $0x48] sm:$0xff]
    %v26 = vld [vmem:[%s1 + $0x50] sm:$0xff]
    %v27 = vld [vmem:[%s1 + $0x58] sm:$0xff]
    %v28 = vld [vmem:[%s1 + $0x60] sm:$0xff]
    %v29 = vld [vmem:[%s1 + $0x68] sm:$0xff]
    %v30 = vld [vmem:[%s1 + $0x70] sm:$0xff]
    %v31 = vld [vmem:[%s1 + $0x78] sm:$0xff]
    %v32 = vld [vmem:[%s1 + $0x80] sm:$0xff]
    %v33 = vld [vmem:[%s1 + $0x88] sm:$0xff]
    %v34 = vld [vmem:[%s1 + $0x90] sm:$0xff]
    %v35 = vld [vmem:[%s1 + $0x98] sm:$0xff]
    %v36 = vld [vmem:[%s1 + $0xa0] sm:$0xff]
    %v37 = vld [vmem:[%s1 + $0xa8] sm:$0xff]
    %v38 = vld [vmem:[%s1 + $0xb0] sm:$0xff]
    %v39 = vld [vmem:[%s1 + $0xb8] sm:$0xff]
    %v40 = vld [vmem:[%s1 + $0xc0] sm:$0xff]
    %v41 = vld [vmem:[%s1 + $0xc8] sm:$0xff]
    %v42 = vld [vmem:[%s1 + $0xd0] sm:$0xff]
    %v43 = vld [vmem:[%s1 + $0xd8] sm:$0xff]
    %v44 = vld [vmem:[%s1 + $0xe0] sm:$0xff]
    %v45 = vld [vmem:[%s1 + $0xe8] sm:$0xff]
    %v46 = vld [vmem:[%s1 + $0xf0] sm:$0xff]
    %v47 = vld [vmem:[%s1 + $0xf8] sm:$0xff]
    %v48 = vld [vmem:[%s1 + $0x100] sm:$0xff]
    %v49 = vld [vmem:[%s1 + $0x108] sm:$0xff]
    %v50 = vld [vmem:[%s1 + $0x110] sm:$0xff]
    %v51 = vld [vmem:[%s1 + $0x118] sm:$0xff]
    %v52 = vld [vmem:[%s1 + $0x120] sm:$0xff]
    %v53 = vld [vmem:[%s1 + $0x128] sm:$0xff]
    %v54 = vld [vmem:[%s1 + $0x130] sm:$0xff]
    %v55 = vld [vmem:[%s1 + $0x138] sm:$0xff]
    %v56 = vld [vmem:[%s1 + $0x140] sm:$0xff]
    %v57 = vld [vmem:[%s1 + $0x148] sm:$0xff]
    %v58 = vld [vmem:[%s1 + $0x150] sm:$0xff]
    %v59 = vld [vmem:[%s1 + $0x158] sm:$0xff]
    %v60 = vld [vmem:[%s1 + $0x160] sm:$0xff]
    %v61 = vld [vmem:[%s1 + $0x168] sm:$0xff]
    %v62 = vld [vmem:[%s1 + $0x170] sm:$0xff]
    %v63 = vld [vmem:[%s1 + $0x178] sm:$0xff]
    %v64 = vld [vmem:[%s1 + $0x180] sm:$0xff]
    %v65 = vld [vmem:[%s1 + $0x188] sm:$0xff]
    %v66 = vld [vmem:[%s1 + $0x190] sm:$0xff]
    %v67 = vld [vmem:[%s1 + $0x198] sm:$0xff]
    %v68 = vld [vmem:[%s1 + $0x1a0] sm:$0xff]
    %v69 = vld [vmem:[%s1 + $0x1a8] sm:$0xff]
    %v70 = vld [vmem:[%s1 + $0x1b0] sm:$0xff]
    %v71 = vld [vmem:[%s1 + $0x1b8] sm:$0xff]
    %v72 = vld [vmem:[%s1 + $0x1c0] sm:$0xff]
    %v73 = vld [vmem:[%s1 + $0x1c8] sm:$0xff]
    %v74 = vld [vmem:[%s1 + $0x1d0] sm:$0xff]
    %v75 = vld [vmem:[%s1 + $0x1d8] sm:$0xff]
    %v76 = vld [vmem:[%s1 + $0x1e0] sm:$0xff]
    %v77 = vld [vmem:[%s1 + $0x1e8] sm:$0xff]
    %v78 = vld [vmem:[%s1 + $0x1f0] sm:$0xff]
    %v79 = vld [vmem:[%s1 + $0x1f8] sm:$0xff]
    %v80 = vld [vmem:[%s1 + $0x200] sm:$0xff]
    %v81 = vld [vmem:[%s1 + $0x208] sm:$0xff]
    %v82 = vld [vmem:[%s1 + $0x210] sm:$0xff]
    %v83 = vld [vmem:[%s1 + $0x218] sm:$0xff]
    %v84 = vld [vmem:[%s1 + $0x220] sm:$0xff]
    %v85 = vld [vmem:[%s1 + $0x228] sm:$0xff]
    %v86 = vld [vmem:[%s1 + $0x230] sm:$0xff]
    %v87 = vld [vmem:[%s1 + $0x238] sm:$0xff]
    %v88 = vld [vmem:[%s1 + $0x240] sm:$0xff]
    %v89 = vld [vmem:[%s1 + $0x248] sm:$0xff]
    %v90 = vld [vmem:[%s1 + $0x250] sm:$0xff]
    %v91 = vld [vmem:[%s1 + $0x258] sm:$0xff]
    %v92 = vld [vmem:[%s1 + $0x260] sm:$0xff]
    %v93 = vld [vmem:[%s1 + $0x268] sm:$0xff]
    %v94 = vld [vmem:[%s1 + $0x270] sm:$0xff]
    %v95 = vld [vmem:[%s1 + $0x278] sm:$0xff]
    %v96 = vld [vmem:[%s1 + $0x280] sm:$0xff]
    %v97 = vld [vmem:[%s1 + $0x288] sm:$0xff]
    %v98 = vld [vmem:[%s1 + $0x290] sm:$0xff]
    %v99 = vld [vmem:[%s1 + $0x298] sm:$0xff]
    %v100 = vld [vmem:[%s1 + $0x2a0] sm:$0xff]
    %v101 = vld [vmem:[%s1 + $0x2a8] sm:$0xff]
    %v102 = vld [vmem:[%s1 + $0x2b0] sm:$0xff]
    %v103 = vld [vmem:[%s1 + $0x2b8] sm:$0xff]
    %v104 = vld [vmem:[%s1 + $0x2c0] sm:$0xff]
    %v105 = vld [vmem:[%s1 + $0x2c8] sm:$0xff]
    %v106 = vld [vmem:[%s1 + $0x2d0] sm:$0xff]
    %v107 = vld [vmem:[%s1 + $0x2d8] sm:$0xff]
    %v108 = vld [vmem:[%s1 + $0x2e0] sm:$0xff]
    %v109 = vld [vmem:[%s1 + $0x2e8] sm:$0xff]
    %v110 = vld [vmem:[%s1 + $0x2f0] sm:$0xff]
    %v111 = vld [vmem:[%s1 + $0x2f8] sm:$0xff]
    %v112 = vld [vmem:[%s1 + $0x300] sm:$0xff]
    %v113 = vld [vmem:[%s1 + $0x308] sm:$0xff]
    %v114 = vld [vmem:[%s1 + $0x310] sm:$0xff]
    %v115 = vld [vmem:[%s1 + $0x318] sm:$0xff]
    %v116 = vld [vmem:[%s1 + $0x320] sm:$0xff]
    %v117 = vld [vmem:[%s1 + $0x328] sm:$0xff]
    %v118 = vld [vmem:[%s1 + $0x330] sm:$0xff]
    %v119 = vld [vmem:[%s1 + $0x338] sm:$0xff]
    %v120 = vld [vmem:[%s1 + $0x340] sm:$0xff]
    %v121 = vld [vmem:[%s1 + $0x348] sm:$0xff]
    %v122 = vld [vmem:[%s1 + $0x350] sm:$0xff]
    %v123 = vld [vmem:[%s1 + $0x358] sm:$0xff]
    %v124 = vld [vmem:[%s1 + $0x360] sm:$0xff]
    %v125 = vld [vmem:[%s1 + $0x368] sm:$0xff]
    %v126 = vld [vmem:[%s1 + $0x370] sm:$0xff]
    %v127 = vld [vmem:[%s1 + $0x378] sm:$0xff]
    %v128 = vld [vmem:[%s1 + $0x380] sm:$0xff]
    %v129 = vld [vmem:[%s1 + $0x388] sm:$0xff]
    %v130 = vld [vmem:[%s1 + $0x390] sm:$0xff]
    %v131 = vld [vmem:[%s1 + $0x398] sm:$0xff]
    %v132 = vld [vmem:[%s1 + $0x3a0] sm:$0xff]
    %v133 = vld [vmem:[%s1 + $0x3a8] sm:$0xff]
    %v134 = vld [vmem:[%s1 + $0x3b0] sm:$0xff]
    %v135 = vld [vmem:[%s1 + $0x3b8] sm:$0xff]
    %v136 = vld [vmem:[%s1 + $0x3c0] sm:$0xff]
    %v137 = vld [vmem:[%s1 + $0x3c8] sm:$0xff]
    %v138 = vld [vmem:[%s1 + $0x3d0] sm:$0xff]
    %v139 = vld [vmem:[%s1 + $0x3d8] sm:$0xff]
    %v140 = vld [vmem:[%s1 + $0x3e0] sm:$0xff]
    %v141 = vld [vmem:[%s1 + $0x3e8] sm:$0xff]
    %v142 = vld [vmem:[%s1 + $0x3f0] sm:$0xff]
    %v143 = vld [vmem:[%s1 + $0x3f8] sm:$0xff]
    %v144 = vld [vmem:[%s2] sm:$0xf]
    %v146 = vperm.slane %v144, 0
    %v147 = vperm.slane %v144, 1
    %v148 = vperm.slane %v144, 2
    %v149 = vperm.slane %v144, 3
    %155 = vst [vmem:[#allocation1] ss:$9 sm:$0xff] %v15
    %v156 = vld [vmem:[#allocation1] sm:$0xff]
    %v157 = vld [vmem:[#allocation1 + $0x9] sm:$0xff]
    %v158 = vld [vmem:[#allocation1 + $0x12] sm:$0xff]
    %v159 = vld [vmem:[#allocation1 + $0x1b] sm:$0xff]
    %v292 = vunpack.c.l.b16 %v16
    %v293 = vunpack.c.h.b16 %v16
    %v294 = vunpack.c.l.b16 %v17
    %v295 = vunpack.c.h.b16 %v17
    %v296 = vunpack.c.l.b16 %v18
    %v297 = vunpack.c.h.b16 %v18
    %v298 = vunpack.c.l.b16 %v19
    %v299 = vunpack.c.h.b16 %v19
    %v300 = vunpack.c.l.b16 %v20
    %v301 = vunpack.c.h.b16 %v20
    %v302 = vunpack.c.l.b16 %v21
    %v303 = vunpack.c.h.b16 %v21
    %v304 = vunpack.c.l.b16 %v22
    %v305 = vunpack.c.h.b16 %v22
    %v306 = vunpack.c.l.b16 %v23
    %v307 = vunpack.c.h.b16 %v23
    %v308 = vunpack.c.l.b16 %v24
    %v309 = vunpack.c.h.b16 %v24
    %v310 = vunpack.c.l.b16 %v25
    %v311 = vunpack.c.h.b16 %v25
    %v312 = vunpack.c.l.b16 %v26
    %v313 = vunpack.c.h.b16 %v26
    %v314 = vunpack.c.l.b16 %v27
    %v315 = vunpack.c.h.b16 %v27
    %v316 = vunpack.c.l.b16 %v28
    %v317 = vunpack.c.h.b16 %v28
    %v318 = vunpack.c.l.b16 %v29
    %v319 = vunpack.c.h.b16 %v29
    %v320 = vunpack.c.l.b16 %v30
    %v321 = vunpack.c.h.b16 %v30
    %v322 = vunpack.c.l.b16 %v31
    %v323 = vunpack.c.h.b16 %v31
    %v324 = vunpack.c.l.b16 %v32
    %v325 = vunpack.c.h.b16 %v32
    %v326 = vunpack.c.l.b16 %v33
    %v327 = vunpack.c.h.b16 %v33
    %v328 = vunpack.c.l.b16 %v34
    %v329 = vunpack.c.h.b16 %v34
    %v330 = vunpack.c.l.b16 %v35
    %v331 = vunpack.c.h.b16 %v35
    %v332 = vunpack.c.l.b16 %v36
    %v333 = vunpack.c.h.b16 %v36
    %v334 = vunpack.c.l.b16 %v37
    %v335 = vunpack.c.h.b16 %v37
    %v336 = vunpack.c.l.b16 %v38
    %v337 = vunpack.c.h.b16 %v38
    %v338 = vunpack.c.l.b16 %v39
    %v339 = vunpack.c.h.b16 %v39
    %v340 = vunpack.c.l.b16 %v40
    %v341 = vunpack.c.h.b16 %v40
    %v342 = vunpack.c.l.b16 %v41
    %v343 = vunpack.c.h.b16 %v41
    %v344 = vunpack.c.l.b16 %v42
    %v345 = vunpack.c.h.b16 %v42
    %v346 = vunpack.c.l.b16 %v43
    %v347 = vunpack.c.h.b16 %v43
    %v348 = vunpack.c.l.b16 %v44
    %v349 = vunpack.c.h.b16 %v44
    %v350 = vunpack.c.l.b16 %v45
    %v351 = vunpack.c.h.b16 %v45
    %v352 = vunpack.c.l.b16 %v46
    %v353 = vunpack.c.h.b16 %v46
    %v354 = vunpack.c.l.b16 %v47
    %v355 = vunpack.c.h.b16 %v47
    %v356 = vunpack.c.l.b16 %v48
    %v357 = vunpack.c.h.b16 %v48
    %v358 = vunpack.c.l.b16 %v49
    %v359 = vunpack.c.h.b16 %v49
    %v360 = vunpack.c.l.b16 %v50
    %v361 = vunpack.c.h.b16 %v50
    %v362 = vunpack.c.l.b16 %v51
    %v363 = vunpack.c.h.b16 %v51
    %v364 = vunpack.c.l.b16 %v52
    %v365 = vunpack.c.h.b16 %v52
    %v366 = vunpack.c.l.b16 %v53
    %v367 = vunpack.c.h.b16 %v53
    %v368 = vunpack.c.l.b16 %v54
    %v369 = vunpack.c.h.b16 %v54
    %v370 = vunpack.c.l.b16 %v55
    %v371 = vunpack.c.h.b16 %v55
    %v372 = vunpack.c.l.b16 %v56
    %v373 = vunpack.c.h.b16 %v56
    %v374 = vunpack.c.l.b16 %v57
    %v375 = vunpack.c.h.b16 %v57
    %v376 = vunpack.c.l.b16 %v58
    %v377 = vunpack.c.h.b16 %v58
    %v378 = vunpack.c.l.b16 %v59
    %v379 = vunpack.c.h.b16 %v59
    %v380 = vunpack.c.l.b16 %v60
    %v381 = vunpack.c.h.b16 %v60
    %v382 = vunpack.c.l.b16 %v61
    %v383 = vunpack.c.h.b16 %v61
    %v384 = vunpack.c.l.b16 %v62
    %v385 = vunpack.c.h.b16 %v62
    %v386 = vunpack.c.l.b16 %v63
    %v387 = vunpack.c.h.b16 %v63
    %v388 = vunpack.c.l.b16 %v64
    %v389 = vunpack.c.h.b16 %v64
    %v390 = vunpack.c.l.b16 %v65
    %v391 = vunpack.c.h.b16 %v65
    %v392 = vunpack.c.l.b16 %v66
    %v393 = vunpack.c.h.b16 %v66
    %v394 = vunpack.c.l.b16 %v67
    %v395 = vunpack.c.h.b16 %v67
    %v396 = vunpack.c.l.b16 %v68
    %v397 = vunpack.c.h.b16 %v68
    %v398 = vunpack.c.l.b16 %v69
    %v399 = vunpack.c.h.b16 %v69
    %v400 = vunpack.c.l.b16 %v70
    %v401 = vunpack.c.h.b16 %v70
    %v402 = vunpack.c.l.b16 %v71
    %v403 = vunpack.c.h.b16 %v71
    %v404 = vunpack.c.l.b16 %v72
    %v405 = vunpack.c.h.b16 %v72
    %v406 = vunpack.c.l.b16 %v73
    %v407 = vunpack.c.h.b16 %v73
    %v408 = vunpack.c.l.b16 %v74
    %v409 = vunpack.c.h.b16 %v74
    %v410 = vunpack.c.l.b16 %v75
    %v411 = vunpack.c.h.b16 %v75
    %v412 = vunpack.c.l.b16 %v76
    %v413 = vunpack.c.h.b16 %v76
    %v414 = vunpack.c.l.b16 %v77
    %v415 = vunpack.c.h.b16 %v77
    %v416 = vunpack.c.l.b16 %v78
    %v417 = vunpack.c.h.b16 %v78
    %v418 = vunpack.c.l.b16 %v79
    %v419 = vunpack.c.h.b16 %v79
    %v420 = vunpack.c.l.b16 %v80
    %v421 = vunpack.c.h.b16 %v80
    %v422 = vunpack.c.l.b16 %v81
    %v423 = vunpack.c.h.b16 %v81
    %v424 = vunpack.c.l.b16 %v82
    %v425 = vunpack.c.h.b16 %v82
    %v426 = vunpack.c.l.b16 %v83
    %v427 = vunpack.c.h.b16 %v83
    %v428 = vunpack.c.l.b16 %v84
    %v429 = vunpack.c.h.b16 %v84
    %v430 = vunpack.c.l.b16 %v85
    %v431 = vunpack.c.h.b16 %v85
    %v432 = vunpack.c.l.b16 %v86
    %v433 = vunpack.c.h.b16 %v86
    %v434 = vunpack.c.l.b16 %v87
    %v435 = vunpack.c.h.b16 %v87
    %v436 = vunpack.c.l.b16 %v88
    %v437 = vunpack.c.h.b16 %v88
    %v438 = vunpack.c.l.b16 %v89
    %v439 = vunpack.c.h.b16 %v89
    %v440 = vunpack.c.l.b16 %v90
    %v441 = vunpack.c.h.b16 %v90
    %v442 = vunpack.c.l.b16 %v91
    %v443 = vunpack.c.h.b16 %v91
    %v444 = vunpack.c.l.b16 %v92
    %v445 = vunpack.c.h.b16 %v92
    %v446 = vunpack.c.l.b16 %v93
    %v447 = vunpack.c.h.b16 %v93
    %v448 = vunpack.c.l.b16 %v94
    %v449 = vunpack.c.h.b16 %v94
    %v450 = vunpack.c.l.b16 %v95
    %v451 = vunpack.c.h.b16 %v95
    %v452 = vunpack.c.l.b16 %v96
    %v453 = vunpack.c.h.b16 %v96
    %v454 = vunpack.c.l.b16 %v97
    %v455 = vunpack.c.h.b16 %v97
    %v456 = vunpack.c.l.b16 %v98
    %v457 = vunpack.c.h.b16 %v98
    %v458 = vunpack.c.l.b16 %v99
    %v459 = vunpack.c.h.b16 %v99
    %v460 = vunpack.c.l.b16 %v100
    %v461 = vunpack.c.h.b16 %v100
    %v462 = vunpack.c.l.b16 %v101
    %v463 = vunpack.c.h.b16 %v101
    %v464 = vunpack.c.l.b16 %v102
    %v465 = vunpack.c.h.b16 %v102
    %v466 = vunpack.c.l.b16 %v103
    %v467 = vunpack.c.h.b16 %v103
    %v468 = vunpack.c.l.b16 %v104
    %v469 = vunpack.c.h.b16 %v104
    %v470 = vunpack.c.l.b16 %v105
    %v471 = vunpack.c.h.b16 %v105
    %v472 = vunpack.c.l.b16 %v106
    %v473 = vunpack.c.h.b16 %v106
    %v474 = vunpack.c.l.b16 %v107
    %v475 = vunpack.c.h.b16 %v107
    %v476 = vunpack.c.l.b16 %v108
    %v477 = vunpack.c.h.b16 %v108
    %v478 = vunpack.c.l.b16 %v109
    %v479 = vunpack.c.h.b16 %v109
    %v480 = vunpack.c.l.b16 %v110
    %v481 = vunpack.c.h.b16 %v110
    %v482 = vunpack.c.l.b16 %v111
    %v483 = vunpack.c.h.b16 %v111
    %v484 = vunpack.c.l.b16 %v112
    %v485 = vunpack.c.h.b16 %v112
    %v486 = vunpack.c.l.b16 %v113
    %v487 = vunpack.c.h.b16 %v113
    %v488 = vunpack.c.l.b16 %v114
    %v489 = vunpack.c.h.b16 %v114
    %v490 = vunpack.c.l.b16 %v115
    %v491 = vunpack.c.h.b16 %v115
    %v492 = vunpack.c.l.b16 %v116
    %v493 = vunpack.c.h.b16 %v116
    %v494 = vunpack.c.l.b16 %v117
    %v495 = vunpack.c.h.b16 %v117
    %v496 = vunpack.c.l.b16 %v118
    %v497 = vunpack.c.h.b16 %v118
    %v498 = vunpack.c.l.b16 %v119
    %v499 = vunpack.c.h.b16 %v119
    %v500 = vunpack.c.l.b16 %v120
    %v501 = vunpack.c.h.b16 %v120
    %v502 = vunpack.c.l.b16 %v121
    %v503 = vunpack.c.h.b16 %v121
    %v504 = vunpack.c.l.b16 %v122
    %v505 = vunpack.c.h.b16 %v122
    %v506 = vunpack.c.l.b16 %v123
    %v507 = vunpack.c.h.b16 %v123
    %v508 = vunpack.c.l.b16 %v124
    %v509 = vunpack.c.h.b16 %v124
    %v510 = vunpack.c.l.b16 %v125
    %v511 = vunpack.c.h.b16 %v125
    %v512 = vunpack.c.l.b16 %v126
    %v513 = vunpack.c.h.b16 %v126
    %v514 = vunpack.c.l.b16 %v127
    %v515 = vunpack.c.h.b16 %v127
    %v516 = vunpack.c.l.b16 %v128
    %v517 = vunpack.c.h.b16 %v128
    %v518 = vunpack.c.l.b16 %v129
    %v519 = vunpack.c.h.b16 %v129
    %v520 = vunpack.c.l.b16 %v130
    %v521 = vunpack.c.h.b16 %v130
    %v522 = vunpack.c.l.b16 %v131
    %v523 = vunpack.c.h.b16 %v131
    %v524 = vunpack.c.l.b16 %v132
    %v525 = vunpack.c.h.b16 %v132
    %v526 = vunpack.c.l.b16 %v133
    %v527 = vunpack.c.h.b16 %v133
    %v528 = vunpack.c.l.b16 %v134
    %v529 = vunpack.c.h.b16 %v134
    %v530 = vunpack.c.l.b16 %v135
    %v531 = vunpack.c.h.b16 %v135
    %v532 = vunpack.c.l.b16 %v136
    %v533 = vunpack.c.h.b16 %v136
    %v534 = vunpack.c.l.b16 %v137
    %v535 = vunpack.c.h.b16 %v137
    %v536 = vunpack.c.l.b16 %v138
    %v537 = vunpack.c.h.b16 %v138
    %v538 = vunpack.c.l.b16 %v139
    %v539 = vunpack.c.h.b16 %v139
    %v540 = vunpack.c.l.b16 %v140
    %v541 = vunpack.c.h.b16 %v140
    %v542 = vunpack.c.l.b16 %v141
    %v543 = vunpack.c.h.b16 %v141
    %v544 = vunpack.c.l.b16 %v142
    %v545 = vunpack.c.h.b16 %v142
    %v546 = vunpack.c.l.b16 %v143
    %v547 = vunpack.c.h.b16 %v143
    %v548 = vpack.c.b16 %v296, %v292
    %v549 = vpack.c.b16 %v297, %v293
    %v550 = vpack.c.b16 %v298, %v294
    %v551 = vpack.c.b16 %v299, %v295
    %v552 = vpack.c.b16 %v304, %v300
    %v553 = vpack.c.b16 %v305, %v301
    %v554 = vpack.c.b16 %v306, %v302
    %v555 = vpack.c.b16 %v307, %v303
    %v556 = vpack.c.b16 %v312, %v308
    %v557 = vpack.c.b16 %v313, %v309
    %v558 = vpack.c.b16 %v314, %v310
    %v559 = vpack.c.b16 %v315, %v311
    %v560 = vpack.c.b16 %v320, %v316
    %v561 = vpack.c.b16 %v321, %v317
    %v562 = vpack.c.b16 %v322, %v318
    %v563 = vpack.c.b16 %v323, %v319
    %v564 = vpack.c.b16 %v328, %v324
    %v565 = vpack.c.b16 %v329, %v325
    %v566 = vpack.c.b16 %v330, %v326
    %v567 = vpack.c.b16 %v331, %v327
    %v568 = vpack.c.b16 %v336, %v332
    %v569 = vpack.c.b16 %v337, %v333
    %v570 = vpack.c.b16 %v338, %v334
    %v571 = vpack.c.b16 %v339, %v335
    %v572 = vpack.c.b16 %v344, %v340
    %v573 = vpack.c.b16 %v345, %v341
    %v574 = vpack.c.b16 %v346, %v342
    %v575 = vpack.c.b16 %v347, %v343
    %v576 = vpack.c.b16 %v352, %v348
    %v577 = vpack.c.b16 %v353, %v349
    %v578 = vpack.c.b16 %v354, %v350
    %v579 = vpack.c.b16 %v355, %v351
    %v580 = vpack.c.b16 %v360, %v356
    %v581 = vpack.c.b16 %v361, %v357
    %v582 = vpack.c.b16 %v362, %v358
    %v583 = vpack.c.b16 %v363, %v359
    %v584 = vpack.c.b16 %v368, %v364
    %v585 = vpack.c.b16 %v369, %v365
    %v586 = vpack.c.b16 %v370, %v366
    %v587 = vpack.c.b16 %v371, %v367
    %v588 = vpack.c.b16 %v376, %v372
    %v589 = vpack.c.b16 %v377, %v373
    %v590 = vpack.c.b16 %v378, %v374
    %v591 = vpack.c.b16 %v379, %v375
    %v592 = vpack.c.b16 %v384, %v380
    %v593 = vpack.c.b16 %v385, %v381
    %v594 = vpack.c.b16 %v386, %v382
    %v595 = vpack.c.b16 %v387, %v383
    %v596 = vpack.c.b16 %v392, %v388
    %v597 = vpack.c.b16 %v393, %v389
    %v598 = vpack.c.b16 %v394, %v390
    %v599 = vpack.c.b16 %v395, %v391
    %v600 = vpack.c.b16 %v400, %v396
    %v601 = vpack.c.b16 %v401, %v397
    %v602 = vpack.c.b16 %v402, %v398
    %v603 = vpack.c.b16 %v403, %v399
    %v604 = vpack.c.b16 %v408, %v404
    %v605 = vpack.c.b16 %v409, %v405
    %v606 = vpack.c.b16 %v410, %v406
    %v607 = vpack.c.b16 %v411, %v407
    %v608 = vpack.c.b16 %v416, %v412
    %v609 = vpack.c.b16 %v417, %v413
    %v610 = vpack.c.b16 %v418, %v414
    %v611 = vpack.c.b16 %v419, %v415
    %v612 = vpack.c.b16 %v424, %v420
    %v613 = vpack.c.b16 %v425, %v421
    %v614 = vpack.c.b16 %v426, %v422
    %v615 = vpack.c.b16 %v427, %v423
    %v616 = vpack.c.b16 %v432, %v428
    %v617 = vpack.c.b16 %v433, %v429
    %v618 = vpack.c.b16 %v434, %v430
    %v619 = vpack.c.b16 %v435, %v431
    %v620 = vpack.c.b16 %v440, %v436
    %v621 = vpack.c.b16 %v441, %v437
    %v622 = vpack.c.b16 %v442, %v438
    %v623 = vpack.c.b16 %v443, %v439
    %v624 = vpack.c.b16 %v448, %v444
    %v625 = vpack.c.b16 %v449, %v445
    %v626 = vpack.c.b16 %v450, %v446
    %v627 = vpack.c.b16 %v451, %v447
    %v628 = vpack.c.b16 %v456, %v452
    %v629 = vpack.c.b16 %v457, %v453
    %v630 = vpack.c.b16 %v458, %v454
    %v631 = vpack.c.b16 %v459, %v455
    %v632 = vpack.c.b16 %v464, %v460
    %v633 = vpack.c.b16 %v465, %v461
    %v634 = vpack.c.b16 %v466, %v462
    %v635 = vpack.c.b16 %v467, %v463
    %v636 = vpack.c.b16 %v472, %v468
    %v637 = vpack.c.b16 %v473, %v469
    %v638 = vpack.c.b16 %v474, %v470
    %v639 = vpack.c.b16 %v475, %v471
    %v640 = vpack.c.b16 %v480, %v476
    %v641 = vpack.c.b16 %v481, %v477
    %v642 = vpack.c.b16 %v482, %v478
    %v643 = vpack.c.b16 %v483, %v479
    %v644 = vpack.c.b16 %v488, %v484
    %v645 = vpack.c.b16 %v489, %v485
    %v646 = vpack.c.b16 %v490, %v486
    %v647 = vpack.c.b16 %v491, %v487
    %v648 = vpack.c.b16 %v496, %v492
    %v649 = vpack.c.b16 %v497, %v493
    %v650 = vpack.c.b16 %v498, %v494
    %v651 = vpack.c.b16 %v499, %v495
    %v652 = vpack.c.b16 %v504, %v500
    %v653 = vpack.c.b16 %v505, %v501
    %v654 = vpack.c.b16 %v506, %v502
    %v655 = vpack.c.b16 %v507, %v503
    %v656 = vpack.c.b16 %v512, %v508
    %v657 = vpack.c.b16 %v513, %v509
    %v658 = vpack.c.b16 %v514, %v510
    %v659 = vpack.c.b16 %v515, %v511
    %v660 = vpack.c.b16 %v520, %v516
    %v661 = vpack.c.b16 %v521, %v517
    %v662 = vpack.c.b16 %v522, %v518
    %v663 = vpack.c.b16 %v523, %v519
    %v664 = vpack.c.b16 %v528, %v524
    %v665 = vpack.c.b16 %v529, %v525
    %v666 = vpack.c.b16 %v530, %v526
    %v667 = vpack.c.b16 %v531, %v527
    %v668 = vpack.c.b16 %v536, %v532
    %v669 = vpack.c.b16 %v537, %v533
    %v670 = vpack.c.b16 %v538, %v534
    %v671 = vpack.c.b16 %v539, %v535
    %v672 = vpack.c.b16 %v544, %v540
    %v673 = vpack.c.b16 %v545, %v541
    %v674 = vpack.c.b16 %v546, %v542
    %v675 = vpack.c.b16 %v547, %v543
    %804 = vmatpush.bf16.msra.mxu0 %v576
    %805 = vmatpush.bf16.msra.mxu0 %v572
    %806 = vmatpush.bf16.msra.mxu0 %v568
    %807 = vmatpush.bf16.msra.mxu0 %v564
    %808 = vmatpush.bf16.msra.mxu0 %v560
    %809 = vmatpush.bf16.msra.mxu0 %v556
    %810 = vmatpush.bf16.msra.mxu0 %v552
    %811 = vmatpush.bf16.msra.mxu0 %v548
    %812 = vmatmul.bf16.gmra.mxu0 %v156
    %v813 = vpop.f32.mrf.mxu0
    %v814 = vadd.f32 %v146, %v813
    %v815 = vpop.f32.mrf.mxu0
    %816 = vdwg.mxu0
    %817 = vmatpush.bf16.msra.mxu0 %v608
    %818 = vmatpush.bf16.msra.mxu0 %v604
    %819 = vmatpush.bf16.msra.mxu0 %v600
    %820 = vmatpush.bf16.msra.mxu0 %v596
    %821 = vmatpush.bf16.msra.mxu0 %v592
    %822 = vmatpush.bf16.msra.mxu0 %v588
    %823 = vmatpush.bf16.msra.mxu0 %v584
    %824 = vmatpush.bf16.msra.mxu0 %v580
    %825 = vmatmul.bf16.gmra.mxu0 %v157
    %v826 = vpop.f32.mrf.mxu0
    %v827 = vadd.f32 %v814, %v826
    %v828 = vpop.f32.mrf.mxu0
    %829 = vdwg.mxu0
    %830 = vmatpush.bf16.msra.mxu0 %v640
    %831 = vmatpush.bf16.msra.mxu0 %v636
    %832 = vmatpush.bf16.msra.mxu0 %v632
    %833 = vmatpush.bf16.msra.mxu0 %v628
    %834 = vmatpush.bf16.msra.mxu0 %v624
    %835 = vmatpush.bf16.msra.mxu0 %v620
    %836 = vmatpush.bf16.msra.mxu0 %v616
    %837 = vmatpush.bf16.msra.mxu0 %v612
    %838 = vmatmul.bf16.gmra.mxu0 %v158
    %v839 = vpop.f32.mrf.mxu0
    %v840 = vadd.f32 %v827, %v839
    %v841 = vpop.f32.mrf.mxu0
    %842 = vdwg.mxu0
    %843 = vmatpush.bf16.msra.mxu0 %v672
    %844 = vmatpush.bf16.msra.mxu0 %v668
    %845 = vmatpush.bf16.msra.mxu0 %v664
    %846 = vmatpush.bf16.msra.mxu0 %v660
    %847 = vmatpush.bf16.msra.mxu0 %v656
    %848 = vmatpush.bf16.msra.mxu0 %v652
    %849 = vmatpush.bf16.msra.mxu0 %v648
    %850 = vmatpush.bf16.msra.mxu0 %v644
    %851 = vmatmul.bf16.gmra.mxu0 %v159
    %v852 = vpop.f32.mrf.mxu0
    %v853 = vadd.f32 %v840, %v852
    %v854 = vpop.f32.mrf.mxu0
    %855 = vdwg.mxu0
    %856 = vmatpush.bf16.msra.mxu0 %v577
    %857 = vmatpush.bf16.msra.mxu0 %v573
    %858 = vmatpush.bf16.msra.mxu0 %v569
    %859 = vmatpush.bf16.msra.mxu0 %v565
    %860 = vmatpush.bf16.msra.mxu0 %v561
    %861 = vmatpush.bf16.msra.mxu0 %v557
    %862 = vmatpush.bf16.msra.mxu0 %v553
    %863 = vmatpush.bf16.msra.mxu0 %v549
    %864 = vmatmul.bf16.gmra.mxu0 %v156
    %v865 = vpop.f32.mrf.mxu0
    %v866 = vadd.f32 %v147, %v865
    %v867 = vpop.f32.mrf.mxu0
    %868 = vdwg.mxu0
    %869 = vmatpush.bf16.msra.mxu0 %v609
    %870 = vmatpush.bf16.msra.mxu0 %v605
    %871 = vmatpush.bf16.msra.mxu0 %v601
    %872 = vmatpush.bf16.msra.mxu0 %v597
    %873 = vmatpush.bf16.msra.mxu0 %v593
    %874 = vmatpush.bf16.msra.mxu0 %v589
    %875 = vmatpush.bf16.msra.mxu0 %v585
    %876 = vmatpush.bf16.msra.mxu0 %v581
    %877 = vmatmul.bf16.gmra.mxu0 %v157
    %v878 = vpop.f32.mrf.mxu0
    %v879 = vadd.f32 %v866, %v878
    %v880 = vpop.f32.mrf.mxu0
    %881 = vdwg.mxu0
    %882 = vmatpush.bf16.msra.mxu0 %v641
    %883 = vmatpush.bf16.msra.mxu0 %v637
    %884 = vmatpush.bf16.msra.mxu0 %v633
    %885 = vmatpush.bf16.msra.mxu0 %v629
    %886 = vmatpush.bf16.msra.mxu0 %v625
    %887 = vmatpush.bf16.msra.mxu0 %v621
    %888 = vmatpush.bf16.msra.mxu0 %v617
    %889 = vmatpush.bf16.msra.mxu0 %v613
    %890 = vmatmul.bf16.gmra.mxu0 %v158
    %v891 = vpop.f32.mrf.mxu0
    %v892 = vadd.f32 %v879, %v891
    %v893 = vpop.f32.mrf.mxu0
    %894 = vdwg.mxu0
    %895 = vmatpush.bf16.msra.mxu0 %v673
    %896 = vmatpush.bf16.msra.mxu0 %v669
    %897 = vmatpush.bf16.msra.mxu0 %v665
    %898 = vmatpush.bf16.msra.mxu0 %v661
    %899 = vmatpush.bf16.msra.mxu0 %v657
    %900 = vmatpush.bf16.msra.mxu0 %v653
    %901 = vmatpush.bf16.msra.mxu0 %v649
    %902 = vmatpush.bf16.msra.mxu0 %v645
    %903 = vmatmul.bf16.gmra.mxu0 %v159
    %v904 = vpop.f32.mrf.mxu0
    %v905 = vadd.f32 %v892, %v904
    %v906 = vpop.f32.mrf.mxu0
    %907 = vdwg.mxu0
    %908 = vmatpush.bf16.msra.mxu0 %v578
    %909 = vmatpush.bf16.msra.mxu0 %v574
    %910 = vmatpush.bf16.msra.mxu0 %v570
    %911 = vmatpush.bf16.msra.mxu0 %v566
    %912 = vmatpush.bf16.msra.mxu0 %v562
    %913 = vmatpush.bf16.msra.mxu0 %v558
    %914 = vmatpush.bf16.msra.mxu0 %v554
    %915 = vmatpush.bf16.msra.mxu0 %v550
    %916 = vmatmul.bf16.gmra.mxu0 %v156
    %v917 = vpop.f32.mrf.mxu0
    %v918 = vadd.f32 %v148, %v917
    %v919 = vpop.f32.mrf.mxu0
    %920 = vdwg.mxu0
    %921 = vmatpush.bf16.msra.mxu0 %v610
    %922 = vmatpush.bf16.msra.mxu0 %v606
    %923 = vmatpush.bf16.msra.mxu0 %v602
    %924 = vmatpush.bf16.msra.mxu0 %v598
    %925 = vmatpush.bf16.msra.mxu0 %v594
    %926 = vmatpush.bf16.msra.mxu0 %v590
    %927 = vmatpush.bf16.msra.mxu0 %v586
    %928 = vmatpush.bf16.msra.mxu0 %v582
    %929 = vmatmul.bf16.gmra.mxu0 %v157
    %v930 = vpop.f32.mrf.mxu0
    %v931 = vadd.f32 %v918, %v930
    %v932 = vpop.f32.mrf.mxu0
    %933 = vdwg.mxu0
    %934 = vmatpush.bf16.msra.mxu0 %v642
    %935 = vmatpush.bf16.msra.mxu0 %v638
    %936 = vmatpush.bf16.msra.mxu0 %v634
    %937 = vmatpush.bf16.msra.mxu0 %v630
    %938 = vmatpush.bf16.msra.mxu0 %v626
    %939 = vmatpush.bf16.msra.mxu0 %v622
    %940 = vmatpush.bf16.msra.mxu0 %v618
    %941 = vmatpush.bf16.msra.mxu0 %v614
    %942 = vmatmul.bf16.gmra.mxu0 %v158
    %v943 = vpop.f32.mrf.mxu0
    %v944 = vadd.f32 %v931, %v943
    %v945 = vpop.f32.mrf.mxu0
    %946 = vdwg.mxu0
    %947 = vmatpush.bf16.msra.mxu0 %v674
    %948 = vmatpush.bf16.msra.mxu0 %v670
    %949 = vmatpush.bf16.msra.mxu0 %v666
    %950 = vmatpush.bf16.msra.mxu0 %v662
    %951 = vmatpush.bf16.msra.mxu0 %v658
    %952 = vmatpush.bf16.msra.mxu0 %v654
    %953 = vmatpush.bf16.msra.mxu0 %v650
    %954 = vmatpush.bf16.msra.mxu0 %v646
    %955 = vmatmul.bf16.gmra.mxu0 %v159
    %v956 = vpop.f32.mrf.mxu0
    %v957 = vadd.f32 %v944, %v956
    %v958 = vpop.f32.mrf.mxu0
    %959 = vdwg.mxu0
    %960 = vmatpush.bf16.msra.mxu0 %v579
    %961 = vmatpush.bf16.msra.mxu0 %v575
    %962 = vmatpush.bf16.msra.mxu0 %v571
    %963 = vmatpush.bf16.msra.mxu0 %v567
    %964 = vmatpush.bf16.msra.mxu0 %v563
    %965 = vmatpush.bf16.msra.mxu0 %v559
    %966 = vmatpush.bf16.msra.mxu0 %v555
    %967 = vmatpush.bf16.msra.mxu0 %v551
    %968 = vmatmul.bf16.gmra.mxu0 %v156
    %v969 = vpop.f32.mrf.mxu0
    %v970 = vadd.f32 %v149, %v969
    %v971 = vpop.f32.mrf.mxu0
    %972 = vdwg.mxu0
    %973 = vmatpush.bf16.msra.mxu0 %v611
    %974 = vmatpush.bf16.msra.mxu0 %v607
    %975 = vmatpush.bf16.msra.mxu0 %v603
    %976 = vmatpush.bf16.msra.mxu0 %v599
    %977 = vmatpush.bf16.msra.mxu0 %v595
    %978 = vmatpush.bf16.msra.mxu0 %v591
    %979 = vmatpush.bf16.msra.mxu0 %v587
    %980 = vmatpush.bf16.msra.mxu0 %v583
    %981 = vmatmul.bf16.gmra.mxu0 %v157
    %v982 = vpop.f32.mrf.mxu0
    %v983 = vadd.f32 %v970, %v982
    %v984 = vpop.f32.mrf.mxu0
    %985 = vdwg.mxu0
    %986 = vmatpush.bf16.msra.mxu0 %v643
    %987 = vmatpush.bf16.msra.mxu0 %v639
    %988 = vmatpush.bf16.msra.mxu0 %v635
    %989 = vmatpush.bf16.msra.mxu0 %v631
    %990 = vmatpush.bf16.msra.mxu0 %v627
    %991 = vmatpush.bf16.msra.mxu0 %v623
    %992 = vmatpush.bf16.msra.mxu0 %v619
    %993 = vmatpush.bf16.msra.mxu0 %v615
    %994 = vmatmul.bf16.gmra.mxu0 %v158
    %v995 = vpop.f32.mrf.mxu0
    %v996 = vadd.f32 %v983, %v995
    %v997 = vpop.f32.mrf.mxu0
    %998 = vdwg.mxu0
    %999 = vmatpush.bf16.msra.mxu0 %v675
    %1000 = vmatpush.bf16.msra.mxu0 %v671
    %1001 = vmatpush.bf16.msra.mxu0 %v667
    %1002 = vmatpush.bf16.msra.mxu0 %v663
    %1003 = vmatpush.bf16.msra.mxu0 %v659
    %1004 = vmatpush.bf16.msra.mxu0 %v655
    %1005 = vmatpush.bf16.msra.mxu0 %v651
    %1006 = vmatpush.bf16.msra.mxu0 %v647
    %1007 = vmatmul.bf16.gmra.mxu0 %v159
    %v1008 = vpop.f32.mrf.mxu0
    %v1009 = vadd.f32 %v996, %v1008
    %v1010 = vpop.f32.mrf.mxu0
    %1011 = vdwg.mxu0
    %v1012 = vmin.f32 %v853, 0.0
    %v1013 = vmin.f32 %v905, 0.0
    %v1014 = vmin.f32 %v957, 0.0
    %v1015 = vmin.f32 %v1009, 0.0
    %v1016 = vmul.f32 %v1012, 1.442695
    %v1017 = vpow.pop %v1016
    %v1018 = vmul.f32 %v1013, 1.442695
    %v1019 = vpow.pop %v1018
    %v1020 = vmul.f32 %v1014, 1.442695
    %v1021 = vpow.pop %v1020
    %v1022 = vmul.f32 %v1015, 1.442695
    %v1023 = vpow.pop %v1022
    %v1024 = vsub.f32 %v1017, 1.0
    %v1025 = vsub.f32 %v1019, 1.0
    %v1026 = vsub.f32 %v1021, 1.0
    %v1027 = vsub.f32 %v1023, 1.0
    %vm1028 = vcmp.gt.f32.partialorder %v853, 0.0
    %vm1029 = vcmp.gt.f32.partialorder %v905, 0.0
    %vm1030 = vcmp.gt.f32.partialorder %v957, 0.0
    %vm1031 = vcmp.gt.f32.partialorder %v1009, 0.0
    %v1032 = vsel %vm1028, %v853, %v1024
    %v1033 = vsel %vm1029, %v905, %v1025
    %v1034 = vsel %vm1030, %v957, %v1026
    %v1035 = vsel %vm1031, %v1009, %v1027
    %v1040 = vrot.slane %v1033, 6
    %v1041 = vrot.slane %v1034, 4
    %v1042 = vrot.slane %v1035, 2
    %vm1043 = vcmask 1041408
    %v1044 = vsel %vm1043, %v1032, %v1040
    %vm1045 = vcmask 1045508
    %v1046 = vsel %vm1045, %v1041, %v1042
    %vm1047 = vcmask 1043456
    %v1048 = vsel %vm1047, %v1044, %v1046
    %1050 = vst [vmem:[#allocation2] sm:$0xff] %v1048
    // Predicated region
    $region14: #{_lambda_.9} parent=1 // pred_check
      _
    $region15: #{_lambda_.9} parent=1 // pred_check_branch
      %1052 = sbr.rel (0) target = $region17
    $region16: #{_lambda_.9} parent=1 // pred_region
      %1054 = vsyncadd [#allocation3], 0
      %s1056 = sshll.u32 [#allocation2], 4
      %s1057 = int_to_ptr.vmem [resolvable:$true] %s1056
      %s1058 = sshll.u32 %s3, 4
      %s1059 = int_to_ptr.hbm [resolvable:$true] %s1058
      %1061 = dma.vmem_to_hbm [thread:$0]  %s1057, 128, %s1059, [#allocation3]
    $region17: #{_lambda_.9} parent=1 // pred_fallthru
      _
    // Predicated region
    $region18: #{_lambda_.9} parent=1 // pred_check
      _
    $region19: #{_lambda_.9} parent=1 // pred_check_branch
      %1063 = sbr.rel (0) target = $region21
    $region20: #{_lambda_.9} parent=1 // pred_region
      %1065 = dma.done [#allocation3], 128
    $region21: #{_lambda_.9} parent=1 // pred_fallthru
      _
    %1066 = vsyncpa [#allocation3], 1

</llo_original>
